<compile_context>
chip_gen: v6e
topology: v6e:2x2x1
jax: 0.10.0
libtpu: 0.0.40
codegen_flags: <defaults>
</compile_context>

<pallas_src>
import jax
import jax.numpy as jnp
import numpy as np
from jax.experimental import pallas as pl
from jax.experimental.pallas import tpu as pltpu

# ----- module constants (from the PyTorch source) -----
INPUT_DIM = 13
HIDDEN_DIM = 256
OUTPUT_DIM = 1
NUM_LAYERS = 1
D = 2                      # bidirectional
# dropout_prob = 0         -> no-op
# .detach() on zero states -> no-op for forward

# ----- TPU-friendly padded dims -----
I_PAD = 16                 # pad input feature dim (13) to a sublane multiple


def _choose_b_tile(B, T, H):
    """Batch rows per grid program.

    Big tiles amortize the W_hh MXU push of every serial step across more batch rows;
    the cap keeps the (T, B_tile, 4H) f32 gate scratch (plus double-buffered inputs /
    weights) inside the default scoped-VMEM window on all of v5e/v6e/v7x.
    """
    b8 = max(8, ((B + 7) // 8) * 8)            # batch rounded up to a sublane multiple
    budget = 6 * 1024 * 1024                   # bytes for the hoisted gate buffer
    bt = 128
    while bt > 8 and T * bt * 4 * H * 4 > budget:
        bt //= 2
    return min(bt, b8)


def _gate_apply(gates, c, H):
    """Apply PyTorch-order (i, f, g, o) LSTM gates to precomputed pre-activations."""
    i = jax.nn.sigmoid(gates[:, 0 * H:1 * H])
    f = jax.nn.sigmoid(gates[:, 1 * H:2 * H])
    g = jnp.tanh(gates[:, 2 * H:3 * H])
    o = jax.nn.sigmoid(gates[:, 3 * H:4 * H])
    c_new = f * c + i * g
    h_new = o * jnp.tanh(c_new)
    return h_new, c_new


def lstm_kernel(x_ref, wih_f_ref, whh_f_ref, b_f_ref,
                wih_b_ref, b_b_ref,
                wfc_f_ref, wfc_b_ref, bfc_ref, out_ref, gx_ref):
    # x_ref:   (T, Bt, I_PAD)  time-major, zero-padded, f32
    # wih_*:   (I_PAD, 4H) f32     whh_f: (H, 4H) bf16     b_*: (1, 4H) f32
    # wfc_*:   (H, 1) f32          bfc:   (1, 1) f32
    # out_ref: (Bt, 1) f32         gx_ref: (T, Bt, 4H) f32 VMEM scratch
    T, Bt, I = x_ref.shape
    H = whh_f_ref.shape[0]

    # ---- hoisted input projection: ONE MXU matmul for all timesteps, bias folded.
    #      Result is parked in VMEM scratch so the serial loop only re-reads one
    #      (Bt, 4H) slice per step (keeps vreg pressure bounded for large tiles). ----
    x_flat = x_ref[...].reshape(T * Bt, I)                      # leading-dim reshape
    gx = jnp.dot(x_flat, wih_f_ref[...],
                 preferred_element_type=jnp.float32) + b_f_ref[...]
    gx_ref[...] = gx.reshape(T, Bt, 4 * H)

    whh = whh_f_ref[...]                                        # bf16, loop-invariant

    # t = 0: h_{-1} = 0, so the recurrent matmul is identically zero -> skip it.
    h, c = _gate_apply(gx_ref[0], jnp.zeros((Bt, H), jnp.float32), H)

    # Serial recurrence: only h @ W_hh (bf16 x bf16, f32 acc) remains on the loop path.
    def step(t, carry):
        h_t, c_t = carry
        gates = gx_ref[t] + jnp.dot(h_t.astype(jnp.bfloat16), whh,
                                    preferred_element_type=jnp.float32)
        return _gate_apply(gates, c_t, H)

    # Fully unroll short sequences (scheduler visibility); keep the trace bounded
    # for long ones.
    h_fwd, _ = jax.lax.fori_loop(1, T, step, (h, c), unroll=(T <= 32))

    # ---- reverse direction: output[:, -1, H:] is the reverse cell's FIRST step
    #      from the zero state, so its recurrent term is zero (W_hh_reverse unused). ----
    gx_b = (jnp.dot(x_ref[T - 1], wih_b_ref[...], preferred_element_type=jnp.float32)
            + b_b_ref[...])
    h_bwd, _ = _gate_apply(gx_b, jnp.zeros((Bt, H), jnp.float32), H)

    # ---- fc head: two small dots instead of a lane concat + one dot ----
    out_ref[...] = (jnp.dot(h_fwd, wfc_f_ref[...], preferred_element_type=jnp.float32)
                    + jnp.dot(h_bwd, wfc_b_ref[...], preferred_element_type=jnp.float32)
                    + bfc_ref[...])


def init_params(key):
    """Deterministic synthetic parameters with PyTorch-default-style uniform init."""
    H = HIDDEN_DIM
    keys = jax.random.split(key, 10)
    bound = 1.0 / float(np.sqrt(H))

    def u(k_, shape, b):
        return jax.random.uniform(k_, shape, jnp.float32, -b, b)

    p = {
        # PyTorch layout (4H, in_features) / (4H,)
        "w_ih_f": u(keys[0], (4 * H, INPUT_DIM), bound),
        "w_hh_f": u(keys[1], (4 * H, H), bound),
        "b_ih_f": u(keys[2], (4 * H,), bound),
        "b_hh_f": u(keys[3], (4 * H,), bound),
        "w_ih_b": u(keys[4], (4 * H, INPUT_DIM), bound),
        "w_hh_b": u(keys[5], (4 * H, H), bound),
        "b_ih_b": u(keys[6], (4 * H,), bound),
        "b_hh_b": u(keys[7], (4 * H,), bound),
    }
    fc_bound = 1.0 / float(np.sqrt(D * H))
    p["w_fc"] = u(keys[8], (OUTPUT_DIM, D * H), fc_bound)
    p["b_fc"] = u(keys[9], (OUTPUT_DIM,), fc_bound)
    return p


def _pack_params(p):
    """Transpose / pad / cast parameters into the kernel layout."""
    H = HIDDEN_DIM
    wih_f = jnp.zeros((I_PAD, 4 * H), jnp.float32).at[:INPUT_DIM].set(p["w_ih_f"].T)
    wih_b = jnp.zeros((I_PAD, 4 * H), jnp.float32).at[:INPUT_DIM].set(p["w_ih_b"].T)
    # Recurrent weight in bf16 (f32 accumulation inside the kernel).
    whh_f = p["w_hh_f"].T.astype(jnp.bfloat16)                   # (H, 4H)
    # W_hh_reverse does not contribute to output[:, -1, :] (zero initial state,
    # single reverse step) so it is not sent to the kernel at all.
    b_f = (p["b_ih_f"] + p["b_hh_f"]).reshape(1, 4 * H)
    b_b = (p["b_ih_b"] + p["b_hh_b"]).reshape(1, 4 * H)
    wfc = p["w_fc"].T                                            # (2H, 1)
    wfc_f = wfc[:H]
    wfc_b = wfc[H:]
    bfc = p["b_fc"].reshape(1, OUTPUT_DIM)
    return wih_f, whh_f, b_f, wih_b, b_b, wfc_f, wfc_b, bfc


def lstm_model_forward(x, params):
    """x: (B, T, INPUT_DIM) float32, batch-first (same as the PyTorch module)."""
    B, T, I = x.shape
    assert I == INPUT_DIM
    H = HIDDEN_DIM

    B_tile = _choose_b_tile(B, T, H)
    B_pad = ((B + B_tile - 1) // B_tile) * B_tile
    n_btiles = B_pad // B_tile

    # Time-major, zero-padded input. The padded copy is tiny (only the batch/feature
    # remainder); zero feature-padding is required so garbage lanes cannot pollute the
    # K dimension of the x @ W_ih matmul. Padded batch rows produce dummy outputs that
    # are sliced off below — never read out[B:].
    x_tm = jnp.transpose(x, (1, 0, 2)).astype(jnp.float32)              # (T, B, I)
    x_pad = jnp.zeros((T, B_pad, I_PAD), jnp.float32).at[:, :B, :I].set(x_tm)

    packed = _pack_params(params)
    # All packed params are 2-D; load each fully into VMEM once (constant index map).
    w_specs = [pl.BlockSpec(w.shape, lambda b: (0, 0)) for w in packed]

    out = pl.pallas_call(
        lstm_kernel,
        out_shape=jax.ShapeDtypeStruct((B_pad, OUTPUT_DIM), jnp.float32),
        grid_spec=pltpu.PrefetchScalarGridSpec(
            num_scalar_prefetch=0,
            grid=(n_btiles,),
            in_specs=[pl.BlockSpec((T, B_tile, I_PAD), lambda b: (0, b, 0))] + w_specs,
            out_specs=pl.BlockSpec((B_tile, OUTPUT_DIM), lambda b: (b, 0)),
            scratch_shapes=[pltpu.VMEM((T, B_tile, 4 * H), jnp.float32)],
        ),
        compiler_params=pltpu.CompilerParams(
            dimension_semantics=("parallel",)),      # batch tiles shard across TCs (v7x)
    )(x_pad, *packed)
    return out[:B]                                                       # (B, 1)


def lstm_model_reference(x, p):
    """Pure-JAX f32 reference with full PyTorch bidirectional-LSTM semantics."""
    H = HIDDEN_DIM
    B, T, _ = x.shape

    def cell(x_t, h, c, w_ih, w_hh, b_ih, b_hh):
        gates = x_t @ w_ih.T + h @ w_hh.T + b_ih + b_hh
        i = jax.nn.sigmoid(gates[:, 0 * H:1 * H])
        f = jax.nn.sigmoid(gates[:, 1 * H:2 * H])
        g = jnp.tanh(gates[:, 2 * H:3 * H])
        o = jax.nn.sigmoid(gates[:, 3 * H:4 * H])
        c_new = f * c + i * g
        return o * jnp.tanh(c_new), c_new

    # forward direction: full scan, keep last hidden
    h = jnp.zeros((B, H), jnp.float32)
    c = jnp.zeros((B, H), jnp.float32)
    for t in range(T):
        h, c = cell(x[:, t, :], h, c, p["w_ih_f"], p["w_hh_f"],
                    p["b_ih_f"], p["b_hh_f"])
    h_fwd_last = h

    # reverse direction: full scan from t=T-1 down to 0, record per-timestep outputs
    h = jnp.zeros((B, H), jnp.float32)
    c = jnp.zeros((B, H), jnp.float32)
    outs_rev = {}
    for t in range(T - 1, -1, -1):
        h, c = cell(x[:, t, :], h, c, p["w_ih_b"], p["w_hh_b"],
                    p["b_ih_b"], p["b_hh_b"])
        outs_rev[t] = h
    h_bwd_last = outs_rev[T - 1]          # output[:, -1, H:] in PyTorch

    h_cat = jnp.concatenate([h_fwd_last, h_bwd_last], axis=-1)
    return h_cat @ p["w_fc"].T + p["b_fc"]


if __name__ == "__main__":
    key = jax.random.PRNGKey(0)
    k_param, k_x1, k_x2 = jax.random.split(key, 3)

    params = init_params(k_param)

    # Primary small-shape check (batch=2, seq=8).
    x1 = jax.random.normal(k_x1, (2, 8, INPUT_DIM), jnp.float32)
    y1 = jax.block_until_ready(lstm_model_forward(x1, params))
    assert y1.shape == (2, OUTPUT_DIM)
    y1_ref = jax.block_until_ready(lstm_model_reference(x1, params))
    # bf16 recurrent weights with f32 accumulation keep the error well inside 2e-3.
    np.testing.assert_allclose(np.asarray(y1), np.asarray(y1_ref), rtol=2e-3, atol=2e-3)

    # Secondary check: batch not a sublane multiple + different seq length.
    x2 = jax.random.normal(k_x2, (10, 5, INPUT_DIM), jnp.float32)
    y2 = jax.block_until_ready(lstm_model_forward(x2, params))
    y2_ref = jax.block_until_ready(lstm_model_reference(x2, params))
    np.testing.assert_allclose(np.asarray(y2), np.asarray(y2_ref), rtol=2e-3, atol=2e-3)

    print("KERNEL_OK")
</pallas_src>

<mosaic_0001>
module attributes {stable_mosaic.version = 11 : i64} {
  func.func @lstm_kernel(%arg0: i32, %arg1: memref<8x8x16xf32, #tpu.memory_space<vmem>>, %arg2: memref<16x1024xf32, #tpu.memory_space<vmem>>, %arg3: memref<256x1024xbf16, #tpu.memory_space<vmem>>, %arg4: memref<1x1024xf32, #tpu.memory_space<vmem>>, %arg5: memref<16x1024xf32, #tpu.memory_space<vmem>>, %arg6: memref<1x1024xf32, #tpu.memory_space<vmem>>, %arg7: memref<256x1xf32, #tpu.memory_space<vmem>>, %arg8: memref<256x1xf32, #tpu.memory_space<vmem>>, %arg9: memref<1x1xf32, #tpu.memory_space<vmem>>, %arg10: memref<8x1xf32, #tpu.memory_space<vmem>>, %arg11: memref<8x8x1024xf32, #tpu.memory_space<vmem>>) attributes {dimension_semantics = [#tpu.dimension_semantics<parallel>], iteration_bounds = array<i64: 1>, scalar_prefetch = 0 : i64, scratch_operands = 1 : i64, tpu.core_type = #tpu.core_type<tc>, window_params = [{transform_indices = @transform_0, window_bounds = array<i64: 8, 8, 16>}, {pipeline_mode = #tpu.pipeline_mode<synchronous>, transform_indices = @transform_1, window_bounds = array<i64: 16, 1024>}, {pipeline_mode = #tpu.pipeline_mode<synchronous>, transform_indices = @transform_2, window_bounds = array<i64: 256, 1024>}, {pipeline_mode = #tpu.pipeline_mode<synchronous>, transform_indices = @transform_3, window_bounds = array<i64: 1, 1024>}, {pipeline_mode = #tpu.pipeline_mode<synchronous>, transform_indices = @transform_4, window_bounds = array<i64: 16, 1024>}, {pipeline_mode = #tpu.pipeline_mode<synchronous>, transform_indices = @transform_5, window_bounds = array<i64: 1, 1024>}, {pipeline_mode = #tpu.pipeline_mode<synchronous>, transform_indices = @transform_6, window_bounds = array<i64: 256, 1>}, {pipeline_mode = #tpu.pipeline_mode<synchronous>, transform_indices = @transform_7, window_bounds = array<i64: 256, 1>}, {pipeline_mode = #tpu.pipeline_mode<synchronous>, transform_indices = @transform_8, window_bounds = array<i64: 1, 1>}, {transform_indices = @transform_9, window_bounds = array<i64: 8, 1>}]} {
    %c0 = arith.constant 0 : index
    %c0_0 = arith.constant 0 : index
    %c0_1 = arith.constant 0 : index
    %0 = vector.load %arg1[%c0, %c0_0, %c0_1] : memref<8x8x16xf32, #tpu.memory_space<vmem>>, vector<8x8x16xf32>
    %1 = vector.shape_cast %0 : vector<8x8x16xf32> to vector<64x16xf32>
    %c0_2 = arith.constant 0 : index
    %c0_3 = arith.constant 0 : index
    %2 = vector.load %arg2[%c0_2, %c0_3] : memref<16x1024xf32, #tpu.memory_space<vmem>>, vector<16x1024xf32>
    %cst = arith.constant dense<0.000000e+00> : vector<64x1024xf32>
    %3 = tpu.matmul %1, %2, %cst {dimension_numbers = #tpu.dot_dimension_numbers<[1], [0], [0], [1], [0, 0, 1, 1], [], []>} : vector<64x16xf32>, vector<16x1024xf32>, vector<64x1024xf32> -> vector<64x1024xf32>
    %c0_4 = arith.constant 0 : index
    %c0_5 = arith.constant 0 : index
    %4 = vector.load %arg4[%c0_4, %c0_5] : memref<1x1024xf32, #tpu.memory_space<vmem>>, vector<1x1024xf32>
    %5 = vector.broadcast %4 : vector<1x1024xf32> to vector<64x1024xf32>
    %6 = arith.addf %3, %5 : vector<64x1024xf32>
    %7 = vector.shape_cast %6 : vector<64x1024xf32> to vector<8x8x1024xf32>
    %c0_6 = arith.constant 0 : index
    %c0_7 = arith.constant 0 : index
    %c0_8 = arith.constant 0 : index
    %8 = vector.load %arg11[%c0_6, %c0_7, %c0_8] : memref<8x8x1024xf32, #tpu.memory_space<vmem>>, vector<8x8x1024xf32>
    tpu.vector_store %arg11[%c0_6, %c0_7, %c0_8], %7 {strides = array<i32>} : memref<8x8x1024xf32, #tpu.memory_space<vmem>>, vector<8x8x1024xf32>,
    %c0_9 = arith.constant 0 : index
    %c0_10 = arith.constant 0 : index
    %9 = vector.load %arg3[%c0_9, %c0_10] : memref<256x1024xbf16, #tpu.memory_space<vmem>>, vector<256x1024xbf16>
    %c0_11 = arith.constant 0 : index
    %c0_12 = arith.constant 0 : index
    %c0_13 = arith.constant 0 : index
    %10 = vector.load %arg11[%c0_11, %c0_12, %c0_13] : memref<8x8x1024xf32, #tpu.memory_space<vmem>>, vector<1x8x1024xf32>
    %11 = vector.shape_cast %10 : vector<1x8x1024xf32> to vector<8x1024xf32>
    %cst_14 = arith.constant 0.000000e+00 : f32
    %12 = vector.broadcast %cst_14 : f32 to vector<8x256xf32>
    %13 = vector.extract_strided_slice %11 {offsets = [0, 0], sizes = [8, 256], strides = [1, 1]} : vector<8x1024xf32> to vector<8x256xf32>
    %14 = arith.negf %13 : vector<8x256xf32>
    %15 = math.exp %14 : vector<8x256xf32>
    %cst_15 = arith.constant 1.000000e+00 : f32
    %16 = vector.broadcast %cst_15 : f32 to vector<8x256xf32>
    %17 = arith.addf %16, %15 : vector<8x256xf32>
    %18 = arith.divf %16, %17 : vector<8x256xf32>
    %19 = vector.extract_strided_slice %11 {offsets = [0, 256], sizes = [8, 256], strides = [1, 1]} : vector<8x1024xf32> to vector<8x256xf32>
    %20 = arith.negf %19 : vector<8x256xf32>
    %21 = math.exp %20 : vector<8x256xf32>
    %cst_16 = arith.constant 1.000000e+00 : f32
    %22 = vector.broadcast %cst_16 : f32 to vector<8x256xf32>
    %23 = arith.addf %22, %21 : vector<8x256xf32>
    %24 = arith.divf %22, %23 : vector<8x256xf32>
    %25 = vector.extract_strided_slice %11 {offsets = [0, 512], sizes = [8, 256], strides = [1, 1]} : vector<8x1024xf32> to vector<8x256xf32>
    %26 = math.tanh %25 : vector<8x256xf32>
    %27 = vector.extract_strided_slice %11 {offsets = [0, 768], sizes = [8, 256], strides = [1, 1]} : vector<8x1024xf32> to vector<8x256xf32>
    %28 = arith.negf %27 : vector<8x256xf32>
    %29 = math.exp %28 : vector<8x256xf32>
    %cst_17 = arith.constant 1.000000e+00 : f32
    %30 = vector.broadcast %cst_17 : f32 to vector<8x256xf32>
    %31 = arith.addf %30, %29 : vector<8x256xf32>
    %32 = arith.divf %30, %31 : vector<8x256xf32>
    %33 = arith.mulf %24, %12 : vector<8x256xf32>
    %34 = arith.mulf %18, %26 : vector<8x256xf32>
    %35 = arith.addf %33, %34 : vector<8x256xf32>
    %36 = math.tanh %35 : vector<8x256xf32>
    %37 = arith.mulf %32, %36 : vector<8x256xf32>
    %c1_i32 = arith.constant 1 : i32
    %38 = arith.index_cast %c1_i32 : i32 to index
    %c0_18 = arith.constant 0 : index
    %c0_19 = arith.constant 0 : index
    %39 = vector.load %arg11[%38, %c0_18, %c0_19] : memref<8x8x1024xf32, #tpu.memory_space<vmem>>, vector<1x8x1024xf32>
    %40 = vector.shape_cast %39 : vector<1x8x1024xf32> to vector<8x1024xf32>
    %41 = arith.truncf %37 : vector<8x256xf32> to vector<8x256xbf16>
    %cst_20 = arith.constant dense<0.000000e+00> : vector<8x1024xf32>
    %42 = tpu.matmul %41, %9, %cst_20 {dimension_numbers = #tpu.dot_dimension_numbers<[1], [0], [0], [1], [0, 0, 1, 1], [], []>} : vector<8x256xbf16>, vector<256x1024xbf16>, vector<8x1024xf32> -> vector<8x1024xf32>
    %43 = arith.addf %40, %42 : vector<8x1024xf32>
    %44 = vector.extract_strided_slice %43 {offsets = [0, 0], sizes = [8, 256], strides = [1, 1]} : vector<8x1024xf32> to vector<8x256xf32>
    %45 = arith.negf %44 : vector<8x256xf32>
    %46 = math.exp %45 : vector<8x256xf32>
    %cst_21 = arith.constant 1.000000e+00 : f32
    %47 = vector.broadcast %cst_21 : f32 to vector<8x256xf32>
    %48 = arith.addf %47, %46 : vector<8x256xf32>
    %49 = arith.divf %47, %48 : vector<8x256xf32>
    %50 = vector.extract_strided_slice %43 {offsets = [0, 256], sizes = [8, 256], strides = [1, 1]} : vector<8x1024xf32> to vector<8x256xf32>
    %51 = arith.negf %50 : vector<8x256xf32>
    %52 = math.exp %51 : vector<8x256xf32>
    %cst_22 = arith.constant 1.000000e+00 : f32
    %53 = vector.broadcast %cst_22 : f32 to vector<8x256xf32>
    %54 = arith.addf %53, %52 : vector<8x256xf32>
    %55 = arith.divf %53, %54 : vector<8x256xf32>
    %56 = vector.extract_strided_slice %43 {offsets = [0, 512], sizes = [8, 256], strides = [1, 1]} : vector<8x1024xf32> to vector<8x256xf32>
    %57 = math.tanh %56 : vector<8x256xf32>
    %58 = vector.extract_strided_slice %43 {offsets = [0, 768], sizes = [8, 256], strides = [1, 1]} : vector<8x1024xf32> to vector<8x256xf32>
    %59 = arith.negf %58 : vector<8x256xf32>
    %60 = math.exp %59 : vector<8x256xf32>
    %cst_23 = arith.constant 1.000000e+00 : f32
    %61 = vector.broadcast %cst_23 : f32 to vector<8x256xf32>
    %62 = arith.addf %61, %60 : vector<8x256xf32>
    %63 = arith.divf %61, %62 : vector<8x256xf32>
    %64 = arith.mulf %55, %35 : vector<8x256xf32>
    %65 = arith.mulf %49, %57 : vector<8x256xf32>
    %66 = arith.addf %64, %65 : vector<8x256xf32>
    %67 = math.tanh %66 : vector<8x256xf32>
    %68 = arith.mulf %63, %67 : vector<8x256xf32>
    %c2_i32 = arith.constant 2 : i32
    %69 = arith.index_cast %c2_i32 : i32 to index
    %c0_24 = arith.constant 0 : index
    %c0_25 = arith.constant 0 : index
    %70 = vector.load %arg11[%69, %c0_24, %c0_25] : memref<8x8x1024xf32, #tpu.memory_space<vmem>>, vector<1x8x1024xf32>
    %71 = vector.shape_cast %70 : vector<1x8x1024xf32> to vector<8x1024xf32>
    %72 = arith.truncf %68 : vector<8x256xf32> to vector<8x256xbf16>
    %cst_26 = arith.constant dense<0.000000e+00> : vector<8x1024xf32>
    %73 = tpu.matmul %72, %9, %cst_26 {dimension_numbers = #tpu.dot_dimension_numbers<[1], [0], [0], [1], [0, 0, 1, 1], [], []>} : vector<8x256xbf16>, vector<256x1024xbf16>, vector<8x1024xf32> -> vector<8x1024xf32>
    %74 = arith.addf %71, %73 : vector<8x1024xf32>
    %75 = vector.extract_strided_slice %74 {offsets = [0, 0], sizes = [8, 256], strides = [1, 1]} : vector<8x1024xf32> to vector<8x256xf32>
    %76 = arith.negf %75 : vector<8x256xf32>
    %77 = math.exp %76 : vector<8x256xf32>
    %cst_27 = arith.constant 1.000000e+00 : f32
    %78 = vector.broadcast %cst_27 : f32 to vector<8x256xf32>
    %79 = arith.addf %78, %77 : vector<8x256xf32>
    %80 = arith.divf %78, %79 : vector<8x256xf32>
    %81 = vector.extract_strided_slice %74 {offsets = [0, 256], sizes = [8, 256], strides = [1, 1]} : vector<8x1024xf32> to vector<8x256xf32>
    %82 = arith.negf %81 : vector<8x256xf32>
    %83 = math.exp %82 : vector<8x256xf32>
    %cst_28 = arith.constant 1.000000e+00 : f32
    %84 = vector.broadcast %cst_28 : f32 to vector<8x256xf32>
    %85 = arith.addf %84, %83 : vector<8x256xf32>
    %86 = arith.divf %84, %85 : vector<8x256xf32>
    %87 = vector.extract_strided_slice %74 {offsets = [0, 512], sizes = [8, 256], strides = [1, 1]} : vector<8x1024xf32> to vector<8x256xf32>
    %88 = math.tanh %87 : vector<8x256xf32>
    %89 = vector.extract_strided_slice %74 {offsets = [0, 768], sizes = [8, 256], strides = [1, 1]} : vector<8x1024xf32> to vector<8x256xf32>
    %90 = arith.negf %89 : vector<8x256xf32>
    %91 = math.exp %90 : vector<8x256xf32>
    %cst_29 = arith.constant 1.000000e+00 : f32
    %92 = vector.broadcast %cst_29 : f32 to vector<8x256xf32>
    %93 = arith.addf %92, %91 : vector<8x256xf32>
    %94 = arith.divf %92, %93 : vector<8x256xf32>
    %95 = arith.mulf %86, %66 : vector<8x256xf32>
    %96 = arith.mulf %80, %88 : vector<8x256xf32>
    %97 = arith.addf %95, %96 : vector<8x256xf32>
    %98 = math.tanh %97 : vector<8x256xf32>
    %99 = arith.mulf %94, %98 : vector<8x256xf32>
    %c3_i32 = arith.constant 3 : i32
    %100 = arith.index_cast %c3_i32 : i32 to index
    %c0_30 = arith.constant 0 : index
    %c0_31 = arith.constant 0 : index
    %101 = vector.load %arg11[%100, %c0_30, %c0_31] : memref<8x8x1024xf32, #tpu.memory_space<vmem>>, vector<1x8x1024xf32>
    %102 = vector.shape_cast %101 : vector<1x8x1024xf32> to vector<8x1024xf32>
    %103 = arith.truncf %99 : vector<8x256xf32> to vector<8x256xbf16>
    %cst_32 = arith.constant dense<0.000000e+00> : vector<8x1024xf32>
    %104 = tpu.matmul %103, %9, %cst_32 {dimension_numbers = #tpu.dot_dimension_numbers<[1], [0], [0], [1], [0, 0, 1, 1], [], []>} : vector<8x256xbf16>, vector<256x1024xbf16>, vector<8x1024xf32> -> vector<8x1024xf32>
    %105 = arith.addf %102, %104 : vector<8x1024xf32>
    %106 = vector.extract_strided_slice %105 {offsets = [0, 0], sizes = [8, 256], strides = [1, 1]} : vector<8x1024xf32> to vector<8x256xf32>
    %107 = arith.negf %106 : vector<8x256xf32>
    %108 = math.exp %107 : vector<8x256xf32>
    %cst_33 = arith.constant 1.000000e+00 : f32
    %109 = vector.broadcast %cst_33 : f32 to vector<8x256xf32>
    %110 = arith.addf %109, %108 : vector<8x256xf32>
    %111 = arith.divf %109, %110 : vector<8x256xf32>
    %112 = vector.extract_strided_slice %105 {offsets = [0, 256], sizes = [8, 256], strides = [1, 1]} : vector<8x1024xf32> to vector<8x256xf32>
    %113 = arith.negf %112 : vector<8x256xf32>
    %114 = math.exp %113 : vector<8x256xf32>
    %cst_34 = arith.constant 1.000000e+00 : f32
    %115 = vector.broadcast %cst_34 : f32 to vector<8x256xf32>
    %116 = arith.addf %115, %114 : vector<8x256xf32>
    %117 = arith.divf %115, %116 : vector<8x256xf32>
    %118 = vector.extract_strided_slice %105 {offsets = [0, 512], sizes = [8, 256], strides = [1, 1]} : vector<8x1024xf32> to vector<8x256xf32>
    %119 = math.tanh %118 : vector<8x256xf32>
    %120 = vector.extract_strided_slice %105 {offsets = [0, 768], sizes = [8, 256], strides = [1, 1]} : vector<8x1024xf32> to vector<8x256xf32>
    %121 = arith.negf %120 : vector<8x256xf32>
    %122 = math.exp %121 : vector<8x256xf32>
    %cst_35 = arith.constant 1.000000e+00 : f32
    %123 = vector.broadcast %cst_35 : f32 to vector<8x256xf32>
    %124 = arith.addf %123, %122 : vector<8x256xf32>
    %125 = arith.divf %123, %124 : vector<8x256xf32>
    %126 = arith.mulf %117, %97 : vector<8x256xf32>
    %127 = arith.mulf %111, %119 : vector<8x256xf32>
    %128 = arith.addf %126, %127 : vector<8x256xf32>
    %129 = math.tanh %128 : vector<8x256xf32>
    %130 = arith.mulf %125, %129 : vector<8x256xf32>
    %c4_i32 = arith.constant 4 : i32
    %131 = arith.index_cast %c4_i32 : i32 to index
    %c0_36 = arith.constant 0 : index
    %c0_37 = arith.constant 0 : index
    %132 = vector.load %arg11[%131, %c0_36, %c0_37] : memref<8x8x1024xf32, #tpu.memory_space<vmem>>, vector<1x8x1024xf32>
    %133 = vector.shape_cast %132 : vector<1x8x1024xf32> to vector<8x1024xf32>
    %134 = arith.truncf %130 : vector<8x256xf32> to vector<8x256xbf16>
    %cst_38 = arith.constant dense<0.000000e+00> : vector<8x1024xf32>
    %135 = tpu.matmul %134, %9, %cst_38 {dimension_numbers = #tpu.dot_dimension_numbers<[1], [0], [0], [1], [0, 0, 1, 1], [], []>} : vector<8x256xbf16>, vector<256x1024xbf16>, vector<8x1024xf32> -> vector<8x1024xf32>
    %136 = arith.addf %133, %135 : vector<8x1024xf32>
    %137 = vector.extract_strided_slice %136 {offsets = [0, 0], sizes = [8, 256], strides = [1, 1]} : vector<8x1024xf32> to vector<8x256xf32>
    %138 = arith.negf %137 : vector<8x256xf32>
    %139 = math.exp %138 : vector<8x256xf32>
    %cst_39 = arith.constant 1.000000e+00 : f32
    %140 = vector.broadcast %cst_39 : f32 to vector<8x256xf32>
    %141 = arith.addf %140, %139 : vector<8x256xf32>
    %142 = arith.divf %140, %141 : vector<8x256xf32>
    %143 = vector.extract_strided_slice %136 {offsets = [0, 256], sizes = [8, 256], strides = [1, 1]} : vector<8x1024xf32> to vector<8x256xf32>
    %144 = arith.negf %143 : vector<8x256xf32>
    %145 = math.exp %144 : vector<8x256xf32>
    %cst_40 = arith.constant 1.000000e+00 : f32
    %146 = vector.broadcast %cst_40 : f32 to vector<8x256xf32>
    %147 = arith.addf %146, %145 : vector<8x256xf32>
    %148 = arith.divf %146, %147 : vector<8x256xf32>
    %149 = vector.extract_strided_slice %136 {offsets = [0, 512], sizes = [8, 256], strides = [1, 1]} : vector<8x1024xf32> to vector<8x256xf32>
    %150 = math.tanh %149 : vector<8x256xf32>
    %151 = vector.extract_strided_slice %136 {offsets = [0, 768], sizes = [8, 256], strides = [1, 1]} : vector<8x1024xf32> to vector<8x256xf32>
    %152 = arith.negf %151 : vector<8x256xf32>
    %153 = math.exp %152 : vector<8x256xf32>
    %cst_41 = arith.constant 1.000000e+00 : f32
    %154 = vector.broadcast %cst_41 : f32 to vector<8x256xf32>
    %155 = arith.addf %154, %153 : vector<8x256xf32>
    %156 = arith.divf %154, %155 : vector<8x256xf32>
    %157 = arith.mulf %148, %128 : vector<8x256xf32>
    %158 = arith.mulf %142, %150 : vector<8x256xf32>
    %159 = arith.addf %157, %158 : vector<8x256xf32>
    %160 = math.tanh %159 : vector<8x256xf32>
    %161 = arith.mulf %156, %160 : vector<8x256xf32>
    %c5_i32 = arith.constant 5 : i32
    %162 = arith.index_cast %c5_i32 : i32 to index
    %c0_42 = arith.constant 0 : index
    %c0_43 = arith.constant 0 : index
    %163 = vector.load %arg11[%162, %c0_42, %c0_43] : memref<8x8x1024xf32, #tpu.memory_space<vmem>>, vector<1x8x1024xf32>
    %164 = vector.shape_cast %163 : vector<1x8x1024xf32> to vector<8x1024xf32>
    %165 = arith.truncf %161 : vector<8x256xf32> to vector<8x256xbf16>
    %cst_44 = arith.constant dense<0.000000e+00> : vector<8x1024xf32>
    %166 = tpu.matmul %165, %9, %cst_44 {dimension_numbers = #tpu.dot_dimension_numbers<[1], [0], [0], [1], [0, 0, 1, 1], [], []>} : vector<8x256xbf16>, vector<256x1024xbf16>, vector<8x1024xf32> -> vector<8x1024xf32>
    %167 = arith.addf %164, %166 : vector<8x1024xf32>
    %168 = vector.extract_strided_slice %167 {offsets = [0, 0], sizes = [8, 256], strides = [1, 1]} : vector<8x1024xf32> to vector<8x256xf32>
    %169 = arith.negf %168 : vector<8x256xf32>
    %170 = math.exp %169 : vector<8x256xf32>
    %cst_45 = arith.constant 1.000000e+00 : f32
    %171 = vector.broadcast %cst_45 : f32 to vector<8x256xf32>
    %172 = arith.addf %171, %170 : vector<8x256xf32>
    %173 = arith.divf %171, %172 : vector<8x256xf32>
    %174 = vector.extract_strided_slice %167 {offsets = [0, 256], sizes = [8, 256], strides = [1, 1]} : vector<8x1024xf32> to vector<8x256xf32>
    %175 = arith.negf %174 : vector<8x256xf32>
    %176 = math.exp %175 : vector<8x256xf32>
    %cst_46 = arith.constant 1.000000e+00 : f32
    %177 = vector.broadcast %cst_46 : f32 to vector<8x256xf32>
    %178 = arith.addf %177, %176 : vector<8x256xf32>
    %179 = arith.divf %177, %178 : vector<8x256xf32>
    %180 = vector.extract_strided_slice %167 {offsets = [0, 512], sizes = [8, 256], strides = [1, 1]} : vector<8x1024xf32> to vector<8x256xf32>
    %181 = math.tanh %180 : vector<8x256xf32>
    %182 = vector.extract_strided_slice %167 {offsets = [0, 768], sizes = [8, 256], strides = [1, 1]} : vector<8x1024xf32> to vector<8x256xf32>
    %183 = arith.negf %182 : vector<8x256xf32>
    %184 = math.exp %183 : vector<8x256xf32>
    %cst_47 = arith.constant 1.000000e+00 : f32
    %185 = vector.broadcast %cst_47 : f32 to vector<8x256xf32>
    %186 = arith.addf %185, %184 : vector<8x256xf32>
    %187 = arith.divf %185, %186 : vector<8x256xf32>
    %188 = arith.mulf %179, %159 : vector<8x256xf32>
    %189 = arith.mulf %173, %181 : vector<8x256xf32>
    %190 = arith.addf %188, %189 : vector<8x256xf32>
    %191 = math.tanh %190 : vector<8x256xf32>
    %192 = arith.mulf %187, %191 : vector<8x256xf32>
    %c6_i32 = arith.constant 6 : i32
    %193 = arith.index_cast %c6_i32 : i32 to index
    %c0_48 = arith.constant 0 : index
    %c0_49 = arith.constant 0 : index
    %194 = vector.load %arg11[%193, %c0_48, %c0_49] : memref<8x8x1024xf32, #tpu.memory_space<vmem>>, vector<1x8x1024xf32>
    %195 = vector.shape_cast %194 : vector<1x8x1024xf32> to vector<8x1024xf32>
    %196 = arith.truncf %192 : vector<8x256xf32> to vector<8x256xbf16>
    %cst_50 = arith.constant dense<0.000000e+00> : vector<8x1024xf32>
    %197 = tpu.matmul %196, %9, %cst_50 {dimension_numbers = #tpu.dot_dimension_numbers<[1], [0], [0], [1], [0, 0, 1, 1], [], []>} : vector<8x256xbf16>, vector<256x1024xbf16>, vector<8x1024xf32> -> vector<8x1024xf32>
    %198 = arith.addf %195, %197 : vector<8x1024xf32>
    %199 = vector.extract_strided_slice %198 {offsets = [0, 0], sizes = [8, 256], strides = [1, 1]} : vector<8x1024xf32> to vector<8x256xf32>
    %200 = arith.negf %199 : vector<8x256xf32>
    %201 = math.exp %200 : vector<8x256xf32>
    %cst_51 = arith.constant 1.000000e+00 : f32
    %202 = vector.broadcast %cst_51 : f32 to vector<8x256xf32>
    %203 = arith.addf %202, %201 : vector<8x256xf32>
    %204 = arith.divf %202, %203 : vector<8x256xf32>
    %205 = vector.extract_strided_slice %198 {offsets = [0, 256], sizes = [8, 256], strides = [1, 1]} : vector<8x1024xf32> to vector<8x256xf32>
    %206 = arith.negf %205 : vector<8x256xf32>
    %207 = math.exp %206 : vector<8x256xf32>
    %cst_52 = arith.constant 1.000000e+00 : f32
    %208 = vector.broadcast %cst_52 : f32 to vector<8x256xf32>
    %209 = arith.addf %208, %207 : vector<8x256xf32>
    %210 = arith.divf %208, %209 : vector<8x256xf32>
    %211 = vector.extract_strided_slice %198 {offsets = [0, 512], sizes = [8, 256], strides = [1, 1]} : vector<8x1024xf32> to vector<8x256xf32>
    %212 = math.tanh %211 : vector<8x256xf32>
    %213 = vector.extract_strided_slice %198 {offsets = [0, 768], sizes = [8, 256], strides = [1, 1]} : vector<8x1024xf32> to vector<8x256xf32>
    %214 = arith.negf %213 : vector<8x256xf32>
    %215 = math.exp %214 : vector<8x256xf32>
    %cst_53 = arith.constant 1.000000e+00 : f32
    %216 = vector.broadcast %cst_53 : f32 to vector<8x256xf32>
    %217 = arith.addf %216, %215 : vector<8x256xf32>
    %218 = arith.divf %216, %217 : vector<8x256xf32>
    %219 = arith.mulf %210, %190 : vector<8x256xf32>
    %220 = arith.mulf %204, %212 : vector<8x256xf32>
    %221 = arith.addf %219, %220 : vector<8x256xf32>
    %222 = math.tanh %221 : vector<8x256xf32>
    %223 = arith.mulf %218, %222 : vector<8x256xf32>
    %c7_i32 = arith.constant 7 : i32
    %224 = arith.index_cast %c7_i32 : i32 to index
    %c0_54 = arith.constant 0 : index
    %c0_55 = arith.constant 0 : index
    %225 = vector.load %arg11[%224, %c0_54, %c0_55] : memref<8x8x1024xf32, #tpu.memory_space<vmem>>, vector<1x8x1024xf32>
    %226 = vector.shape_cast %225 : vector<1x8x1024xf32> to vector<8x1024xf32>
    %227 = arith.truncf %223 : vector<8x256xf32> to vector<8x256xbf16>
    %cst_56 = arith.constant dense<0.000000e+00> : vector<8x1024xf32>
    %228 = tpu.matmul %227, %9, %cst_56 {dimension_numbers = #tpu.dot_dimension_numbers<[1], [0], [0], [1], [0, 0, 1, 1], [], []>} : vector<8x256xbf16>, vector<256x1024xbf16>, vector<8x1024xf32> -> vector<8x1024xf32>
    %229 = arith.addf %226, %228 : vector<8x1024xf32>
    %230 = vector.extract_strided_slice %229 {offsets = [0, 0], sizes = [8, 256], strides = [1, 1]} : vector<8x1024xf32> to vector<8x256xf32>
    %231 = arith.negf %230 : vector<8x256xf32>
    %232 = math.exp %231 : vector<8x256xf32>
    %cst_57 = arith.constant 1.000000e+00 : f32
    %233 = vector.broadcast %cst_57 : f32 to vector<8x256xf32>
    %234 = arith.addf %233, %232 : vector<8x256xf32>
    %235 = arith.divf %233, %234 : vector<8x256xf32>
    %236 = vector.extract_strided_slice %229 {offsets = [0, 256], sizes = [8, 256], strides = [1, 1]} : vector<8x1024xf32> to vector<8x256xf32>
    %237 = arith.negf %236 : vector<8x256xf32>
    %238 = math.exp %237 : vector<8x256xf32>
    %cst_58 = arith.constant 1.000000e+00 : f32
    %239 = vector.broadcast %cst_58 : f32 to vector<8x256xf32>
    %240 = arith.addf %239, %238 : vector<8x256xf32>
    %241 = arith.divf %239, %240 : vector<8x256xf32>
    %242 = vector.extract_strided_slice %229 {offsets = [0, 512], sizes = [8, 256], strides = [1, 1]} : vector<8x1024xf32> to vector<8x256xf32>
    %243 = math.tanh %242 : vector<8x256xf32>
    %244 = vector.extract_strided_slice %229 {offsets = [0, 768], sizes = [8, 256], strides = [1, 1]} : vector<8x1024xf32> to vector<8x256xf32>
    %245 = arith.negf %244 : vector<8x256xf32>
    %246 = math.exp %245 : vector<8x256xf32>
    %cst_59 = arith.constant 1.000000e+00 : f32
    %247 = vector.broadcast %cst_59 : f32 to vector<8x256xf32>
    %248 = arith.addf %247, %246 : vector<8x256xf32>
    %249 = arith.divf %247, %248 : vector<8x256xf32>
    %250 = arith.mulf %241, %221 : vector<8x256xf32>
    %251 = arith.mulf %235, %243 : vector<8x256xf32>
    %252 = arith.addf %250, %251 : vector<8x256xf32>
    %253 = math.tanh %252 : vector<8x256xf32>
    %254 = arith.mulf %249, %253 : vector<8x256xf32>
    %c7_i32_60 = arith.constant 7 : i32
    %c7 = arith.constant 7 : index
    %c0_61 = arith.constant 0 : index
    %c0_62 = arith.constant 0 : index
    %255 = vector.load %arg1[%c7, %c0_61, %c0_62] : memref<8x8x16xf32, #tpu.memory_space<vmem>>, vector<1x8x16xf32>
    %256 = vector.shape_cast %255 : vector<1x8x16xf32> to vector<8x16xf32>
    %c0_63 = arith.constant 0 : index
    %c0_64 = arith.constant 0 : index
    %257 = vector.load %arg5[%c0_63, %c0_64] : memref<16x1024xf32, #tpu.memory_space<vmem>>, vector<16x1024xf32>
    %cst_65 = arith.constant dense<0.000000e+00> : vector<8x1024xf32>
    %258 = tpu.matmul %256, %257, %cst_65 {dimension_numbers = #tpu.dot_dimension_numbers<[1], [0], [0], [1], [0, 0, 1, 1], [], []>} : vector<8x16xf32>, vector<16x1024xf32>, vector<8x1024xf32> -> vector<8x1024xf32>
    %c0_66 = arith.constant 0 : index
    %c0_67 = arith.constant 0 : index
    %259 = vector.load %arg6[%c0_66, %c0_67] : memref<1x1024xf32, #tpu.memory_space<vmem>>, vector<1x1024xf32>
    %260 = vector.broadcast %259 : vector<1x1024xf32> to vector<8x1024xf32>
    %261 = arith.addf %258, %260 : vector<8x1024xf32>
    %cst_68 = arith.constant 0.000000e+00 : f32
    %262 = vector.broadcast %cst_68 : f32 to vector<8x256xf32>
    %263 = vector.extract_strided_slice %261 {offsets = [0, 0], sizes = [8, 256], strides = [1, 1]} : vector<8x1024xf32> to vector<8x256xf32>
    %264 = arith.negf %263 : vector<8x256xf32>
    %265 = math.exp %264 : vector<8x256xf32>
    %cst_69 = arith.constant 1.000000e+00 : f32
    %266 = vector.broadcast %cst_69 : f32 to vector<8x256xf32>
    %267 = arith.addf %266, %265 : vector<8x256xf32>
    %268 = arith.divf %266, %267 : vector<8x256xf32>
    %269 = vector.extract_strided_slice %261 {offsets = [0, 256], sizes = [8, 256], strides = [1, 1]} : vector<8x1024xf32> to vector<8x256xf32>
    %270 = arith.negf %269 : vector<8x256xf32>
    %271 = math.exp %270 : vector<8x256xf32>
    %cst_70 = arith.constant 1.000000e+00 : f32
    %272 = vector.broadcast %cst_70 : f32 to vector<8x256xf32>
    %273 = arith.addf %272, %271 : vector<8x256xf32>
    %274 = arith.divf %272, %273 : vector<8x256xf32>
    %275 = vector.extract_strided_slice %261 {offsets = [0, 512], sizes = [8, 256], strides = [1, 1]} : vector<8x1024xf32> to vector<8x256xf32>
    %276 = math.tanh %275 : vector<8x256xf32>
    %277 = vector.extract_strided_slice %261 {offsets = [0, 768], sizes = [8, 256], strides = [1, 1]} : vector<8x1024xf32> to vector<8x256xf32>
    %278 = arith.negf %277 : vector<8x256xf32>
    %279 = math.exp %278 : vector<8x256xf32>
    %cst_71 = arith.constant 1.000000e+00 : f32
    %280 = vector.broadcast %cst_71 : f32 to vector<8x256xf32>
    %281 = arith.addf %280, %279 : vector<8x256xf32>
    %282 = arith.divf %280, %281 : vector<8x256xf32>
    %283 = arith.mulf %274, %262 : vector<8x256xf32>
    %284 = arith.mulf %268, %276 : vector<8x256xf32>
    %285 = arith.addf %283, %284 : vector<8x256xf32>
    %286 = math.tanh %285 : vector<8x256xf32>
    %287 = arith.mulf %282, %286 : vector<8x256xf32>
    %c0_72 = arith.constant 0 : index
    %c0_73 = arith.constant 0 : index
    %288 = vector.load %arg7[%c0_72, %c0_73] : memref<256x1xf32, #tpu.memory_space<vmem>>, vector<256x1xf32>
    %cst_74 = arith.constant dense<0.000000e+00> : vector<8x1xf32>
    %289 = tpu.matmul %254, %288, %cst_74 {dimension_numbers = #tpu.dot_dimension_numbers<[1], [0], [0], [1], [0, 0, 1, 1], [], []>} : vector<8x256xf32>, vector<256x1xf32>, vector<8x1xf32> -> vector<8x1xf32>
    %c0_75 = arith.constant 0 : index
    %c0_76 = arith.constant 0 : index
    %290 = vector.load %arg8[%c0_75, %c0_76] : memref<256x1xf32, #tpu.memory_space<vmem>>, vector<256x1xf32>
    %cst_77 = arith.constant dense<0.000000e+00> : vector<8x1xf32>
    %291 = tpu.matmul %287, %290, %cst_77 {dimension_numbers = #tpu.dot_dimension_numbers<[1], [0], [0], [1], [0, 0, 1, 1], [], []>} : vector<8x256xf32>, vector<256x1xf32>, vector<8x1xf32> -> vector<8x1xf32>
    %292 = arith.addf %289, %291 : vector<8x1xf32>
    %c0_78 = arith.constant 0 : index
    %c0_79 = arith.constant 0 : index
    %293 = vector.load %arg9[%c0_78, %c0_79] : memref<1x1xf32, #tpu.memory_space<vmem>>, vector<1x1xf32>
    %294 = vector.broadcast %293 : vector<1x1xf32> to vector<8x1xf32>
    %295 = arith.addf %292, %294 : vector<8x1xf32>
    %c0_80 = arith.constant 0 : index
    %c0_81 = arith.constant 0 : index
    %296 = vector.load %arg10[%c0_80, %c0_81] : memref<8x1xf32, #tpu.memory_space<vmem>>, vector<8x1xf32>
    tpu.vector_store %arg10[%c0_80, %c0_81], %295 {strides = array<i32>} : memref<8x1xf32, #tpu.memory_space<vmem>>, vector<8x1xf32>,
    return
  }
  func.func @transform_0(%arg0: i32) -> (i32, i32, i32) {
    %c0_i32 = arith.constant 0 : i32
    %c0_i32_0 = arith.constant 0 : i32
    %c0_i32_1 = arith.constant 0 : i32
    return %c0_i32, %arg0, %c0_i32_0 : i32, i32, i32
  }
  func.func @transform_1(%arg0: i32) -> (i32, i32) {
    %c0_i32 = arith.constant 0 : i32
    %c0_i32_0 = arith.constant 0 : i32
    %c0_i32_1 = arith.constant 0 : i32
    return %c0_i32, %c0_i32_0 : i32, i32
  }
  func.func @transform_2(%arg0: i32) -> (i32, i32) {
    %c0_i32 = arith.constant 0 : i32
    %c0_i32_0 = arith.constant 0 : i32
    %c0_i32_1 = arith.constant 0 : i32
    return %c0_i32, %c0_i32_0 : i32, i32
  }
  func.func @transform_3(%arg0: i32) -> (i32, i32) {
    %c0_i32 = arith.constant 0 : i32
    %c0_i32_0 = arith.constant 0 : i32
    %c0_i32_1 = arith.constant 0 : i32
    return %c0_i32, %c0_i32_0 : i32, i32
  }
  func.func @transform_4(%arg0: i32) -> (i32, i32) {
    %c0_i32 = arith.constant 0 : i32
    %c0_i32_0 = arith.constant 0 : i32
    %c0_i32_1 = arith.constant 0 : i32
    return %c0_i32, %c0_i32_0 : i32, i32
  }
  func.func @transform_5(%arg0: i32) -> (i32, i32) {
    %c0_i32 = arith.constant 0 : i32
    %c0_i32_0 = arith.constant 0 : i32
    %c0_i32_1 = arith.constant 0 : i32
    return %c0_i32, %c0_i32_0 : i32, i32
  }
  func.func @transform_6(%arg0: i32) -> (i32, i32) {
    %c0_i32 = arith.constant 0 : i32
    %c0_i32_0 = arith.constant 0 : i32
    %c0_i32_1 = arith.constant 0 : i32
    return %c0_i32, %c0_i32_0 : i32, i32
  }
  func.func @transform_7(%arg0: i32) -> (i32, i32) {
    %c0_i32 = arith.constant 0 : i32
    %c0_i32_0 = arith.constant 0 : i32
    %c0_i32_1 = arith.constant 0 : i32
    return %c0_i32, %c0_i32_0 : i32, i32
  }
  func.func @transform_8(%arg0: i32) -> (i32, i32) {
    %c0_i32 = arith.constant 0 : i32
    %c0_i32_0 = arith.constant 0 : i32
    %c0_i32_1 = arith.constant 0 : i32
    return %c0_i32, %c0_i32_0 : i32, i32
  }
  func.func @transform_9(%arg0: i32) -> (i32, i32) {
    %c0_i32 = arith.constant 0 : i32
    %c0_i32_0 = arith.constant 0 : i32
    return %arg0, %c0_i32 : i32, i32
  }
}

</mosaic_0001>

<llo_original>
// kernel: tpu_custom_call.1
$region0: #{tpu_custom_call.1}
  #allocation0 [shape = 'u32[]', space=smem, size = 0x4, offset = 0x4, fixed_abs, tag = 'smem constant byte address 0x4 - core index']
  #allocation1 [shape = 'u32[144,128]{1,0:T(1,128)}', space=vmem, size = 0x12000, scoped, tag = 'internal scratch']
  #allocation2 [shape = 'f32[8,8,1024]{2,1,0:T(8,128)}', space=vmem, size = 0x40000, scoped, tag = 'scratch operand']
  #allocation3 [shape = 'f32[1,1]{1,0:T(1,128)S(1)}', space=vmem, size = 0x200, scoped, tag = 'scoped memory for tpu_custom_call.1']
  %s0 = inlined_call_operand.vmem [shape: f32[8,8,16], index: 0, kind: input, shape index: {}]
  %s1 = inlined_call_operand.vmem [shape: f32[16,1024], index: 1, kind: input, shape index: {}]
  %s2 = inlined_call_operand.hbm [shape: bf16[256,1024], index: 2, kind: input, shape index: {}]
  %s3 = inlined_call_operand.vmem [shape: f32[1,1024], index: 3, kind: input, shape index: {}]
  %s4 = inlined_call_operand.vmem [shape: f32[16,1024], index: 4, kind: input, shape index: {}]
  %s5 = inlined_call_operand.vmem [shape: f32[1,1024], index: 5, kind: input, shape index: {}]
  %s6 = inlined_call_operand.vmem [shape: f32[256,1], index: 6, kind: input, shape index: {}]
  %s7 = inlined_call_operand.vmem [shape: f32[256,1], index: 7, kind: input, shape index: {}]
  %s8 = inlined_call_operand.<no memory space> [shape: f32[1,1], index: 8, kind: input, shape index: {}]
  %s9 = inlined_call_operand.vmem [shape: f32[8,1], index: 9, kind: output, shape index: {}]
  %s10 = sld [smem:[#allocation0]]
  $region50: #{tpu_custom_call.1} parent=0
    _
  %s12 = ssub.s32 1, %s10
  %s13 = scalar_select 0, %s12, %s10
  %v14 = vstv %s8
  %15 = vst [vmem:[#allocation3] sm:$0x1] %v14
  $region1: #{tpu_custom_call.1} parent=0
    #allocation4 [shape = 'u8[524288]{0}', space=vmem, size = 0x80000, scoped, tag = 'input window, operand 2, single buffered']
    #allocation5 [shape = 's32[1]{0}', space=sflag, size = 0x4, scoped, tag = 'scoped memory for tpu_custom_call.1']
    %16 = vsyncpa [#allocation5], 0
    // Predicated region
    $region2: #{tpu_custom_call.1} parent=1 // pred_check
      _
    $region3: #{tpu_custom_call.1} parent=1 // pred_check_branch
      %18 = sbr.rel (0) target = $region5
    $region4: #{tpu_custom_call.1} parent=1 // pred_region
      _
    $region5: #{tpu_custom_call.1} parent=1 // pred_fallthru
      _
    // Predicated region
    $region6: #{tpu_custom_call.1} parent=1 // pred_check
      _
    $region7: #{tpu_custom_call.1} parent=1 // pred_check_branch
      %20 = sbr.rel (0) target = $region9
    $region8: #{tpu_custom_call.1} parent=1 // pred_region
      _
    $region9: #{tpu_custom_call.1} parent=1 // pred_fallthru
      _
    // Predicated region
    $region10: #{tpu_custom_call.1} parent=1 // pred_check
      _
    $region11: #{tpu_custom_call.1} parent=1 // pred_check_branch
      %22 = sbr.rel (0) target = $region13
    $region12: #{tpu_custom_call.1} parent=1 // pred_region
      %s24 = ssub.s32 16384, 16384
      %25 = vsyncadd [#allocation5], %s24
      %s26 = sshll.u32 [#allocation4], 4
      %s27 = int_to_ptr.vmem [resolvable:$true] %s26
      %32 = dma.hbm_to_vmem [thread:$0]  %s2, 16384, %s27, [#allocation5], 512, 512, 32
    $region13: #{tpu_custom_call.1} parent=1 // pred_fallthru
      _
    // Predicated region
    $region14: #{tpu_custom_call.1} parent=1 // pred_check
      _
    $region15: #{tpu_custom_call.1} parent=1 // pred_check_branch
      %34 = sbr.rel (0) target = $region17
    $region16: #{tpu_custom_call.1} parent=1 // pred_region
      _
    $region17: #{tpu_custom_call.1} parent=1 // pred_fallthru
      _
    // Predicated region
    $region18: #{tpu_custom_call.1} parent=1 // pred_check
      _
    $region19: #{tpu_custom_call.1} parent=1 // pred_check_branch
      %36 = sbr.rel (0) target = $region21
    $region20: #{tpu_custom_call.1} parent=1 // pred_region
      _
    $region21: #{tpu_custom_call.1} parent=1 // pred_fallthru
      _
    // Predicated region
    $region22: #{tpu_custom_call.1} parent=1 // pred_check
      _
    $region23: #{tpu_custom_call.1} parent=1 // pred_check_branch
      %38 = sbr.rel (0) target = $region25
    $region24: #{tpu_custom_call.1} parent=1 // pred_region
      _
    $region25: #{tpu_custom_call.1} parent=1 // pred_fallthru
      _
    // Predicated region
    $region26: #{tpu_custom_call.1} parent=1 // pred_check
      _
    $region27: #{tpu_custom_call.1} parent=1 // pred_check_branch
      %40 = sbr.rel (0) target = $region29
    $region28: #{tpu_custom_call.1} parent=1 // pred_region
      _
    $region29: #{tpu_custom_call.1} parent=1 // pred_fallthru
      _
    // Predicated region
    $region30: #{tpu_custom_call.1} parent=1 // pred_check
      _
    $region31: #{tpu_custom_call.1} parent=1 // pred_check_branch
      %42 = sbr.rel (0) target = $region33
    $region32: #{tpu_custom_call.1} parent=1 // pred_region
      _
    $region33: #{tpu_custom_call.1} parent=1 // pred_fallthru
      _
    // Predicated region
    $region34: #{tpu_custom_call.1} parent=1 // pred_check
      _
    $region35: #{tpu_custom_call.1} parent=1 // pred_check_branch
      %44 = sbr.rel (0) target = $region37
    $region36: #{tpu_custom_call.1} parent=1 // pred_region
      _
    $region37: #{tpu_custom_call.1} parent=1 // pred_fallthru
      _
    // Predicated region
    $region38: #{tpu_custom_call.1} parent=1 // pred_check
      _
    $region39: #{tpu_custom_call.1} parent=1 // pred_check_branch
      %46 = sbr.rel (0) target = $region41
    $region40: #{tpu_custom_call.1} parent=1 // pred_region
      %47 = dma.done [#allocation5], 16384
    $region41: #{tpu_custom_call.1} parent=1 // pred_fallthru
      _
    %v48 = vld [vmem:[%s0] sm:$0xff]
    %v49 = vld [vmem:[%s0 + $0x8] sm:$0xff]
    %v50 = vld [vmem:[%s0 + $0x10] sm:$0xff]
    %v51 = vld [vmem:[%s0 + $0x18] sm:$0xff]
    %v52 = vld [vmem:[%s0 + $0x20] sm:$0xff]
    %v53 = vld [vmem:[%s0 + $0x28] sm:$0xff]
    %v54 = vld [vmem:[%s0 + $0x30] sm:$0xff]
    %v55 = vld [vmem:[%s0 + $0x38] sm:$0xff]
    %v56 = vld [vmem:[%s1] sm:$0xff]
    %v57 = vld [vmem:[%s1 + $0x8] sm:$0xff]
    %v58 = vld [vmem:[%s1 + $0x10] sm:$0xff]
    %v59 = vld [vmem:[%s1 + $0x18] sm:$0xff]
    %v60 = vld [vmem:[%s1 + $0x20] sm:$0xff]
    %v61 = vld [vmem:[%s1 + $0x28] sm:$0xff]
    %v62 = vld [vmem:[%s1 + $0x30] sm:$0xff]
    %v63 = vld [vmem:[%s1 + $0x38] sm:$0xff]
    %v64 = vld [vmem:[%s1 + $0x40] sm:$0xff]
    %v65 = vld [vmem:[%s1 + $0x48] sm:$0xff]
    %v66 = vld [vmem:[%s1 + $0x50] sm:$0xff]
    %v67 = vld [vmem:[%s1 + $0x58] sm:$0xff]
    %v68 = vld [vmem:[%s1 + $0x60] sm:$0xff]
    %v69 = vld [vmem:[%s1 + $0x68] sm:$0xff]
    %v70 = vld [vmem:[%s1 + $0x70] sm:$0xff]
    %v71 = vld [vmem:[%s1 + $0x78] sm:$0xff]
    %v72 = vld [vmem:[%s3] sm:$0xff]
    %v74 = vlaneseq
    %v75 = vshrl.u32 %v74, 7
    %v76 = vsub.s32 0, %v75
    %v77 = vrot.slane %v72, %v76
    %v78 = vlaneseq
    %v79 = vshrl.u32 %v78, 7
    %v80 = vsub.s32 1, %v79
    %v81 = vrot.slane %v72, %v80
    %v82 = vlaneseq
    %v83 = vshrl.u32 %v82, 7
    %v84 = vsub.s32 2, %v83
    %v85 = vrot.slane %v72, %v84
    %v86 = vlaneseq
    %v87 = vshrl.u32 %v86, 7
    %v88 = vsub.s32 3, %v87
    %v89 = vrot.slane %v72, %v88
    %v90 = vlaneseq
    %v91 = vshrl.u32 %v90, 7
    %v92 = vsub.s32 4, %v91
    %v93 = vrot.slane %v72, %v92
    %v94 = vlaneseq
    %v95 = vshrl.u32 %v94, 7
    %v96 = vsub.s32 5, %v95
    %v97 = vrot.slane %v72, %v96
    %v98 = vlaneseq
    %v99 = vshrl.u32 %v98, 7
    %v100 = vsub.s32 6, %v99
    %v101 = vrot.slane %v72, %v100
    %v102 = vlaneseq
    %v103 = vshrl.u32 %v102, 7
    %v104 = vsub.s32 7, %v103
    %v105 = vrot.slane %v72, %v104
    %vm114 = vcmask 130048
    %v116 = vsel %vm114, %v48, 0
    %v119 = vsel %vm114, %v49, 0
    %v122 = vsel %vm114, %v50, 0
    %v125 = vsel %vm114, %v51, 0
    %v128 = vsel %vm114, %v52, 0
    %v131 = vsel %vm114, %v53, 0
    %v134 = vsel %vm114, %v54, 0
    %v137 = vsel %vm114, %v55, 0
    %139 = vmatprep.subr.mxu0 0.0
    %140 = vmatpush1.msra.mxu0 0.0
    %141 = vmatprep.subr.mxu0 0.0
    %142 = vmatpush1.msra.mxu0 0.0
    %143 = vmatprep.subr.mxu0 0.0
    %144 = vmatpush1.msra.mxu0 0.0
    %145 = vmatprep.subr.mxu0 0.0
    %146 = vmatpush1.msra.mxu0 0.0
    %147 = vmatprep.subr.mxu0 0.0
    %148 = vmatpush1.msra.mxu0 0.0
    %149 = vmatprep.subr.mxu0 0.0
    %150 = vmatpush1.msra.mxu0 0.0
    %151 = vmatprep.subr.mxu0 0.0
    %152 = vmatpush1.msra.mxu0 0.0
    %153 = vmatprep.subr.mxu0 0.0
    %154 = vmatpush1.msra.mxu0 0.0
    %155 = vmatprep.subr.mxu0 0.0
    %156 = vmatpush1.msra.mxu0 0.0
    %157 = vmatprep.subr.mxu0 0.0
    %158 = vmatpush1.msra.mxu0 0.0
    %159 = vmatprep.subr.mxu0 0.0
    %160 = vmatpush1.msra.mxu0 0.0
    %161 = vmatprep.subr.mxu0 0.0
    %162 = vmatpush1.msra.mxu0 0.0
    %163 = vmatprep.subr.mxu0 0.0
    %164 = vmatpush1.msra.mxu0 0.0
    %165 = vmatprep.subr.mxu0 0.0
    %166 = vmatpush1.msra.mxu0 0.0
    %167 = vmatprep.subr.mxu0 %v65
    %168 = vmatpush1.msra.mxu0 %v64
    %169 = vmatprep.subr.mxu0 %v57
    %170 = vmatpush1.msra.mxu0 %v56
    %171 = vmatprep.subr.mxu0 0.0
    %172 = vmatpush2.msra.mxu0 0.0
    %173 = vmatprep.subr.mxu0 0.0
    %174 = vmatpush2.msra.mxu0 0.0
    %175 = vmatprep.subr.mxu0 0.0
    %176 = vmatpush2.msra.mxu0 0.0
    %177 = vmatprep.subr.mxu0 0.0
    %178 = vmatpush2.msra.mxu0 0.0
    %179 = vmatprep.subr.mxu0 0.0
    %180 = vmatpush2.msra.mxu0 0.0
    %181 = vmatprep.subr.mxu0 0.0
    %182 = vmatpush2.msra.mxu0 0.0
    %183 = vmatprep.subr.mxu0 0.0
    %184 = vmatpush2.msra.mxu0 0.0
    %185 = vmatprep.subr.mxu0 0.0
    %186 = vmatpush2.msra.mxu0 0.0
    %187 = vmatprep.subr.mxu0 0.0
    %188 = vmatpush2.msra.mxu0 0.0
    %189 = vmatprep.subr.mxu0 0.0
    %190 = vmatpush2.msra.mxu0 0.0
    %191 = vmatprep.subr.mxu0 0.0
    %192 = vmatpush2.msra.mxu0 0.0
    %193 = vmatprep.subr.mxu0 0.0
    %194 = vmatpush2.msra.mxu0 0.0
    %195 = vmatprep.subr.mxu0 0.0
    %196 = vmatpush2.msra.mxu0 0.0
    %197 = vmatprep.subr.mxu0 0.0
    %198 = vmatpush2.msra.mxu0 0.0
    %199 = vmatprep.subr.mxu0 0.0
    %200 = vmatpush2.msra.mxu0 0.0
    %201 = vmatprep.subr.mxu0 0.0
    %202 = vmatpush2.msra.mxu0 0.0
    %203 = vmatprep.mubr.f32.mxu0 0.0
    %204 = vmatmul.mubr.f32.gmra.mxu0 %v116
    %v205 = vpop.f32.mrf.mxu0
    %v206 = vadd.f32 %v77, %v205
    %v207 = vpop.f32.mrf.mxu0
    %v208 = vadd.f32 %v81, %v207
    %209 = vmatprep.mubr.f32.mxu0 0.0
    %210 = vmatmul.mubr.f32.gmra.mxu0 %v119
    %v211 = vpop.f32.mrf.mxu0
    %v212 = vadd.f32 %v77, %v211
    %v213 = vpop.f32.mrf.mxu0
    %v214 = vadd.f32 %v81, %v213
    %215 = vmatprep.mubr.f32.mxu0 0.0
    %216 = vmatmul.mubr.f32.gmra.mxu0 %v122
    %v217 = vpop.f32.mrf.mxu0
    %v218 = vadd.f32 %v77, %v217
    %v219 = vpop.f32.mrf.mxu0
    %v220 = vadd.f32 %v81, %v219
    %221 = vmatprep.mubr.f32.mxu0 0.0
    %222 = vmatmul.mubr.f32.gmra.mxu0 %v125
    %v223 = vpop.f32.mrf.mxu0
    %v224 = vadd.f32 %v77, %v223
    %v225 = vpop.f32.mrf.mxu0
    %v226 = vadd.f32 %v81, %v225
    %227 = vmatprep.mubr.f32.mxu0 0.0
    %228 = vmatmul.mubr.f32.gmra.mxu0 %v128
    %v229 = vpop.f32.mrf.mxu0
    %v230 = vadd.f32 %v77, %v229
    %v231 = vpop.f32.mrf.mxu0
    %v232 = vadd.f32 %v81, %v231
    %233 = vmatprep.mubr.f32.mxu0 0.0
    %234 = vmatmul.mubr.f32.gmra.mxu0 %v131
    %v235 = vpop.f32.mrf.mxu0
    %v236 = vadd.f32 %v77, %v235
    %v237 = vpop.f32.mrf.mxu0
    %v238 = vadd.f32 %v81, %v237
    %239 = vmatprep.mubr.f32.mxu0 0.0
    %240 = vmatmul.mubr.f32.gmra.mxu0 %v134
    %v241 = vpop.f32.mrf.mxu0
    %v242 = vadd.f32 %v77, %v241
    %v243 = vpop.f32.mrf.mxu0
    %v244 = vadd.f32 %v81, %v243
    %245 = vmatprep.mubr.f32.mxu0 0.0
    %246 = vmatmul.mubr.f32.gmra.mxu0 %v137
    %v247 = vpop.f32.mrf.mxu0
    %v248 = vadd.f32 %v77, %v247
    %v249 = vpop.f32.mrf.mxu0
    %v250 = vadd.f32 %v81, %v249
    %251 = vdwg.mxu0
    %252 = vmatprep.subr.mxu0 0.0
    %253 = vmatpush1.msra.mxu0 0.0
    %254 = vmatprep.subr.mxu0 0.0
    %255 = vmatpush1.msra.mxu0 0.0
    %256 = vmatprep.subr.mxu0 0.0
    %257 = vmatpush1.msra.mxu0 0.0
    %258 = vmatprep.subr.mxu0 0.0
    %259 = vmatpush1.msra.mxu0 0.0
    %260 = vmatprep.subr.mxu0 0.0
    %261 = vmatpush1.msra.mxu0 0.0
    %262 = vmatprep.subr.mxu0 0.0
    %263 = vmatpush1.msra.mxu0 0.0
    %264 = vmatprep.subr.mxu0 0.0
    %265 = vmatpush1.msra.mxu0 0.0
    %266 = vmatprep.subr.mxu0 0.0
    %267 = vmatpush1.msra.mxu0 0.0
    %268 = vmatprep.subr.mxu0 0.0
    %269 = vmatpush1.msra.mxu0 0.0
    %270 = vmatprep.subr.mxu0 0.0
    %271 = vmatpush1.msra.mxu0 0.0
    %272 = vmatprep.subr.mxu0 0.0
    %273 = vmatpush1.msra.mxu0 0.0
    %274 = vmatprep.subr.mxu0 0.0
    %275 = vmatpush1.msra.mxu0 0.0
    %276 = vmatprep.subr.mxu0 0.0
    %277 = vmatpush1.msra.mxu0 0.0
    %278 = vmatprep.subr.mxu0 0.0
    %279 = vmatpush1.msra.mxu0 0.0
    %280 = vmatprep.subr.mxu0 %v67
    %281 = vmatpush1.msra.mxu0 %v66
    %282 = vmatprep.subr.mxu0 %v59
    %283 = vmatpush1.msra.mxu0 %v58
    %284 = vmatprep.subr.mxu0 0.0
    %285 = vmatpush2.msra.mxu0 0.0
    %286 = vmatprep.subr.mxu0 0.0
    %287 = vmatpush2.msra.mxu0 0.0
    %288 = vmatprep.subr.mxu0 0.0
    %289 = vmatpush2.msra.mxu0 0.0
    %290 = vmatprep.subr.mxu0 0.0
    %291 = vmatpush2.msra.mxu0 0.0
    %292 = vmatprep.subr.mxu0 0.0
    %293 = vmatpush2.msra.mxu0 0.0
    %294 = vmatprep.subr.mxu0 0.0
    %295 = vmatpush2.msra.mxu0 0.0
    %296 = vmatprep.subr.mxu0 0.0
    %297 = vmatpush2.msra.mxu0 0.0
    %298 = vmatprep.subr.mxu0 0.0
    %299 = vmatpush2.msra.mxu0 0.0
    %300 = vmatprep.subr.mxu0 0.0
    %301 = vmatpush2.msra.mxu0 0.0
    %302 = vmatprep.subr.mxu0 0.0
    %303 = vmatpush2.msra.mxu0 0.0
    %304 = vmatprep.subr.mxu0 0.0
    %305 = vmatpush2.msra.mxu0 0.0
    %306 = vmatprep.subr.mxu0 0.0
    %307 = vmatpush2.msra.mxu0 0.0
    %308 = vmatprep.subr.mxu0 0.0
    %309 = vmatpush2.msra.mxu0 0.0
    %310 = vmatprep.subr.mxu0 0.0
    %311 = vmatpush2.msra.mxu0 0.0
    %312 = vmatprep.subr.mxu0 0.0
    %313 = vmatpush2.msra.mxu0 0.0
    %314 = vmatprep.subr.mxu0 0.0
    %315 = vmatpush2.msra.mxu0 0.0
    %316 = vmatprep.mubr.f32.mxu0 0.0
    %317 = vmatmul.mubr.f32.gmra.mxu0 %v116
    %v318 = vpop.f32.mrf.mxu0
    %v319 = vadd.f32 %v85, %v318
    %v320 = vpop.f32.mrf.mxu0
    %v321 = vadd.f32 %v89, %v320
    %322 = vmatprep.mubr.f32.mxu0 0.0
    %323 = vmatmul.mubr.f32.gmra.mxu0 %v119
    %v324 = vpop.f32.mrf.mxu0
    %v325 = vadd.f32 %v85, %v324
    %v326 = vpop.f32.mrf.mxu0
    %v327 = vadd.f32 %v89, %v326
    %328 = vmatprep.mubr.f32.mxu0 0.0
    %329 = vmatmul.mubr.f32.gmra.mxu0 %v122
    %v330 = vpop.f32.mrf.mxu0
    %v331 = vadd.f32 %v85, %v330
    %v332 = vpop.f32.mrf.mxu0
    %v333 = vadd.f32 %v89, %v332
    %334 = vmatprep.mubr.f32.mxu0 0.0
    %335 = vmatmul.mubr.f32.gmra.mxu0 %v125
    %v336 = vpop.f32.mrf.mxu0
    %v337 = vadd.f32 %v85, %v336
    %v338 = vpop.f32.mrf.mxu0
    %v339 = vadd.f32 %v89, %v338
    %340 = vmatprep.mubr.f32.mxu0 0.0
    %341 = vmatmul.mubr.f32.gmra.mxu0 %v128
    %v342 = vpop.f32.mrf.mxu0
    %v343 = vadd.f32 %v85, %v342
    %v344 = vpop.f32.mrf.mxu0
    %v345 = vadd.f32 %v89, %v344
    %346 = vmatprep.mubr.f32.mxu0 0.0
    %347 = vmatmul.mubr.f32.gmra.mxu0 %v131
    %v348 = vpop.f32.mrf.mxu0
    %v349 = vadd.f32 %v85, %v348
    %v350 = vpop.f32.mrf.mxu0
    %v351 = vadd.f32 %v89, %v350
    %352 = vmatprep.mubr.f32.mxu0 0.0
    %353 = vmatmul.mubr.f32.gmra.mxu0 %v134
    %v354 = vpop.f32.mrf.mxu0
    %v355 = vadd.f32 %v85, %v354
    %v356 = vpop.f32.mrf.mxu0
    %v357 = vadd.f32 %v89, %v356
    %358 = vmatprep.mubr.f32.mxu0 0.0
    %359 = vmatmul.mubr.f32.gmra.mxu0 %v137
    %v360 = vpop.f32.mrf.mxu0
    %v361 = vadd.f32 %v85, %v360
    %v362 = vpop.f32.mrf.mxu0
    %v363 = vadd.f32 %v89, %v362
    %364 = vdwg.mxu0
    %365 = vmatprep.subr.mxu0 0.0
    %366 = vmatpush1.msra.mxu0 0.0
    %367 = vmatprep.subr.mxu0 0.0
    %368 = vmatpush1.msra.mxu0 0.0
    %369 = vmatprep.subr.mxu0 0.0
    %370 = vmatpush1.msra.mxu0 0.0
    %371 = vmatprep.subr.mxu0 0.0
    %372 = vmatpush1.msra.mxu0 0.0
    %373 = vmatprep.subr.mxu0 0.0
    %374 = vmatpush1.msra.mxu0 0.0
    %375 = vmatprep.subr.mxu0 0.0
    %376 = vmatpush1.msra.mxu0 0.0
    %377 = vmatprep.subr.mxu0 0.0
    %378 = vmatpush1.msra.mxu0 0.0
    %379 = vmatprep.subr.mxu0 0.0
    %380 = vmatpush1.msra.mxu0 0.0
    %381 = vmatprep.subr.mxu0 0.0
    %382 = vmatpush1.msra.mxu0 0.0
    %383 = vmatprep.subr.mxu0 0.0
    %384 = vmatpush1.msra.mxu0 0.0
    %385 = vmatprep.subr.mxu0 0.0
    %386 = vmatpush1.msra.mxu0 0.0
    %387 = vmatprep.subr.mxu0 0.0
    %388 = vmatpush1.msra.mxu0 0.0
    %389 = vmatprep.subr.mxu0 0.0
    %390 = vmatpush1.msra.mxu0 0.0
    %391 = vmatprep.subr.mxu0 0.0
    %392 = vmatpush1.msra.mxu0 0.0
    %393 = vmatprep.subr.mxu0 %v69
    %394 = vmatpush1.msra.mxu0 %v68
    %395 = vmatprep.subr.mxu0 %v61
    %396 = vmatpush1.msra.mxu0 %v60
    %397 = vmatprep.subr.mxu0 0.0
    %398 = vmatpush2.msra.mxu0 0.0
    %399 = vmatprep.subr.mxu0 0.0
    %400 = vmatpush2.msra.mxu0 0.0
    %401 = vmatprep.subr.mxu0 0.0
    %402 = vmatpush2.msra.mxu0 0.0
    %403 = vmatprep.subr.mxu0 0.0
    %404 = vmatpush2.msra.mxu0 0.0
    %405 = vmatprep.subr.mxu0 0.0
    %406 = vmatpush2.msra.mxu0 0.0
    %407 = vmatprep.subr.mxu0 0.0
    %408 = vmatpush2.msra.mxu0 0.0
    %409 = vmatprep.subr.mxu0 0.0
    %410 = vmatpush2.msra.mxu0 0.0
    %411 = vmatprep.subr.mxu0 0.0
    %412 = vmatpush2.msra.mxu0 0.0
    %413 = vmatprep.subr.mxu0 0.0
    %414 = vmatpush2.msra.mxu0 0.0
    %415 = vmatprep.subr.mxu0 0.0
    %416 = vmatpush2.msra.mxu0 0.0
    %417 = vmatprep.subr.mxu0 0.0
    %418 = vmatpush2.msra.mxu0 0.0
    %419 = vmatprep.subr.mxu0 0.0
    %420 = vmatpush2.msra.mxu0 0.0
    %421 = vmatprep.subr.mxu0 0.0
    %422 = vmatpush2.msra.mxu0 0.0
    %423 = vmatprep.subr.mxu0 0.0
    %424 = vmatpush2.msra.mxu0 0.0
    %425 = vmatprep.subr.mxu0 0.0
    %426 = vmatpush2.msra.mxu0 0.0
    %427 = vmatprep.subr.mxu0 0.0
    %428 = vmatpush2.msra.mxu0 0.0
    %429 = vmatprep.mubr.f32.mxu0 0.0
    %430 = vmatmul.mubr.f32.gmra.mxu0 %v116
    %v431 = vpop.f32.mrf.mxu0
    %v432 = vadd.f32 %v93, %v431
    %v433 = vpop.f32.mrf.mxu0
    %v434 = vadd.f32 %v97, %v433
    %435 = vmatprep.mubr.f32.mxu0 0.0
    %436 = vmatmul.mubr.f32.gmra.mxu0 %v119
    %v437 = vpop.f32.mrf.mxu0
    %v438 = vadd.f32 %v93, %v437
    %v439 = vpop.f32.mrf.mxu0
    %v440 = vadd.f32 %v97, %v439
    %441 = vmatprep.mubr.f32.mxu0 0.0
    %442 = vmatmul.mubr.f32.gmra.mxu0 %v122
    %v443 = vpop.f32.mrf.mxu0
    %v444 = vadd.f32 %v93, %v443
    %v445 = vpop.f32.mrf.mxu0
    %v446 = vadd.f32 %v97, %v445
    %447 = vmatprep.mubr.f32.mxu0 0.0
    %448 = vmatmul.mubr.f32.gmra.mxu0 %v125
    %v449 = vpop.f32.mrf.mxu0
    %v450 = vadd.f32 %v93, %v449
    %v451 = vpop.f32.mrf.mxu0
    %v452 = vadd.f32 %v97, %v451
    %453 = vmatprep.mubr.f32.mxu0 0.0
    %454 = vmatmul.mubr.f32.gmra.mxu0 %v128
    %v455 = vpop.f32.mrf.mxu0
    %v456 = vadd.f32 %v93, %v455
    %v457 = vpop.f32.mrf.mxu0
    %v458 = vadd.f32 %v97, %v457
    %459 = vmatprep.mubr.f32.mxu0 0.0
    %460 = vmatmul.mubr.f32.gmra.mxu0 %v131
    %v461 = vpop.f32.mrf.mxu0
    %v462 = vadd.f32 %v93, %v461
    %v463 = vpop.f32.mrf.mxu0
    %v464 = vadd.f32 %v97, %v463
    %465 = vmatprep.mubr.f32.mxu0 0.0
    %466 = vmatmul.mubr.f32.gmra.mxu0 %v134
    %v467 = vpop.f32.mrf.mxu0
    %v468 = vadd.f32 %v93, %v467
    %v469 = vpop.f32.mrf.mxu0
    %v470 = vadd.f32 %v97, %v469
    %471 = vmatprep.mubr.f32.mxu0 0.0
    %472 = vmatmul.mubr.f32.gmra.mxu0 %v137
    %v473 = vpop.f32.mrf.mxu0
    %v474 = vadd.f32 %v93, %v473
    %v475 = vpop.f32.mrf.mxu0
    %v476 = vadd.f32 %v97, %v475
    %477 = vdwg.mxu0
    %478 = vmatprep.subr.mxu0 0.0
    %479 = vmatpush1.msra.mxu0 0.0
    %480 = vmatprep.subr.mxu0 0.0
    %481 = vmatpush1.msra.mxu0 0.0
    %482 = vmatprep.subr.mxu0 0.0
    %483 = vmatpush1.msra.mxu0 0.0
    %484 = vmatprep.subr.mxu0 0.0
    %485 = vmatpush1.msra.mxu0 0.0
    %486 = vmatprep.subr.mxu0 0.0
    %487 = vmatpush1.msra.mxu0 0.0
    %488 = vmatprep.subr.mxu0 0.0
    %489 = vmatpush1.msra.mxu0 0.0
    %490 = vmatprep.subr.mxu0 0.0
    %491 = vmatpush1.msra.mxu0 0.0
    %492 = vmatprep.subr.mxu0 0.0
    %493 = vmatpush1.msra.mxu0 0.0
    %494 = vmatprep.subr.mxu0 0.0
    %495 = vmatpush1.msra.mxu0 0.0
    %496 = vmatprep.subr.mxu0 0.0
    %497 = vmatpush1.msra.mxu0 0.0
    %498 = vmatprep.subr.mxu0 0.0
    %499 = vmatpush1.msra.mxu0 0.0
    %500 = vmatprep.subr.mxu0 0.0
    %501 = vmatpush1.msra.mxu0 0.0
    %502 = vmatprep.subr.mxu0 0.0
    %503 = vmatpush1.msra.mxu0 0.0
    %504 = vmatprep.subr.mxu0 0.0
    %505 = vmatpush1.msra.mxu0 0.0
    %506 = vmatprep.subr.mxu0 %v71
    %507 = vmatpush1.msra.mxu0 %v70
    %508 = vmatprep.subr.mxu0 %v63
    %509 = vmatpush1.msra.mxu0 %v62
    %510 = vmatprep.subr.mxu0 0.0
    %511 = vmatpush2.msra.mxu0 0.0
    %512 = vmatprep.subr.mxu0 0.0
    %513 = vmatpush2.msra.mxu0 0.0
    %514 = vmatprep.subr.mxu0 0.0
    %515 = vmatpush2.msra.mxu0 0.0
    %516 = vmatprep.subr.mxu0 0.0
    %517 = vmatpush2.msra.mxu0 0.0
    %518 = vmatprep.subr.mxu0 0.0
    %519 = vmatpush2.msra.mxu0 0.0
    %520 = vmatprep.subr.mxu0 0.0
    %521 = vmatpush2.msra.mxu0 0.0
    %522 = vmatprep.subr.mxu0 0.0
    %523 = vmatpush2.msra.mxu0 0.0
    %524 = vmatprep.subr.mxu0 0.0
    %525 = vmatpush2.msra.mxu0 0.0
    %526 = vmatprep.subr.mxu0 0.0
    %527 = vmatpush2.msra.mxu0 0.0
    %528 = vmatprep.subr.mxu0 0.0
    %529 = vmatpush2.msra.mxu0 0.0
    %530 = vmatprep.subr.mxu0 0.0
    %531 = vmatpush2.msra.mxu0 0.0
    %532 = vmatprep.subr.mxu0 0.0
    %533 = vmatpush2.msra.mxu0 0.0
    %534 = vmatprep.subr.mxu0 0.0
    %535 = vmatpush2.msra.mxu0 0.0
    %536 = vmatprep.subr.mxu0 0.0
    %537 = vmatpush2.msra.mxu0 0.0
    %538 = vmatprep.subr.mxu0 0.0
    %539 = vmatpush2.msra.mxu0 0.0
    %540 = vmatprep.subr.mxu0 0.0
    %541 = vmatpush2.msra.mxu0 0.0
    %542 = vmatprep.mubr.f32.mxu0 0.0
    %543 = vmatmul.mubr.f32.gmra.mxu0 %v116
    %v544 = vpop.f32.mrf.mxu0
    %v545 = vadd.f32 %v101, %v544
    %v546 = vpop.f32.mrf.mxu0
    %v547 = vadd.f32 %v105, %v546
    %548 = vmatprep.mubr.f32.mxu0 0.0
    %549 = vmatmul.mubr.f32.gmra.mxu0 %v119
    %v550 = vpop.f32.mrf.mxu0
    %v551 = vadd.f32 %v101, %v550
    %v552 = vpop.f32.mrf.mxu0
    %v553 = vadd.f32 %v105, %v552
    %554 = vmatprep.mubr.f32.mxu0 0.0
    %555 = vmatmul.mubr.f32.gmra.mxu0 %v122
    %v556 = vpop.f32.mrf.mxu0
    %v557 = vadd.f32 %v101, %v556
    %v558 = vpop.f32.mrf.mxu0
    %v559 = vadd.f32 %v105, %v558
    %560 = vmatprep.mubr.f32.mxu0 0.0
    %561 = vmatmul.mubr.f32.gmra.mxu0 %v125
    %v562 = vpop.f32.mrf.mxu0
    %v563 = vadd.f32 %v101, %v562
    %v564 = vpop.f32.mrf.mxu0
    %v565 = vadd.f32 %v105, %v564
    %566 = vmatprep.mubr.f32.mxu0 0.0
    %567 = vmatmul.mubr.f32.gmra.mxu0 %v128
    %v568 = vpop.f32.mrf.mxu0
    %v569 = vadd.f32 %v101, %v568
    %v570 = vpop.f32.mrf.mxu0
    %v571 = vadd.f32 %v105, %v570
    %572 = vmatprep.mubr.f32.mxu0 0.0
    %573 = vmatmul.mubr.f32.gmra.mxu0 %v131
    %v574 = vpop.f32.mrf.mxu0
    %v575 = vadd.f32 %v101, %v574
    %v576 = vpop.f32.mrf.mxu0
    %v577 = vadd.f32 %v105, %v576
    %578 = vmatprep.mubr.f32.mxu0 0.0
    %579 = vmatmul.mubr.f32.gmra.mxu0 %v134
    %v580 = vpop.f32.mrf.mxu0
    %v581 = vadd.f32 %v101, %v580
    %v582 = vpop.f32.mrf.mxu0
    %v583 = vadd.f32 %v105, %v582
    %584 = vmatprep.mubr.f32.mxu0 0.0
    %585 = vmatmul.mubr.f32.gmra.mxu0 %v137
    %v586 = vpop.f32.mrf.mxu0
    %v587 = vadd.f32 %v101, %v586
    %v588 = vpop.f32.mrf.mxu0
    %v589 = vadd.f32 %v105, %v588
    %590 = vdwg.mxu0
    %591 = vst [vmem:[#allocation2] sm:$0xff] %v206
    %592 = vst [vmem:[#allocation2 + $0x8] sm:$0xff] %v208
    %593 = vst [vmem:[#allocation2 + $0x10] sm:$0xff] %v319
    %594 = vst [vmem:[#allocation2 + $0x18] sm:$0xff] %v321
    %595 = vst [vmem:[#allocation2 + $0x20] sm:$0xff] %v432
    %596 = vst [vmem:[#allocation2 + $0x28] sm:$0xff] %v434
    %597 = vst [vmem:[#allocation2 + $0x30] sm:$0xff] %v545
    %598 = vst [vmem:[#allocation2 + $0x38] sm:$0xff] %v547
    %599 = vst [vmem:[#allocation2 + $0x40] sm:$0xff] %v212
    %600 = vst [vmem:[#allocation2 + $0x48] sm:$0xff] %v214
    %601 = vst [vmem:[#allocation2 + $0x50] sm:$0xff] %v325
    %602 = vst [vmem:[#allocation2 + $0x58] sm:$0xff] %v327
    %603 = vst [vmem:[#allocation2 + $0x60] sm:$0xff] %v438
    %604 = vst [vmem:[#allocation2 + $0x68] sm:$0xff] %v440
    %605 = vst [vmem:[#allocation2 + $0x70] sm:$0xff] %v551
    %606 = vst [vmem:[#allocation2 + $0x78] sm:$0xff] %v553
    %607 = vst [vmem:[#allocation2 + $0x80] sm:$0xff] %v218
    %608 = vst [vmem:[#allocation2 + $0x88] sm:$0xff] %v220
    %609 = vst [vmem:[#allocation2 + $0x90] sm:$0xff] %v331
    %610 = vst [vmem:[#allocation2 + $0x98] sm:$0xff] %v333
    %611 = vst [vmem:[#allocation2 + $0xa0] sm:$0xff] %v444
    %612 = vst [vmem:[#allocation2 + $0xa8] sm:$0xff] %v446
    %613 = vst [vmem:[#allocation2 + $0xb0] sm:$0xff] %v557
    %614 = vst [vmem:[#allocation2 + $0xb8] sm:$0xff] %v559
    %615 = vst [vmem:[#allocation2 + $0xc0] sm:$0xff] %v224
    %616 = vst [vmem:[#allocation2 + $0xc8] sm:$0xff] %v226
    %617 = vst [vmem:[#allocation2 + $0xd0] sm:$0xff] %v337
    %618 = vst [vmem:[#allocation2 + $0xd8] sm:$0xff] %v339
    %619 = vst [vmem:[#allocation2 + $0xe0] sm:$0xff] %v450
    %620 = vst [vmem:[#allocation2 + $0xe8] sm:$0xff] %v452
    %621 = vst [vmem:[#allocation2 + $0xf0] sm:$0xff] %v563
    %622 = vst [vmem:[#allocation2 + $0xf8] sm:$0xff] %v565
    %623 = vst [vmem:[#allocation2 + $0x100] sm:$0xff] %v230
    %624 = vst [vmem:[#allocation2 + $0x108] sm:$0xff] %v232
    %625 = vst [vmem:[#allocation2 + $0x110] sm:$0xff] %v343
    %626 = vst [vmem:[#allocation2 + $0x118] sm:$0xff] %v345
    %627 = vst [vmem:[#allocation2 + $0x120] sm:$0xff] %v456
    %628 = vst [vmem:[#allocation2 + $0x128] sm:$0xff] %v458
    %629 = vst [vmem:[#allocation2 + $0x130] sm:$0xff] %v569
    %630 = vst [vmem:[#allocation2 + $0x138] sm:$0xff] %v571
    %631 = vst [vmem:[#allocation2 + $0x140] sm:$0xff] %v236
    %632 = vst [vmem:[#allocation2 + $0x148] sm:$0xff] %v238
    %633 = vst [vmem:[#allocation2 + $0x150] sm:$0xff] %v349
    %634 = vst [vmem:[#allocation2 + $0x158] sm:$0xff] %v351
    %635 = vst [vmem:[#allocation2 + $0x160] sm:$0xff] %v462
    %636 = vst [vmem:[#allocation2 + $0x168] sm:$0xff] %v464
    %637 = vst [vmem:[#allocation2 + $0x170] sm:$0xff] %v575
    %638 = vst [vmem:[#allocation2 + $0x178] sm:$0xff] %v577
    %639 = vst [vmem:[#allocation2 + $0x180] sm:$0xff] %v242
    %640 = vst [vmem:[#allocation2 + $0x188] sm:$0xff] %v244
    %641 = vst [vmem:[#allocation2 + $0x190] sm:$0xff] %v355
    %642 = vst [vmem:[#allocation2 + $0x198] sm:$0xff] %v357
    %643 = vst [vmem:[#allocation2 + $0x1a0] sm:$0xff] %v468
    %644 = vst [vmem:[#allocation2 + $0x1a8] sm:$0xff] %v470
    %645 = vst [vmem:[#allocation2 + $0x1b0] sm:$0xff] %v581
    %646 = vst [vmem:[#allocation2 + $0x1b8] sm:$0xff] %v583
    %647 = vst [vmem:[#allocation2 + $0x1c0] sm:$0xff] %v248
    %648 = vst [vmem:[#allocation2 + $0x1c8] sm:$0xff] %v250
    %649 = vst [vmem:[#allocation2 + $0x1d0] sm:$0xff] %v361
    %650 = vst [vmem:[#allocation2 + $0x1d8] sm:$0xff] %v363
    %651 = vst [vmem:[#allocation2 + $0x1e0] sm:$0xff] %v474
    %652 = vst [vmem:[#allocation2 + $0x1e8] sm:$0xff] %v476
    %653 = vst [vmem:[#allocation2 + $0x1f0] sm:$0xff] %v587
    %654 = vst [vmem:[#allocation2 + $0x1f8] sm:$0xff] %v589
    %v655 = vld [vmem:[#allocation4] sm:$0xff]
    %v656 = vld [vmem:[#allocation4 + $0x8] sm:$0xff]
    %v657 = vld [vmem:[#allocation4 + $0x10] sm:$0xff]
    %v658 = vld [vmem:[#allocation4 + $0x18] sm:$0xff]
    %v659 = vld [vmem:[#allocation4 + $0x20] sm:$0xff]
    %v660 = vld [vmem:[#allocation4 + $0x28] sm:$0xff]
    %v661 = vld [vmem:[#allocation4 + $0x30] sm:$0xff]
    %v662 = vld [vmem:[#allocation4 + $0x38] sm:$0xff]
    %v663 = vld [vmem:[#allocation4 + $0x40] sm:$0xff]
    %v664 = vld [vmem:[#allocation4 + $0x48] sm:$0xff]
    %v665 = vld [vmem:[#allocation4 + $0x50] sm:$0xff]
    %v666 = vld [vmem:[#allocation4 + $0x58] sm:$0xff]
    %v667 = vld [vmem:[#allocation4 + $0x60] sm:$0xff]
    %v668 = vld [vmem:[#allocation4 + $0x68] sm:$0xff]
    %v669 = vld [vmem:[#allocation4 + $0x70] sm:$0xff]
    %v670 = vld [vmem:[#allocation4 + $0x78] sm:$0xff]
    %v671 = vld [vmem:[#allocation4 + $0x80] sm:$0xff]
    %v672 = vld [vmem:[#allocation4 + $0x88] sm:$0xff]
    %v673 = vld [vmem:[#allocation4 + $0x90] sm:$0xff]
    %v674 = vld [vmem:[#allocation4 + $0x98] sm:$0xff]
    %v675 = vld [vmem:[#allocation4 + $0xa0] sm:$0xff]
    %v676 = vld [vmem:[#allocation4 + $0xa8] sm:$0xff]
    %v677 = vld [vmem:[#allocation4 + $0xb0] sm:$0xff]
    %v678 = vld [vmem:[#allocation4 + $0xb8] sm:$0xff]
    %v679 = vld [vmem:[#allocation4 + $0xc0] sm:$0xff]
    %v680 = vld [vmem:[#allocation4 + $0xc8] sm:$0xff]
    %v681 = vld [vmem:[#allocation4 + $0xd0] sm:$0xff]
    %v682 = vld [vmem:[#allocation4 + $0xd8] sm:$0xff]
    %v683 = vld [vmem:[#allocation4 + $0xe0] sm:$0xff]
    %v684 = vld [vmem:[#allocation4 + $0xe8] sm:$0xff]
    %v685 = vld [vmem:[#allocation4 + $0xf0] sm:$0xff]
    %v686 = vld [vmem:[#allocation4 + $0xf8] sm:$0xff]
    %v687 = vld [vmem:[#allocation4 + $0x100] sm:$0xff]
    %v688 = vld [vmem:[#allocation4 + $0x108] sm:$0xff]
    %v689 = vld [vmem:[#allocation4 + $0x110] sm:$0xff]
    %v690 = vld [vmem:[#allocation4 + $0x118] sm:$0xff]
    %v691 = vld [vmem:[#allocation4 + $0x120] sm:$0xff]
    %v692 = vld [vmem:[#allocation4 + $0x128] sm:$0xff]
    %v693 = vld [vmem:[#allocation4 + $0x130] sm:$0xff]
    %v694 = vld [vmem:[#allocation4 + $0x138] sm:$0xff]
    %v695 = vld [vmem:[#allocation4 + $0x140] sm:$0xff]
    %v696 = vld [vmem:[#allocation4 + $0x148] sm:$0xff]
    %v697 = vld [vmem:[#allocation4 + $0x150] sm:$0xff]
    %v698 = vld [vmem:[#allocation4 + $0x158] sm:$0xff]
    %v699 = vld [vmem:[#allocation4 + $0x160] sm:$0xff]
    %v700 = vld [vmem:[#allocation4 + $0x168] sm:$0xff]
    %v701 = vld [vmem:[#allocation4 + $0x170] sm:$0xff]
    %v702 = vld [vmem:[#allocation4 + $0x178] sm:$0xff]
    %v703 = vld [vmem:[#allocation4 + $0x180] sm:$0xff]
    %v704 = vld [vmem:[#allocation4 + $0x188] sm:$0xff]
    %v705 = vld [vmem:[#allocation4 + $0x190] sm:$0xff]
    %v706 = vld [vmem:[#allocation4 + $0x198] sm:$0xff]
    %v707 = vld [vmem:[#allocation4 + $0x1a0] sm:$0xff]
    %v708 = vld [vmem:[#allocation4 + $0x1a8] sm:$0xff]
    %v709 = vld [vmem:[#allocation4 + $0x1b0] sm:$0xff]
    %v710 = vld [vmem:[#allocation4 + $0x1b8] sm:$0xff]
    %v711 = vld [vmem:[#allocation4 + $0x1c0] sm:$0xff]
    %v712 = vld [vmem:[#allocation4 + $0x1c8] sm:$0xff]
    %v713 = vld [vmem:[#allocation4 + $0x1d0] sm:$0xff]
    %v714 = vld [vmem:[#allocation4 + $0x1d8] sm:$0xff]
    %v715 = vld [vmem:[#allocation4 + $0x1e0] sm:$0xff]
    %v716 = vld [vmem:[#allocation4 + $0x1e8] sm:$0xff]
    %v717 = vld [vmem:[#allocation4 + $0x1f0] sm:$0xff]
    %v718 = vld [vmem:[#allocation4 + $0x1f8] sm:$0xff]
    %v719 = vld [vmem:[#allocation4 + $0x200] sm:$0xff]
    %v720 = vld [vmem:[#allocation4 + $0x208] sm:$0xff]
    %v721 = vld [vmem:[#allocation4 + $0x210] sm:$0xff]
    %v722 = vld [vmem:[#allocation4 + $0x218] sm:$0xff]
    %v723 = vld [vmem:[#allocation4 + $0x220] sm:$0xff]
    %v724 = vld [vmem:[#allocation4 + $0x228] sm:$0xff]
    %v725 = vld [vmem:[#allocation4 + $0x230] sm:$0xff]
    %v726 = vld [vmem:[#allocation4 + $0x238] sm:$0xff]
    %v727 = vld [vmem:[#allocation4 + $0x240] sm:$0xff]
    %v728 = vld [vmem:[#allocation4 + $0x248] sm:$0xff]
    %v729 = vld [vmem:[#allocation4 + $0x250] sm:$0xff]
    %v730 = vld [vmem:[#allocation4 + $0x258] sm:$0xff]
    %v731 = vld [vmem:[#allocation4 + $0x260] sm:$0xff]
    %v732 = vld [vmem:[#allocation4 + $0x268] sm:$0xff]
    %v733 = vld [vmem:[#allocation4 + $0x270] sm:$0xff]
    %v734 = vld [vmem:[#allocation4 + $0x278] sm:$0xff]
    %v735 = vld [vmem:[#allocation4 + $0x280] sm:$0xff]
    %v736 = vld [vmem:[#allocation4 + $0x288] sm:$0xff]
    %v737 = vld [vmem:[#allocation4 + $0x290] sm:$0xff]
    %v738 = vld [vmem:[#allocation4 + $0x298] sm:$0xff]
    %v739 = vld [vmem:[#allocation4 + $0x2a0] sm:$0xff]
    %v740 = vld [vmem:[#allocation4 + $0x2a8] sm:$0xff]
    %v741 = vld [vmem:[#allocation4 + $0x2b0] sm:$0xff]
    %v742 = vld [vmem:[#allocation4 + $0x2b8] sm:$0xff]
    %v743 = vld [vmem:[#allocation4 + $0x2c0] sm:$0xff]
    %v744 = vld [vmem:[#allocation4 + $0x2c8] sm:$0xff]
    %v745 = vld [vmem:[#allocation4 + $0x2d0] sm:$0xff]
    %v746 = vld [vmem:[#allocation4 + $0x2d8] sm:$0xff]
    %v747 = vld [vmem:[#allocation4 + $0x2e0] sm:$0xff]
    %v748 = vld [vmem:[#allocation4 + $0x2e8] sm:$0xff]
    %v749 = vld [vmem:[#allocation4 + $0x2f0] sm:$0xff]
    %v750 = vld [vmem:[#allocation4 + $0x2f8] sm:$0xff]
    %v751 = vld [vmem:[#allocation4 + $0x300] sm:$0xff]
    %v752 = vld [vmem:[#allocation4 + $0x308] sm:$0xff]
    %v753 = vld [vmem:[#allocation4 + $0x310] sm:$0xff]
    %v754 = vld [vmem:[#allocation4 + $0x318] sm:$0xff]
    %v755 = vld [vmem:[#allocation4 + $0x320] sm:$0xff]
    %v756 = vld [vmem:[#allocation4 + $0x328] sm:$0xff]
    %v757 = vld [vmem:[#allocation4 + $0x330] sm:$0xff]
    %v758 = vld [vmem:[#allocation4 + $0x338] sm:$0xff]
    %v759 = vld [vmem:[#allocation4 + $0x340] sm:$0xff]
    %v760 = vld [vmem:[#allocation4 + $0x348] sm:$0xff]
    %v761 = vld [vmem:[#allocation4 + $0x350] sm:$0xff]
    %v762 = vld [vmem:[#allocation4 + $0x358] sm:$0xff]
    %v763 = vld [vmem:[#allocation4 + $0x360] sm:$0xff]
    %v764 = vld [vmem:[#allocation4 + $0x368] sm:$0xff]
    %v765 = vld [vmem:[#allocation4 + $0x370] sm:$0xff]
    %v766 = vld [vmem:[#allocation4 + $0x378] sm:$0xff]
    %v767 = vld [vmem:[#allocation4 + $0x380] sm:$0xff]
    %v768 = vld [vmem:[#allocation4 + $0x388] sm:$0xff]
    %v769 = vld [vmem:[#allocation4 + $0x390] sm:$0xff]
    %v770 = vld [vmem:[#allocation4 + $0x398] sm:$0xff]
    %v771 = vld [vmem:[#allocation4 + $0x3a0] sm:$0xff]
    %v772 = vld [vmem:[#allocation4 + $0x3a8] sm:$0xff]
    %v773 = vld [vmem:[#allocation4 + $0x3b0] sm:$0xff]
    %v774 = vld [vmem:[#allocation4 + $0x3b8] sm:$0xff]
    %v775 = vld [vmem:[#allocation4 + $0x3c0] sm:$0xff]
    %v776 = vld [vmem:[#allocation4 + $0x3c8] sm:$0xff]
    %v777 = vld [vmem:[#allocation4 + $0x3d0] sm:$0xff]
    %v778 = vld [vmem:[#allocation4 + $0x3d8] sm:$0xff]
    %v779 = vld [vmem:[#allocation4 + $0x3e0] sm:$0xff]
    %v780 = vld [vmem:[#allocation4 + $0x3e8] sm:$0xff]
    %v781 = vld [vmem:[#allocation4 + $0x3f0] sm:$0xff]
    %v782 = vld [vmem:[#allocation4 + $0x3f8] sm:$0xff]
    %v783 = vld [vmem:[#allocation2] sm:$0xff]
    %v784 = vld [vmem:[#allocation2 + $0x8] sm:$0xff]
    %v785 = vld [vmem:[#allocation2 + $0x10] sm:$0xff]
    %v786 = vld [vmem:[#allocation2 + $0x18] sm:$0xff]
    %v787 = vld [vmem:[#allocation2 + $0x20] sm:$0xff]
    %v788 = vld [vmem:[#allocation2 + $0x28] sm:$0xff]
    %v789 = vld [vmem:[#allocation2 + $0x30] sm:$0xff]
    %v790 = vld [vmem:[#allocation2 + $0x38] sm:$0xff]
    %v791 = vxor.u32 %v783, 2147483648
    %v792 = vxor.u32 %v784, 2147483648
    %v793 = vmul.f32 %v791, 1.442695
    %v794 = vpow.pop %v793
    %v795 = vmul.f32 %v792, 1.442695
    %v796 = vpow.pop %v795
    %v797 = vadd.f32 %v794, 1.0
    %v798 = vadd.f32 %v796, 1.0
    %v799 = vrcp.pop %v797
    %v800 = vmul.f32 1.0, %v799
    %v801 = vrcp.pop %v798
    %v802 = vmul.f32 1.0, %v801
    %v803 = vxor.u32 %v785, 2147483648
    %v804 = vxor.u32 %v786, 2147483648
    %v805 = vmul.f32 %v803, 1.442695
    %v806 = vpow.pop %v805
    %v807 = vmul.f32 %v804, 1.442695
    %v808 = vpow.pop %v807
    %v809 = vadd.f32 %v806, 1.0
    %v810 = vadd.f32 %v808, 1.0
    %v811 = vrcp.pop %v809
    %v812 = vmul.f32 1.0, %v811
    %v813 = vrcp.pop %v810
    %v814 = vmul.f32 1.0, %v813
    %v815 = vtanh.pop %v787
    %v816 = vtanh.pop %v788
    %v817 = vxor.u32 %v789, 2147483648
    %v818 = vxor.u32 %v790, 2147483648
    %v819 = vmul.f32 %v817, 1.442695
    %v820 = vpow.pop %v819
    %v821 = vmul.f32 %v818, 1.442695
    %v822 = vpow.pop %v821
    %v823 = vadd.f32 %v820, 1.0
    %v824 = vadd.f32 %v822, 1.0
    %v825 = vrcp.pop %v823
    %v826 = vmul.f32 1.0, %v825
    %v827 = vrcp.pop %v824
    %v828 = vmul.f32 1.0, %v827
    %v829 = vmul.f32 %v812, 0.0
    %v830 = vmul.f32 %v814, 0.0
    %v831 = vmul.f32 %v800, %v815
    %v832 = vmul.f32 %v802, %v816
    %v833 = vadd.f32 %v829, %v831
    %v834 = vadd.f32 %v830, %v832
    %v835 = vtanh.pop %v833
    %v836 = vtanh.pop %v834
    %v837 = vmul.f32 %v826, %v835
    %v838 = vmul.f32 %v828, %v836
    %s839 = scalar_lea.vmem [#allocation2], 64
    %v840 = vld [vmem:[%s839] sm:$0xff]
    %v841 = vld [vmem:[%s839 + $0x8] sm:$0xff]
    %v842 = vld [vmem:[%s839 + $0x10] sm:$0xff]
    %v843 = vld [vmem:[%s839 + $0x18] sm:$0xff]
    %v844 = vld [vmem:[%s839 + $0x20] sm:$0xff]
    %v845 = vld [vmem:[%s839 + $0x28] sm:$0xff]
    %v846 = vld [vmem:[%s839 + $0x30] sm:$0xff]
    %v847 = vld [vmem:[%s839 + $0x38] sm:$0xff]
    %v848 = vpack.c.bf16 %v837, %v837
    %v849 = vpack.c.bf16 %v838, %v838
    %v978 = vunpack.c.l.b16 %v655
    %v979 = vunpack.c.h.b16 %v655
    %v980 = vunpack.c.l.b16 %v656
    %v981 = vunpack.c.h.b16 %v656
    %v982 = vunpack.c.l.b16 %v657
    %v983 = vunpack.c.h.b16 %v657
    %v984 = vunpack.c.l.b16 %v658
    %v985 = vunpack.c.h.b16 %v658
    %v986 = vunpack.c.l.b16 %v659
    %v987 = vunpack.c.h.b16 %v659
    %v988 = vunpack.c.l.b16 %v660
    %v989 = vunpack.c.h.b16 %v660
    %v990 = vunpack.c.l.b16 %v661
    %v991 = vunpack.c.h.b16 %v661
    %v992 = vunpack.c.l.b16 %v662
    %v993 = vunpack.c.h.b16 %v662
    %v994 = vunpack.c.l.b16 %v663
    %v995 = vunpack.c.h.b16 %v663
    %v996 = vunpack.c.l.b16 %v664
    %v997 = vunpack.c.h.b16 %v664
    %v998 = vunpack.c.l.b16 %v665
    %v999 = vunpack.c.h.b16 %v665
    %v1000 = vunpack.c.l.b16 %v666
    %v1001 = vunpack.c.h.b16 %v666
    %v1002 = vunpack.c.l.b16 %v667
    %v1003 = vunpack.c.h.b16 %v667
    %v1004 = vunpack.c.l.b16 %v668
    %v1005 = vunpack.c.h.b16 %v668
    %v1006 = vunpack.c.l.b16 %v669
    %v1007 = vunpack.c.h.b16 %v669
    %v1008 = vunpack.c.l.b16 %v670
    %v1009 = vunpack.c.h.b16 %v670
    %v1010 = vunpack.c.l.b16 %v671
    %v1011 = vunpack.c.h.b16 %v671
    %v1012 = vunpack.c.l.b16 %v672
    %v1013 = vunpack.c.h.b16 %v672
    %v1014 = vunpack.c.l.b16 %v673
    %v1015 = vunpack.c.h.b16 %v673
    %v1016 = vunpack.c.l.b16 %v674
    %v1017 = vunpack.c.h.b16 %v674
    %v1018 = vunpack.c.l.b16 %v675
    %v1019 = vunpack.c.h.b16 %v675
    %v1020 = vunpack.c.l.b16 %v676
    %v1021 = vunpack.c.h.b16 %v676
    %v1022 = vunpack.c.l.b16 %v677
    %v1023 = vunpack.c.h.b16 %v677
    %v1024 = vunpack.c.l.b16 %v678
    %v1025 = vunpack.c.h.b16 %v678
    %v1026 = vunpack.c.l.b16 %v679
    %v1027 = vunpack.c.h.b16 %v679
    %v1028 = vunpack.c.l.b16 %v680
    %v1029 = vunpack.c.h.b16 %v680
    %v1030 = vunpack.c.l.b16 %v681
    %v1031 = vunpack.c.h.b16 %v681
    %v1032 = vunpack.c.l.b16 %v682
    %v1033 = vunpack.c.h.b16 %v682
    %v1034 = vunpack.c.l.b16 %v683
    %v1035 = vunpack.c.h.b16 %v683
    %v1036 = vunpack.c.l.b16 %v684
    %v1037 = vunpack.c.h.b16 %v684
    %v1038 = vunpack.c.l.b16 %v685
    %v1039 = vunpack.c.h.b16 %v685
    %v1040 = vunpack.c.l.b16 %v686
    %v1041 = vunpack.c.h.b16 %v686
    %v1042 = vunpack.c.l.b16 %v687
    %v1043 = vunpack.c.h.b16 %v687
    %v1044 = vunpack.c.l.b16 %v688
    %v1045 = vunpack.c.h.b16 %v688
    %v1046 = vunpack.c.l.b16 %v689
    %v1047 = vunpack.c.h.b16 %v689
    %v1048 = vunpack.c.l.b16 %v690
    %v1049 = vunpack.c.h.b16 %v690
    %v1050 = vunpack.c.l.b16 %v691
    %v1051 = vunpack.c.h.b16 %v691
    %v1052 = vunpack.c.l.b16 %v692
    %v1053 = vunpack.c.h.b16 %v692
    %v1054 = vunpack.c.l.b16 %v693
    %v1055 = vunpack.c.h.b16 %v693
    %v1056 = vunpack.c.l.b16 %v694
    %v1057 = vunpack.c.h.b16 %v694
    %v1058 = vunpack.c.l.b16 %v695
    %v1059 = vunpack.c.h.b16 %v695
    %v1060 = vunpack.c.l.b16 %v696
    %v1061 = vunpack.c.h.b16 %v696
    %v1062 = vunpack.c.l.b16 %v697
    %v1063 = vunpack.c.h.b16 %v697
    %v1064 = vunpack.c.l.b16 %v698
    %v1065 = vunpack.c.h.b16 %v698
    %v1066 = vunpack.c.l.b16 %v699
    %v1067 = vunpack.c.h.b16 %v699
    %v1068 = vunpack.c.l.b16 %v700
    %v1069 = vunpack.c.h.b16 %v700
    %v1070 = vunpack.c.l.b16 %v701
    %v1071 = vunpack.c.h.b16 %v701
    %v1072 = vunpack.c.l.b16 %v702
    %v1073 = vunpack.c.h.b16 %v702
    %v1074 = vunpack.c.l.b16 %v703
    %v1075 = vunpack.c.h.b16 %v703
    %v1076 = vunpack.c.l.b16 %v704
    %v1077 = vunpack.c.h.b16 %v704
    %v1078 = vunpack.c.l.b16 %v705
    %v1079 = vunpack.c.h.b16 %v705
    %v1080 = vunpack.c.l.b16 %v706
    %v1081 = vunpack.c.h.b16 %v706
    %v1082 = vunpack.c.l.b16 %v707
    %v1083 = vunpack.c.h.b16 %v707
    %v1084 = vunpack.c.l.b16 %v708
    %v1085 = vunpack.c.h.b16 %v708
    %v1086 = vunpack.c.l.b16 %v709
    %v1087 = vunpack.c.h.b16 %v709
    %v1088 = vunpack.c.l.b16 %v710
    %v1089 = vunpack.c.h.b16 %v710
    %v1090 = vunpack.c.l.b16 %v711
    %v1091 = vunpack.c.h.b16 %v711
    %v1092 = vunpack.c.l.b16 %v712
    %v1093 = vunpack.c.h.b16 %v712
    %v1094 = vunpack.c.l.b16 %v713
    %v1095 = vunpack.c.h.b16 %v713
    %v1096 = vunpack.c.l.b16 %v714
    %v1097 = vunpack.c.h.b16 %v714
    %v1098 = vunpack.c.l.b16 %v715
    %v1099 = vunpack.c.h.b16 %v715
    %v1100 = vunpack.c.l.b16 %v716
    %v1101 = vunpack.c.h.b16 %v716
    %v1102 = vunpack.c.l.b16 %v717
    %v1103 = vunpack.c.h.b16 %v717
    %v1104 = vunpack.c.l.b16 %v718
    %v1105 = vunpack.c.h.b16 %v718
    %v1106 = vunpack.c.l.b16 %v719
    %v1107 = vunpack.c.h.b16 %v719
    %v1108 = vunpack.c.l.b16 %v720
    %v1109 = vunpack.c.h.b16 %v720
    %v1110 = vunpack.c.l.b16 %v721
    %v1111 = vunpack.c.h.b16 %v721
    %v1112 = vunpack.c.l.b16 %v722
    %v1113 = vunpack.c.h.b16 %v722
    %v1114 = vunpack.c.l.b16 %v723
    %v1115 = vunpack.c.h.b16 %v723
    %v1116 = vunpack.c.l.b16 %v724
    %v1117 = vunpack.c.h.b16 %v724
    %v1118 = vunpack.c.l.b16 %v725
    %v1119 = vunpack.c.h.b16 %v725
    %v1120 = vunpack.c.l.b16 %v726
    %v1121 = vunpack.c.h.b16 %v726
    %v1122 = vunpack.c.l.b16 %v727
    %v1123 = vunpack.c.h.b16 %v727
    %v1124 = vunpack.c.l.b16 %v728
    %v1125 = vunpack.c.h.b16 %v728
    %v1126 = vunpack.c.l.b16 %v729
    %v1127 = vunpack.c.h.b16 %v729
    %v1128 = vunpack.c.l.b16 %v730
    %v1129 = vunpack.c.h.b16 %v730
    %v1130 = vunpack.c.l.b16 %v731
    %v1131 = vunpack.c.h.b16 %v731
    %v1132 = vunpack.c.l.b16 %v732
    %v1133 = vunpack.c.h.b16 %v732
    %v1134 = vunpack.c.l.b16 %v733
    %v1135 = vunpack.c.h.b16 %v733
    %v1136 = vunpack.c.l.b16 %v734
    %v1137 = vunpack.c.h.b16 %v734
    %v1138 = vunpack.c.l.b16 %v735
    %v1139 = vunpack.c.h.b16 %v735
    %v1140 = vunpack.c.l.b16 %v736
    %v1141 = vunpack.c.h.b16 %v736
    %v1142 = vunpack.c.l.b16 %v737
    %v1143 = vunpack.c.h.b16 %v737
    %v1144 = vunpack.c.l.b16 %v738
    %v1145 = vunpack.c.h.b16 %v738
    %v1146 = vunpack.c.l.b16 %v739
    %v1147 = vunpack.c.h.b16 %v739
    %v1148 = vunpack.c.l.b16 %v740
    %v1149 = vunpack.c.h.b16 %v740
    %v1150 = vunpack.c.l.b16 %v741
    %v1151 = vunpack.c.h.b16 %v741
    %v1152 = vunpack.c.l.b16 %v742
    %v1153 = vunpack.c.h.b16 %v742
    %v1154 = vunpack.c.l.b16 %v743
    %v1155 = vunpack.c.h.b16 %v743
    %v1156 = vunpack.c.l.b16 %v744
    %v1157 = vunpack.c.h.b16 %v744
    %v1158 = vunpack.c.l.b16 %v745
    %v1159 = vunpack.c.h.b16 %v745
    %v1160 = vunpack.c.l.b16 %v746
    %v1161 = vunpack.c.h.b16 %v746
    %v1162 = vunpack.c.l.b16 %v747
    %v1163 = vunpack.c.h.b16 %v747
    %v1164 = vunpack.c.l.b16 %v748
    %v1165 = vunpack.c.h.b16 %v748
    %v1166 = vunpack.c.l.b16 %v749
    %v1167 = vunpack.c.h.b16 %v749
    %v1168 = vunpack.c.l.b16 %v750
    %v1169 = vunpack.c.h.b16 %v750
    %v1170 = vunpack.c.l.b16 %v751
    %v1171 = vunpack.c.h.b16 %v751
    %v1172 = vunpack.c.l.b16 %v752
    %v1173 = vunpack.c.h.b16 %v752
    %v1174 = vunpack.c.l.b16 %v753
    %v1175 = vunpack.c.h.b16 %v753
    %v1176 = vunpack.c.l.b16 %v754
    %v1177 = vunpack.c.h.b16 %v754
    %v1178 = vunpack.c.l.b16 %v755
    %v1179 = vunpack.c.h.b16 %v755
    %v1180 = vunpack.c.l.b16 %v756
    %v1181 = vunpack.c.h.b16 %v756
    %v1182 = vunpack.c.l.b16 %v757
    %v1183 = vunpack.c.h.b16 %v757
    %v1184 = vunpack.c.l.b16 %v758
    %v1185 = vunpack.c.h.b16 %v758
    %v1186 = vunpack.c.l.b16 %v759
    %v1187 = vunpack.c.h.b16 %v759
    %v1188 = vunpack.c.l.b16 %v760
    %v1189 = vunpack.c.h.b16 %v760
    %v1190 = vunpack.c.l.b16 %v761
    %v1191 = vunpack.c.h.b16 %v761
    %v1192 = vunpack.c.l.b16 %v762
    %v1193 = vunpack.c.h.b16 %v762
    %v1194 = vunpack.c.l.b16 %v763
    %v1195 = vunpack.c.h.b16 %v763
    %v1196 = vunpack.c.l.b16 %v764
    %v1197 = vunpack.c.h.b16 %v764
    %v1198 = vunpack.c.l.b16 %v765
    %v1199 = vunpack.c.h.b16 %v765
    %v1200 = vunpack.c.l.b16 %v766
    %v1201 = vunpack.c.h.b16 %v766
    %v1202 = vunpack.c.l.b16 %v767
    %v1203 = vunpack.c.h.b16 %v767
    %v1204 = vunpack.c.l.b16 %v768
    %v1205 = vunpack.c.h.b16 %v768
    %v1206 = vunpack.c.l.b16 %v769
    %v1207 = vunpack.c.h.b16 %v769
    %v1208 = vunpack.c.l.b16 %v770
    %v1209 = vunpack.c.h.b16 %v770
    %v1210 = vunpack.c.l.b16 %v771
    %v1211 = vunpack.c.h.b16 %v771
    %v1212 = vunpack.c.l.b16 %v772
    %v1213 = vunpack.c.h.b16 %v772
    %v1214 = vunpack.c.l.b16 %v773
    %v1215 = vunpack.c.h.b16 %v773
    %v1216 = vunpack.c.l.b16 %v774
    %v1217 = vunpack.c.h.b16 %v774
    %v1218 = vunpack.c.l.b16 %v775
    %v1219 = vunpack.c.h.b16 %v775
    %v1220 = vunpack.c.l.b16 %v776
    %v1221 = vunpack.c.h.b16 %v776
    %v1222 = vunpack.c.l.b16 %v777
    %v1223 = vunpack.c.h.b16 %v777
    %v1224 = vunpack.c.l.b16 %v778
    %v1225 = vunpack.c.h.b16 %v778
    %v1226 = vunpack.c.l.b16 %v779
    %v1227 = vunpack.c.h.b16 %v779
    %v1228 = vunpack.c.l.b16 %v780
    %v1229 = vunpack.c.h.b16 %v780
    %v1230 = vunpack.c.l.b16 %v781
    %v1231 = vunpack.c.h.b16 %v781
    %v1232 = vunpack.c.l.b16 %v782
    %v1233 = vunpack.c.h.b16 %v782
    %v1234 = vpack.c.b16 %v986, %v978
    %v1235 = vpack.c.b16 %v987, %v979
    %v1236 = vpack.c.b16 %v988, %v980
    %v1237 = vpack.c.b16 %v989, %v981
    %v1238 = vpack.c.b16 %v990, %v982
    %v1239 = vpack.c.b16 %v991, %v983
    %v1240 = vpack.c.b16 %v992, %v984
    %v1241 = vpack.c.b16 %v993, %v985
    %v1242 = vpack.c.b16 %v1002, %v994
    %v1243 = vpack.c.b16 %v1003, %v995
    %v1244 = vpack.c.b16 %v1004, %v996
    %v1245 = vpack.c.b16 %v1005, %v997
    %v1246 = vpack.c.b16 %v1006, %v998
    %v1247 = vpack.c.b16 %v1007, %v999
    %v1248 = vpack.c.b16 %v1008, %v1000
    %v1249 = vpack.c.b16 %v1009, %v1001
    %v1250 = vpack.c.b16 %v1018, %v1010
    %v1251 = vpack.c.b16 %v1019, %v1011
    %v1252 = vpack.c.b16 %v1020, %v1012
    %v1253 = vpack.c.b16 %v1021, %v1013
    %v1254 = vpack.c.b16 %v1022, %v1014
    %v1255 = vpack.c.b16 %v1023, %v1015
    %v1256 = vpack.c.b16 %v1024, %v1016
    %v1257 = vpack.c.b16 %v1025, %v1017
    %v1258 = vpack.c.b16 %v1034, %v1026
    %v1259 = vpack.c.b16 %v1035, %v1027
    %v1260 = vpack.c.b16 %v1036, %v1028
    %v1261 = vpack.c.b16 %v1037, %v1029
    %v1262 = vpack.c.b16 %v1038, %v1030
    %v1263 = vpack.c.b16 %v1039, %v1031
    %v1264 = vpack.c.b16 %v1040, %v1032
    %v1265 = vpack.c.b16 %v1041, %v1033
    %v1266 = vpack.c.b16 %v1050, %v1042
    %v1267 = vpack.c.b16 %v1051, %v1043
    %v1268 = vpack.c.b16 %v1052, %v1044
    %v1269 = vpack.c.b16 %v1053, %v1045
    %v1270 = vpack.c.b16 %v1054, %v1046
    %v1271 = vpack.c.b16 %v1055, %v1047
    %v1272 = vpack.c.b16 %v1056, %v1048
    %v1273 = vpack.c.b16 %v1057, %v1049
    %v1274 = vpack.c.b16 %v1066, %v1058
    %v1275 = vpack.c.b16 %v1067, %v1059
    %v1276 = vpack.c.b16 %v1068, %v1060
    %v1277 = vpack.c.b16 %v1069, %v1061
    %v1278 = vpack.c.b16 %v1070, %v1062
    %v1279 = vpack.c.b16 %v1071, %v1063
    %v1280 = vpack.c.b16 %v1072, %v1064
    %v1281 = vpack.c.b16 %v1073, %v1065
    %v1282 = vpack.c.b16 %v1082, %v1074
    %v1283 = vpack.c.b16 %v1083, %v1075
    %v1284 = vpack.c.b16 %v1084, %v1076
    %v1285 = vpack.c.b16 %v1085, %v1077
    %v1286 = vpack.c.b16 %v1086, %v1078
    %v1287 = vpack.c.b16 %v1087, %v1079
    %v1288 = vpack.c.b16 %v1088, %v1080
    %v1289 = vpack.c.b16 %v1089, %v1081
    %v1290 = vpack.c.b16 %v1098, %v1090
    %v1291 = vpack.c.b16 %v1099, %v1091
    %v1292 = vpack.c.b16 %v1100, %v1092
    %v1293 = vpack.c.b16 %v1101, %v1093
    %v1294 = vpack.c.b16 %v1102, %v1094
    %v1295 = vpack.c.b16 %v1103, %v1095
    %v1296 = vpack.c.b16 %v1104, %v1096
    %v1297 = vpack.c.b16 %v1105, %v1097
    %v1298 = vpack.c.b16 %v1114, %v1106
    %v1299 = vpack.c.b16 %v1115, %v1107
    %v1300 = vpack.c.b16 %v1116, %v1108
    %v1301 = vpack.c.b16 %v1117, %v1109
    %v1302 = vpack.c.b16 %v1118, %v1110
    %v1303 = vpack.c.b16 %v1119, %v1111
    %v1304 = vpack.c.b16 %v1120, %v1112
    %v1305 = vpack.c.b16 %v1121, %v1113
    %v1306 = vpack.c.b16 %v1130, %v1122
    %v1307 = vpack.c.b16 %v1131, %v1123
    %v1308 = vpack.c.b16 %v1132, %v1124
    %v1309 = vpack.c.b16 %v1133, %v1125
    %v1310 = vpack.c.b16 %v1134, %v1126
    %v1311 = vpack.c.b16 %v1135, %v1127
    %v1312 = vpack.c.b16 %v1136, %v1128
    %v1313 = vpack.c.b16 %v1137, %v1129
    %v1314 = vpack.c.b16 %v1146, %v1138
    %v1315 = vpack.c.b16 %v1147, %v1139
    %v1316 = vpack.c.b16 %v1148, %v1140
    %v1317 = vpack.c.b16 %v1149, %v1141
    %v1318 = vpack.c.b16 %v1150, %v1142
    %v1319 = vpack.c.b16 %v1151, %v1143
    %v1320 = vpack.c.b16 %v1152, %v1144
    %v1321 = vpack.c.b16 %v1153, %v1145
    %v1322 = vpack.c.b16 %v1162, %v1154
    %v1323 = vpack.c.b16 %v1163, %v1155
    %v1324 = vpack.c.b16 %v1164, %v1156
    %v1325 = vpack.c.b16 %v1165, %v1157
    %v1326 = vpack.c.b16 %v1166, %v1158
    %v1327 = vpack.c.b16 %v1167, %v1159
    %v1328 = vpack.c.b16 %v1168, %v1160
    %v1329 = vpack.c.b16 %v1169, %v1161
    %v1330 = vpack.c.b16 %v1178, %v1170
    %v1331 = vpack.c.b16 %v1179, %v1171
    %v1332 = vpack.c.b16 %v1180, %v1172
    %v1333 = vpack.c.b16 %v1181, %v1173
    %v1334 = vpack.c.b16 %v1182, %v1174
    %v1335 = vpack.c.b16 %v1183, %v1175
    %v1336 = vpack.c.b16 %v1184, %v1176
    %v1337 = vpack.c.b16 %v1185, %v1177
    %v1338 = vpack.c.b16 %v1194, %v1186
    %v1339 = vpack.c.b16 %v1195, %v1187
    %v1340 = vpack.c.b16 %v1196, %v1188
    %v1341 = vpack.c.b16 %v1197, %v1189
    %v1342 = vpack.c.b16 %v1198, %v1190
    %v1343 = vpack.c.b16 %v1199, %v1191
    %v1344 = vpack.c.b16 %v1200, %v1192
    %v1345 = vpack.c.b16 %v1201, %v1193
    %v1346 = vpack.c.b16 %v1210, %v1202
    %v1347 = vpack.c.b16 %v1211, %v1203
    %v1348 = vpack.c.b16 %v1212, %v1204
    %v1349 = vpack.c.b16 %v1213, %v1205
    %v1350 = vpack.c.b16 %v1214, %v1206
    %v1351 = vpack.c.b16 %v1215, %v1207
    %v1352 = vpack.c.b16 %v1216, %v1208
    %v1353 = vpack.c.b16 %v1217, %v1209
    %v1354 = vpack.c.b16 %v1226, %v1218
    %v1355 = vpack.c.b16 %v1227, %v1219
    %v1356 = vpack.c.b16 %v1228, %v1220
    %v1357 = vpack.c.b16 %v1229, %v1221
    %v1358 = vpack.c.b16 %v1230, %v1222
    %v1359 = vpack.c.b16 %v1231, %v1223
    %v1360 = vpack.c.b16 %v1232, %v1224
    %v1361 = vpack.c.b16 %v1233, %v1225
    %1490 = vmatprep.subr.bf16.mxu0 %v1291
    %1491 = vmatpush1.bf16.msra.mxu0 %v1290
    %1492 = vmatprep.subr.bf16.mxu0 %v1283
    %1493 = vmatpush1.bf16.msra.mxu0 %v1282
    %1494 = vmatprep.subr.bf16.mxu0 %v1275
    %1495 = vmatpush1.bf16.msra.mxu0 %v1274
    %1496 = vmatprep.subr.bf16.mxu0 %v1267
    %1497 = vmatpush1.bf16.msra.mxu0 %v1266
    %1498 = vmatprep.subr.bf16.mxu0 %v1259
    %1499 = vmatpush1.bf16.msra.mxu0 %v1258
    %1500 = vmatprep.subr.bf16.mxu0 %v1251
    %1501 = vmatpush1.bf16.msra.mxu0 %v1250
    %1502 = vmatprep.subr.bf16.mxu0 %v1243
    %1503 = vmatpush1.bf16.msra.mxu0 %v1242
    %1504 = vmatprep.subr.bf16.mxu0 %v1235
    %1505 = vmatpush1.bf16.msra.mxu0 %v1234
    %1506 = vmatprep.subr.bf16.mxu0 %v1355
    %1507 = vmatpush2.bf16.msra.mxu0 %v1354
    %1508 = vmatprep.subr.bf16.mxu0 %v1347
    %1509 = vmatpush2.bf16.msra.mxu0 %v1346
    %1510 = vmatprep.subr.bf16.mxu0 %v1339
    %1511 = vmatpush2.bf16.msra.mxu0 %v1338
    %1512 = vmatprep.subr.bf16.mxu0 %v1331
    %1513 = vmatpush2.bf16.msra.mxu0 %v1330
    %1514 = vmatprep.subr.bf16.mxu0 %v1323
    %1515 = vmatpush2.bf16.msra.mxu0 %v1322
    %1516 = vmatprep.subr.bf16.mxu0 %v1315
    %1517 = vmatpush2.bf16.msra.mxu0 %v1314
    %1518 = vmatprep.subr.bf16.mxu0 %v1307
    %1519 = vmatpush2.bf16.msra.mxu0 %v1306
    %1520 = vmatprep.subr.bf16.mxu0 %v1299
    %1521 = vmatpush2.bf16.msra.mxu0 %v1298
    %1522 = vmatprep.mubr.bf16.mxu0 %v849
    %1523 = vmatmul.mubr.bf16.gmra.mxu0 %v848
    %v1524 = vpop.f32.mrf.mxu0
    %v1525 = vadd.f32 0.0, %v1524
    %v1526 = vpop.f32.mrf.mxu0
    %v1527 = vadd.f32 0.0, %v1526
    %v1528 = vpop.f32.mrf.mxu0
    %v1529 = vpop.f32.mrf.mxu0
    %1530 = vdwg.mxu0
    %1531 = vmatprep.subr.bf16.mxu0 %v1293
    %1532 = vmatpush1.bf16.msra.mxu0 %v1292
    %1533 = vmatprep.subr.bf16.mxu0 %v1285
    %1534 = vmatpush1.bf16.msra.mxu0 %v1284
    %1535 = vmatprep.subr.bf16.mxu0 %v1277
    %1536 = vmatpush1.bf16.msra.mxu0 %v1276
    %1537 = vmatprep.subr.bf16.mxu0 %v1269
    %1538 = vmatpush1.bf16.msra.mxu0 %v1268
    %1539 = vmatprep.subr.bf16.mxu0 %v1261
    %1540 = vmatpush1.bf16.msra.mxu0 %v1260
    %1541 = vmatprep.subr.bf16.mxu0 %v1253
    %1542 = vmatpush1.bf16.msra.mxu0 %v1252
    %1543 = vmatprep.subr.bf16.mxu0 %v1245
    %1544 = vmatpush1.bf16.msra.mxu0 %v1244
    %1545 = vmatprep.subr.bf16.mxu0 %v1237
    %1546 = vmatpush1.bf16.msra.mxu0 %v1236
    %1547 = vmatprep.subr.bf16.mxu0 %v1357
    %1548 = vmatpush2.bf16.msra.mxu0 %v1356
    %1549 = vmatprep.subr.bf16.mxu0 %v1349
    %1550 = vmatpush2.bf16.msra.mxu0 %v1348
    %1551 = vmatprep.subr.bf16.mxu0 %v1341
    %1552 = vmatpush2.bf16.msra.mxu0 %v1340
    %1553 = vmatprep.subr.bf16.mxu0 %v1333
    %1554 = vmatpush2.bf16.msra.mxu0 %v1332
    %1555 = vmatprep.subr.bf16.mxu0 %v1325
    %1556 = vmatpush2.bf16.msra.mxu0 %v1324
    %1557 = vmatprep.subr.bf16.mxu0 %v1317
    %1558 = vmatpush2.bf16.msra.mxu0 %v1316
    %1559 = vmatprep.subr.bf16.mxu0 %v1309
    %1560 = vmatpush2.bf16.msra.mxu0 %v1308
    %1561 = vmatprep.subr.bf16.mxu0 %v1301
    %1562 = vmatpush2.bf16.msra.mxu0 %v1300
    %1563 = vmatprep.mubr.bf16.mxu0 %v849
    %1564 = vmatmul.mubr.bf16.gmra.mxu0 %v848
    %v1565 = vpop.f32.mrf.mxu0
    %v1566 = vadd.f32 0.0, %v1565
    %v1567 = vpop.f32.mrf.mxu0
    %v1568 = vadd.f32 0.0, %v1567
    %v1569 = vpop.f32.mrf.mxu0
    %v1570 = vpop.f32.mrf.mxu0
    %1571 = vdwg.mxu0
    %1572 = vmatprep.subr.bf16.mxu0 %v1295
    %1573 = vmatpush1.bf16.msra.mxu0 %v1294
    %1574 = vmatprep.subr.bf16.mxu0 %v1287
    %1575 = vmatpush1.bf16.msra.mxu0 %v1286
    %1576 = vmatprep.subr.bf16.mxu0 %v1279
    %1577 = vmatpush1.bf16.msra.mxu0 %v1278
    %1578 = vmatprep.subr.bf16.mxu0 %v1271
    %1579 = vmatpush1.bf16.msra.mxu0 %v1270
    %1580 = vmatprep.subr.bf16.mxu0 %v1263
    %1581 = vmatpush1.bf16.msra.mxu0 %v1262
    %1582 = vmatprep.subr.bf16.mxu0 %v1255
    %1583 = vmatpush1.bf16.msra.mxu0 %v1254
    %1584 = vmatprep.subr.bf16.mxu0 %v1247
    %1585 = vmatpush1.bf16.msra.mxu0 %v1246
    %1586 = vmatprep.subr.bf16.mxu0 %v1239
    %1587 = vmatpush1.bf16.msra.mxu0 %v1238
    %1588 = vmatprep.subr.bf16.mxu0 %v1359
    %1589 = vmatpush2.bf16.msra.mxu0 %v1358
    %1590 = vmatprep.subr.bf16.mxu0 %v1351
    %1591 = vmatpush2.bf16.msra.mxu0 %v1350
    %1592 = vmatprep.subr.bf16.mxu0 %v1343
    %1593 = vmatpush2.bf16.msra.mxu0 %v1342
    %1594 = vmatprep.subr.bf16.mxu0 %v1335
    %1595 = vmatpush2.bf16.msra.mxu0 %v1334
    %1596 = vmatprep.subr.bf16.mxu0 %v1327
    %1597 = vmatpush2.bf16.msra.mxu0 %v1326
    %1598 = vmatprep.subr.bf16.mxu0 %v1319
    %1599 = vmatpush2.bf16.msra.mxu0 %v1318
    %1600 = vmatprep.subr.bf16.mxu0 %v1311
    %1601 = vmatpush2.bf16.msra.mxu0 %v1310
    %1602 = vmatprep.subr.bf16.mxu0 %v1303
    %1603 = vmatpush2.bf16.msra.mxu0 %v1302
    %1604 = vmatprep.mubr.bf16.mxu0 %v849
    %1605 = vmatmul.mubr.bf16.gmra.mxu0 %v848
    %v1606 = vpop.f32.mrf.mxu0
    %v1607 = vadd.f32 0.0, %v1606
    %v1608 = vpop.f32.mrf.mxu0
    %v1609 = vadd.f32 0.0, %v1608
    %v1610 = vpop.f32.mrf.mxu0
    %v1611 = vpop.f32.mrf.mxu0
    %1612 = vdwg.mxu0
    %1613 = vmatprep.subr.bf16.mxu0 %v1297
    %1614 = vmatpush1.bf16.msra.mxu0 %v1296
    %1615 = vmatprep.subr.bf16.mxu0 %v1289
    %1616 = vmatpush1.bf16.msra.mxu0 %v1288
    %1617 = vmatprep.subr.bf16.mxu0 %v1281
    %1618 = vmatpush1.bf16.msra.mxu0 %v1280
    %1619 = vmatprep.subr.bf16.mxu0 %v1273
    %1620 = vmatpush1.bf16.msra.mxu0 %v1272
    %1621 = vmatprep.subr.bf16.mxu0 %v1265
    %1622 = vmatpush1.bf16.msra.mxu0 %v1264
    %1623 = vmatprep.subr.bf16.mxu0 %v1257
    %1624 = vmatpush1.bf16.msra.mxu0 %v1256
    %1625 = vmatprep.subr.bf16.mxu0 %v1249
    %1626 = vmatpush1.bf16.msra.mxu0 %v1248
    %1627 = vmatprep.subr.bf16.mxu0 %v1241
    %1628 = vmatpush1.bf16.msra.mxu0 %v1240
    %1629 = vmatprep.subr.bf16.mxu0 %v1361
    %1630 = vmatpush2.bf16.msra.mxu0 %v1360
    %1631 = vmatprep.subr.bf16.mxu0 %v1353
    %1632 = vmatpush2.bf16.msra.mxu0 %v1352
    %1633 = vmatprep.subr.bf16.mxu0 %v1345
    %1634 = vmatpush2.bf16.msra.mxu0 %v1344
    %1635 = vmatprep.subr.bf16.mxu0 %v1337
    %1636 = vmatpush2.bf16.msra.mxu0 %v1336
    %1637 = vmatprep.subr.bf16.mxu0 %v1329
    %1638 = vmatpush2.bf16.msra.mxu0 %v1328
    %1639 = vmatprep.subr.bf16.mxu0 %v1321
    %1640 = vmatpush2.bf16.msra.mxu0 %v1320
    %1641 = vmatprep.subr.bf16.mxu0 %v1313
    %1642 = vmatpush2.bf16.msra.mxu0 %v1312
    %1643 = vmatprep.subr.bf16.mxu0 %v1305
    %1644 = vmatpush2.bf16.msra.mxu0 %v1304
    %1645 = vmatprep.mubr.bf16.mxu0 %v849
    %1646 = vmatmul.mubr.bf16.gmra.mxu0 %v848
    %v1647 = vpop.f32.mrf.mxu0
    %v1648 = vadd.f32 0.0, %v1647
    %v1649 = vpop.f32.mrf.mxu0
    %v1650 = vadd.f32 0.0, %v1649
    %v1651 = vpop.f32.mrf.mxu0
    %v1652 = vpop.f32.mrf.mxu0
    %1653 = vdwg.mxu0
    %v1654 = vadd.f32 %v840, %v1525
    %v1655 = vadd.f32 %v841, %v1527
    %v1656 = vadd.f32 %v842, %v1566
    %v1657 = vadd.f32 %v843, %v1568
    %v1658 = vadd.f32 %v844, %v1607
    %v1659 = vadd.f32 %v845, %v1609
    %v1660 = vadd.f32 %v846, %v1648
    %v1661 = vadd.f32 %v847, %v1650
    %v1662 = vxor.u32 %v1654, 2147483648
    %v1663 = vxor.u32 %v1655, 2147483648
    %v1664 = vmul.f32 %v1662, 1.442695
    %v1665 = vpow.pop %v1664
    %v1666 = vmul.f32 %v1663, 1.442695
    %v1667 = vpow.pop %v1666
    %v1668 = vadd.f32 %v1665, 1.0
    %v1669 = vadd.f32 %v1667, 1.0
    %v1670 = vrcp.pop %v1668
    %v1671 = vmul.f32 1.0, %v1670
    %v1672 = vrcp.pop %v1669
    %v1673 = vmul.f32 1.0, %v1672
    %v1674 = vxor.u32 %v1656, 2147483648
    %v1675 = vxor.u32 %v1657, 2147483648
    %v1676 = vmul.f32 %v1674, 1.442695
    %v1677 = vpow.pop %v1676
    %v1678 = vmul.f32 %v1675, 1.442695
    %v1679 = vpow.pop %v1678
    %v1680 = vadd.f32 %v1677, 1.0
    %v1681 = vadd.f32 %v1679, 1.0
    %v1682 = vrcp.pop %v1680
    %v1683 = vmul.f32 1.0, %v1682
    %v1684 = vrcp.pop %v1681
    %v1685 = vmul.f32 1.0, %v1684
    %v1686 = vtanh.pop %v1658
    %v1687 = vtanh.pop %v1659
    %v1688 = vxor.u32 %v1660, 2147483648
    %v1689 = vxor.u32 %v1661, 2147483648
    %v1690 = vmul.f32 %v1688, 1.442695
    %v1691 = vpow.pop %v1690
    %v1692 = vmul.f32 %v1689, 1.442695
    %v1693 = vpow.pop %v1692
    %v1694 = vadd.f32 %v1691, 1.0
    %v1695 = vadd.f32 %v1693, 1.0
    %v1696 = vrcp.pop %v1694
    %v1697 = vmul.f32 1.0, %v1696
    %v1698 = vrcp.pop %v1695
    %v1699 = vmul.f32 1.0, %v1698
    %v1700 = vmul.f32 %v1683, %v833
    %v1701 = vmul.f32 %v1685, %v834
    %v1702 = vmul.f32 %v1671, %v1686
    %v1703 = vmul.f32 %v1673, %v1687
    %v1704 = vadd.f32 %v1700, %v1702
    %v1705 = vadd.f32 %v1701, %v1703
    %v1706 = vtanh.pop %v1704
    %v1707 = vtanh.pop %v1705
    %v1708 = vmul.f32 %v1697, %v1706
    %v1709 = vmul.f32 %v1699, %v1707
    %s1710 = scalar_lea.vmem [#allocation2], 128
    %v1711 = vld [vmem:[%s1710] sm:$0xff]
    %v1712 = vld [vmem:[%s1710 + $0x8] sm:$0xff]
    %v1713 = vld [vmem:[%s1710 + $0x10] sm:$0xff]
    %v1714 = vld [vmem:[%s1710 + $0x18] sm:$0xff]
    %v1715 = vld [vmem:[%s1710 + $0x20] sm:$0xff]
    %v1716 = vld [vmem:[%s1710 + $0x28] sm:$0xff]
    %v1717 = vld [vmem:[%s1710 + $0x30] sm:$0xff]
    %v1718 = vld [vmem:[%s1710 + $0x38] sm:$0xff]
    %v1719 = vpack.c.bf16 %v1708, %v1708
    %v1720 = vpack.c.bf16 %v1709, %v1709
    %1721 = vmatprep.subr.bf16.mxu0 %v1291
    %1722 = vmatpush1.bf16.msra.mxu0 %v1290
    %1723 = vmatprep.subr.bf16.mxu0 %v1283
    %1724 = vmatpush1.bf16.msra.mxu0 %v1282
    %1725 = vmatprep.subr.bf16.mxu0 %v1275
    %1726 = vmatpush1.bf16.msra.mxu0 %v1274
    %1727 = vmatprep.subr.bf16.mxu0 %v1267
    %1728 = vmatpush1.bf16.msra.mxu0 %v1266
    %1729 = vmatprep.subr.bf16.mxu0 %v1259
    %1730 = vmatpush1.bf16.msra.mxu0 %v1258
    %1731 = vmatprep.subr.bf16.mxu0 %v1251
    %1732 = vmatpush1.bf16.msra.mxu0 %v1250
    %1733 = vmatprep.subr.bf16.mxu0 %v1243
    %1734 = vmatpush1.bf16.msra.mxu0 %v1242
    %1735 = vmatprep.subr.bf16.mxu0 %v1235
    %1736 = vmatpush1.bf16.msra.mxu0 %v1234
    %1737 = vmatprep.subr.bf16.mxu0 %v1355
    %1738 = vmatpush2.bf16.msra.mxu0 %v1354
    %1739 = vmatprep.subr.bf16.mxu0 %v1347
    %1740 = vmatpush2.bf16.msra.mxu0 %v1346
    %1741 = vmatprep.subr.bf16.mxu0 %v1339
    %1742 = vmatpush2.bf16.msra.mxu0 %v1338
    %1743 = vmatprep.subr.bf16.mxu0 %v1331
    %1744 = vmatpush2.bf16.msra.mxu0 %v1330
    %1745 = vmatprep.subr.bf16.mxu0 %v1323
    %1746 = vmatpush2.bf16.msra.mxu0 %v1322
    %1747 = vmatprep.subr.bf16.mxu0 %v1315
    %1748 = vmatpush2.bf16.msra.mxu0 %v1314
    %1749 = vmatprep.subr.bf16.mxu0 %v1307
    %1750 = vmatpush2.bf16.msra.mxu0 %v1306
    %1751 = vmatprep.subr.bf16.mxu0 %v1299
    %1752 = vmatpush2.bf16.msra.mxu0 %v1298
    %1753 = vmatprep.mubr.bf16.mxu0 %v1720
    %1754 = vmatmul.mubr.bf16.gmra.mxu0 %v1719
    %v1755 = vpop.f32.mrf.mxu0
    %v1756 = vadd.f32 0.0, %v1755
    %v1757 = vpop.f32.mrf.mxu0
    %v1758 = vadd.f32 0.0, %v1757
    %v1759 = vpop.f32.mrf.mxu0
    %v1760 = vpop.f32.mrf.mxu0
    %1761 = vdwg.mxu0
    %1762 = vmatprep.subr.bf16.mxu0 %v1293
    %1763 = vmatpush1.bf16.msra.mxu0 %v1292
    %1764 = vmatprep.subr.bf16.mxu0 %v1285
    %1765 = vmatpush1.bf16.msra.mxu0 %v1284
    %1766 = vmatprep.subr.bf16.mxu0 %v1277
    %1767 = vmatpush1.bf16.msra.mxu0 %v1276
    %1768 = vmatprep.subr.bf16.mxu0 %v1269
    %1769 = vmatpush1.bf16.msra.mxu0 %v1268
    %1770 = vmatprep.subr.bf16.mxu0 %v1261
    %1771 = vmatpush1.bf16.msra.mxu0 %v1260
    %1772 = vmatprep.subr.bf16.mxu0 %v1253
    %1773 = vmatpush1.bf16.msra.mxu0 %v1252
    %1774 = vmatprep.subr.bf16.mxu0 %v1245
    %1775 = vmatpush1.bf16.msra.mxu0 %v1244
    %1776 = vmatprep.subr.bf16.mxu0 %v1237
    %1777 = vmatpush1.bf16.msra.mxu0 %v1236
    %1778 = vmatprep.subr.bf16.mxu0 %v1357
    %1779 = vmatpush2.bf16.msra.mxu0 %v1356
    %1780 = vmatprep.subr.bf16.mxu0 %v1349
    %1781 = vmatpush2.bf16.msra.mxu0 %v1348
    %1782 = vmatprep.subr.bf16.mxu0 %v1341
    %1783 = vmatpush2.bf16.msra.mxu0 %v1340
    %1784 = vmatprep.subr.bf16.mxu0 %v1333
    %1785 = vmatpush2.bf16.msra.mxu0 %v1332
    %1786 = vmatprep.subr.bf16.mxu0 %v1325
    %1787 = vmatpush2.bf16.msra.mxu0 %v1324
    %1788 = vmatprep.subr.bf16.mxu0 %v1317
    %1789 = vmatpush2.bf16.msra.mxu0 %v1316
    %1790 = vmatprep.subr.bf16.mxu0 %v1309
    %1791 = vmatpush2.bf16.msra.mxu0 %v1308
    %1792 = vmatprep.subr.bf16.mxu0 %v1301
    %1793 = vmatpush2.bf16.msra.mxu0 %v1300
    %1794 = vmatprep.mubr.bf16.mxu0 %v1720
    %1795 = vmatmul.mubr.bf16.gmra.mxu0 %v1719
    %v1796 = vpop.f32.mrf.mxu0
    %v1797 = vadd.f32 0.0, %v1796
    %v1798 = vpop.f32.mrf.mxu0
    %v1799 = vadd.f32 0.0, %v1798
    %v1800 = vpop.f32.mrf.mxu0
    %v1801 = vpop.f32.mrf.mxu0
    %1802 = vdwg.mxu0
    %1803 = vmatprep.subr.bf16.mxu0 %v1295
    %1804 = vmatpush1.bf16.msra.mxu0 %v1294
    %1805 = vmatprep.subr.bf16.mxu0 %v1287
    %1806 = vmatpush1.bf16.msra.mxu0 %v1286
    %1807 = vmatprep.subr.bf16.mxu0 %v1279
    %1808 = vmatpush1.bf16.msra.mxu0 %v1278
    %1809 = vmatprep.subr.bf16.mxu0 %v1271
    %1810 = vmatpush1.bf16.msra.mxu0 %v1270
    %1811 = vmatprep.subr.bf16.mxu0 %v1263
    %1812 = vmatpush1.bf16.msra.mxu0 %v1262
    %1813 = vmatprep.subr.bf16.mxu0 %v1255
    %1814 = vmatpush1.bf16.msra.mxu0 %v1254
    %1815 = vmatprep.subr.bf16.mxu0 %v1247
    %1816 = vmatpush1.bf16.msra.mxu0 %v1246
    %1817 = vmatprep.subr.bf16.mxu0 %v1239
    %1818 = vmatpush1.bf16.msra.mxu0 %v1238
    %1819 = vmatprep.subr.bf16.mxu0 %v1359
    %1820 = vmatpush2.bf16.msra.mxu0 %v1358
    %1821 = vmatprep.subr.bf16.mxu0 %v1351
    %1822 = vmatpush2.bf16.msra.mxu0 %v1350
    %1823 = vmatprep.subr.bf16.mxu0 %v1343
    %1824 = vmatpush2.bf16.msra.mxu0 %v1342
    %1825 = vmatprep.subr.bf16.mxu0 %v1335
    %1826 = vmatpush2.bf16.msra.mxu0 %v1334
    %1827 = vmatprep.subr.bf16.mxu0 %v1327
    %1828 = vmatpush2.bf16.msra.mxu0 %v1326
    %1829 = vmatprep.subr.bf16.mxu0 %v1319
    %1830 = vmatpush2.bf16.msra.mxu0 %v1318
    %1831 = vmatprep.subr.bf16.mxu0 %v1311
    %1832 = vmatpush2.bf16.msra.mxu0 %v1310
    %1833 = vmatprep.subr.bf16.mxu0 %v1303
    %1834 = vmatpush2.bf16.msra.mxu0 %v1302
    %1835 = vmatprep.mubr.bf16.mxu0 %v1720
    %1836 = vmatmul.mubr.bf16.gmra.mxu0 %v1719
    %v1837 = vpop.f32.mrf.mxu0
    %v1838 = vadd.f32 0.0, %v1837
    %v1839 = vpop.f32.mrf.mxu0
    %v1840 = vadd.f32 0.0, %v1839
    %v1841 = vpop.f32.mrf.mxu0
    %v1842 = vpop.f32.mrf.mxu0
    %1843 = vdwg.mxu0
    %1844 = vmatprep.subr.bf16.mxu0 %v1297
    %1845 = vmatpush1.bf16.msra.mxu0 %v1296
    %1846 = vmatprep.subr.bf16.mxu0 %v1289
    %1847 = vmatpush1.bf16.msra.mxu0 %v1288
    %1848 = vmatprep.subr.bf16.mxu0 %v1281
    %1849 = vmatpush1.bf16.msra.mxu0 %v1280
    %1850 = vmatprep.subr.bf16.mxu0 %v1273
    %1851 = vmatpush1.bf16.msra.mxu0 %v1272
    %1852 = vmatprep.subr.bf16.mxu0 %v1265
    %1853 = vmatpush1.bf16.msra.mxu0 %v1264
    %1854 = vmatprep.subr.bf16.mxu0 %v1257
    %1855 = vmatpush1.bf16.msra.mxu0 %v1256
    %1856 = vmatprep.subr.bf16.mxu0 %v1249
    %1857 = vmatpush1.bf16.msra.mxu0 %v1248
    %1858 = vmatprep.subr.bf16.mxu0 %v1241
    %1859 = vmatpush1.bf16.msra.mxu0 %v1240
    %1860 = vmatprep.subr.bf16.mxu0 %v1361
    %1861 = vmatpush2.bf16.msra.mxu0 %v1360
    %1862 = vmatprep.subr.bf16.mxu0 %v1353
    %1863 = vmatpush2.bf16.msra.mxu0 %v1352
    %1864 = vmatprep.subr.bf16.mxu0 %v1345
    %1865 = vmatpush2.bf16.msra.mxu0 %v1344
    %1866 = vmatprep.subr.bf16.mxu0 %v1337
    %1867 = vmatpush2.bf16.msra.mxu0 %v1336
    %1868 = vmatprep.subr.bf16.mxu0 %v1329
    %1869 = vmatpush2.bf16.msra.mxu0 %v1328
    %1870 = vmatprep.subr.bf16.mxu0 %v1321
    %1871 = vmatpush2.bf16.msra.mxu0 %v1320
    %1872 = vmatprep.subr.bf16.mxu0 %v1313
    %1873 = vmatpush2.bf16.msra.mxu0 %v1312
    %1874 = vmatprep.subr.bf16.mxu0 %v1305
    %1875 = vmatpush2.bf16.msra.mxu0 %v1304
    %1876 = vmatprep.mubr.bf16.mxu0 %v1720
    %1877 = vmatmul.mubr.bf16.gmra.mxu0 %v1719
    %v1878 = vpop.f32.mrf.mxu0
    %v1879 = vadd.f32 0.0, %v1878
    %v1880 = vpop.f32.mrf.mxu0
    %v1881 = vadd.f32 0.0, %v1880
    %v1882 = vpop.f32.mrf.mxu0
    %v1883 = vpop.f32.mrf.mxu0
    %1884 = vdwg.mxu0
    %v1885 = vadd.f32 %v1711, %v1756
    %v1886 = vadd.f32 %v1712, %v1758
    %v1887 = vadd.f32 %v1713, %v1797
    %v1888 = vadd.f32 %v1714, %v1799
    %v1889 = vadd.f32 %v1715, %v1838
    %v1890 = vadd.f32 %v1716, %v1840
    %v1891 = vadd.f32 %v1717, %v1879
    %v1892 = vadd.f32 %v1718, %v1881
    %v1893 = vxor.u32 %v1885, 2147483648
    %v1894 = vxor.u32 %v1886, 2147483648
    %v1895 = vmul.f32 %v1893, 1.442695
    %v1896 = vpow.pop %v1895
    %v1897 = vmul.f32 %v1894, 1.442695
    %v1898 = vpow.pop %v1897
    %v1899 = vadd.f32 %v1896, 1.0
    %v1900 = vadd.f32 %v1898, 1.0
    %v1901 = vrcp.pop %v1899
    %v1902 = vmul.f32 1.0, %v1901
    %v1903 = vrcp.pop %v1900
    %v1904 = vmul.f32 1.0, %v1903
    %v1905 = vxor.u32 %v1887, 2147483648
    %v1906 = vxor.u32 %v1888, 2147483648
    %v1907 = vmul.f32 %v1905, 1.442695
    %v1908 = vpow.pop %v1907
    %v1909 = vmul.f32 %v1906, 1.442695
    %v1910 = vpow.pop %v1909
    %v1911 = vadd.f32 %v1908, 1.0
    %v1912 = vadd.f32 %v1910, 1.0
    %v1913 = vrcp.pop %v1911
    %v1914 = vmul.f32 1.0, %v1913
    %v1915 = vrcp.pop %v1912
    %v1916 = vmul.f32 1.0, %v1915
    %v1917 = vtanh.pop %v1889
    %v1918 = vtanh.pop %v1890
    %v1919 = vxor.u32 %v1891, 2147483648
    %v1920 = vxor.u32 %v1892, 2147483648
    %v1921 = vmul.f32 %v1919, 1.442695
    %v1922 = vpow.pop %v1921
    %v1923 = vmul.f32 %v1920, 1.442695
    %v1924 = vpow.pop %v1923
    %v1925 = vadd.f32 %v1922, 1.0
    %v1926 = vadd.f32 %v1924, 1.0
    %v1927 = vrcp.pop %v1925
    %v1928 = vmul.f32 1.0, %v1927
    %v1929 = vrcp.pop %v1926
    %v1930 = vmul.f32 1.0, %v1929
    %v1931 = vmul.f32 %v1914, %v1704
    %v1932 = vmul.f32 %v1916, %v1705
    %v1933 = vmul.f32 %v1902, %v1917
    %v1934 = vmul.f32 %v1904, %v1918
    %v1935 = vadd.f32 %v1931, %v1933
    %v1936 = vadd.f32 %v1932, %v1934
    %v1937 = vtanh.pop %v1935
    %v1938 = vtanh.pop %v1936
    %v1939 = vmul.f32 %v1928, %v1937
    %v1940 = vmul.f32 %v1930, %v1938
    %s1941 = scalar_lea.vmem [#allocation2], 192
    %v1942 = vld [vmem:[%s1941] sm:$0xff]
    %v1943 = vld [vmem:[%s1941 + $0x8] sm:$0xff]
    %v1944 = vld [vmem:[%s1941 + $0x10] sm:$0xff]
    %v1945 = vld [vmem:[%s1941 + $0x18] sm:$0xff]
    %v1946 = vld [vmem:[%s1941 + $0x20] sm:$0xff]
    %v1947 = vld [vmem:[%s1941 + $0x28] sm:$0xff]
    %v1948 = vld [vmem:[%s1941 + $0x30] sm:$0xff]
    %v1949 = vld [vmem:[%s1941 + $0x38] sm:$0xff]
    %v1950 = vpack.c.bf16 %v1939, %v1939
    %v1951 = vpack.c.bf16 %v1940, %v1940
    %1952 = vmatprep.subr.bf16.mxu0 %v1291
    %1953 = vmatpush1.bf16.msra.mxu0 %v1290
    %1954 = vmatprep.subr.bf16.mxu0 %v1283
    %1955 = vmatpush1.bf16.msra.mxu0 %v1282
    %1956 = vmatprep.subr.bf16.mxu0 %v1275
    %1957 = vmatpush1.bf16.msra.mxu0 %v1274
    %1958 = vmatprep.subr.bf16.mxu0 %v1267
    %1959 = vmatpush1.bf16.msra.mxu0 %v1266
    %1960 = vmatprep.subr.bf16.mxu0 %v1259
    %1961 = vmatpush1.bf16.msra.mxu0 %v1258
    %1962 = vmatprep.subr.bf16.mxu0 %v1251
    %1963 = vmatpush1.bf16.msra.mxu0 %v1250
    %1964 = vmatprep.subr.bf16.mxu0 %v1243
    %1965 = vmatpush1.bf16.msra.mxu0 %v1242
    %1966 = vmatprep.subr.bf16.mxu0 %v1235
    %1967 = vmatpush1.bf16.msra.mxu0 %v1234
    %1968 = vmatprep.subr.bf16.mxu0 %v1355
    %1969 = vmatpush2.bf16.msra.mxu0 %v1354
    %1970 = vmatprep.subr.bf16.mxu0 %v1347
    %1971 = vmatpush2.bf16.msra.mxu0 %v1346
    %1972 = vmatprep.subr.bf16.mxu0 %v1339
    %1973 = vmatpush2.bf16.msra.mxu0 %v1338
    %1974 = vmatprep.subr.bf16.mxu0 %v1331
    %1975 = vmatpush2.bf16.msra.mxu0 %v1330
    %1976 = vmatprep.subr.bf16.mxu0 %v1323
    %1977 = vmatpush2.bf16.msra.mxu0 %v1322
    %1978 = vmatprep.subr.bf16.mxu0 %v1315
    %1979 = vmatpush2.bf16.msra.mxu0 %v1314
    %1980 = vmatprep.subr.bf16.mxu0 %v1307
    %1981 = vmatpush2.bf16.msra.mxu0 %v1306
    %1982 = vmatprep.subr.bf16.mxu0 %v1299
    %1983 = vmatpush2.bf16.msra.mxu0 %v1298
    %1984 = vmatprep.mubr.bf16.mxu0 %v1951
    %1985 = vmatmul.mubr.bf16.gmra.mxu0 %v1950
    %v1986 = vpop.f32.mrf.mxu0
    %v1987 = vadd.f32 0.0, %v1986
    %v1988 = vpop.f32.mrf.mxu0
    %v1989 = vadd.f32 0.0, %v1988
    %v1990 = vpop.f32.mrf.mxu0
    %v1991 = vpop.f32.mrf.mxu0
    %1992 = vdwg.mxu0
    %1993 = vmatprep.subr.bf16.mxu0 %v1293
    %1994 = vmatpush1.bf16.msra.mxu0 %v1292
    %1995 = vmatprep.subr.bf16.mxu0 %v1285
    %1996 = vmatpush1.bf16.msra.mxu0 %v1284
    %1997 = vmatprep.subr.bf16.mxu0 %v1277
    %1998 = vmatpush1.bf16.msra.mxu0 %v1276
    %1999 = vmatprep.subr.bf16.mxu0 %v1269
    %2000 = vmatpush1.bf16.msra.mxu0 %v1268
    %2001 = vmatprep.subr.bf16.mxu0 %v1261
    %2002 = vmatpush1.bf16.msra.mxu0 %v1260
    %2003 = vmatprep.subr.bf16.mxu0 %v1253
    %2004 = vmatpush1.bf16.msra.mxu0 %v1252
    %2005 = vmatprep.subr.bf16.mxu0 %v1245
    %2006 = vmatpush1.bf16.msra.mxu0 %v1244
    %2007 = vmatprep.subr.bf16.mxu0 %v1237
    %2008 = vmatpush1.bf16.msra.mxu0 %v1236
    %2009 = vmatprep.subr.bf16.mxu0 %v1357
    %2010 = vmatpush2.bf16.msra.mxu0 %v1356
    %2011 = vmatprep.subr.bf16.mxu0 %v1349
    %2012 = vmatpush2.bf16.msra.mxu0 %v1348
    %2013 = vmatprep.subr.bf16.mxu0 %v1341
    %2014 = vmatpush2.bf16.msra.mxu0 %v1340
    %2015 = vmatprep.subr.bf16.mxu0 %v1333
    %2016 = vmatpush2.bf16.msra.mxu0 %v1332
    %2017 = vmatprep.subr.bf16.mxu0 %v1325
    %2018 = vmatpush2.bf16.msra.mxu0 %v1324
    %2019 = vmatprep.subr.bf16.mxu0 %v1317
    %2020 = vmatpush2.bf16.msra.mxu0 %v1316
    %2021 = vmatprep.subr.bf16.mxu0 %v1309
    %2022 = vmatpush2.bf16.msra.mxu0 %v1308
    %2023 = vmatprep.subr.bf16.mxu0 %v1301
    %2024 = vmatpush2.bf16.msra.mxu0 %v1300
    %2025 = vmatprep.mubr.bf16.mxu0 %v1951
    %2026 = vmatmul.mubr.bf16.gmra.mxu0 %v1950
    %v2027 = vpop.f32.mrf.mxu0
    %v2028 = vadd.f32 0.0, %v2027
    %v2029 = vpop.f32.mrf.mxu0
    %v2030 = vadd.f32 0.0, %v2029
    %v2031 = vpop.f32.mrf.mxu0
    %v2032 = vpop.f32.mrf.mxu0
    %2033 = vdwg.mxu0
    %2034 = vmatprep.subr.bf16.mxu0 %v1295
    %2035 = vmatpush1.bf16.msra.mxu0 %v1294
    %2036 = vmatprep.subr.bf16.mxu0 %v1287
    %2037 = vmatpush1.bf16.msra.mxu0 %v1286
    %2038 = vmatprep.subr.bf16.mxu0 %v1279
    %2039 = vmatpush1.bf16.msra.mxu0 %v1278
    %2040 = vmatprep.subr.bf16.mxu0 %v1271
    %2041 = vmatpush1.bf16.msra.mxu0 %v1270
    %2042 = vmatprep.subr.bf16.mxu0 %v1263
    %2043 = vmatpush1.bf16.msra.mxu0 %v1262
    %2044 = vmatprep.subr.bf16.mxu0 %v1255
    %2045 = vmatpush1.bf16.msra.mxu0 %v1254
    %2046 = vmatprep.subr.bf16.mxu0 %v1247
    %2047 = vmatpush1.bf16.msra.mxu0 %v1246
    %2048 = vmatprep.subr.bf16.mxu0 %v1239
    %2049 = vmatpush1.bf16.msra.mxu0 %v1238
    %2050 = vmatprep.subr.bf16.mxu0 %v1359
    %2051 = vmatpush2.bf16.msra.mxu0 %v1358
    %2052 = vmatprep.subr.bf16.mxu0 %v1351
    %2053 = vmatpush2.bf16.msra.mxu0 %v1350
    %2054 = vmatprep.subr.bf16.mxu0 %v1343
    %2055 = vmatpush2.bf16.msra.mxu0 %v1342
    %2056 = vmatprep.subr.bf16.mxu0 %v1335
    %2057 = vmatpush2.bf16.msra.mxu0 %v1334
    %2058 = vmatprep.subr.bf16.mxu0 %v1327
    %2059 = vmatpush2.bf16.msra.mxu0 %v1326
    %2060 = vmatprep.subr.bf16.mxu0 %v1319
    %2061 = vmatpush2.bf16.msra.mxu0 %v1318
    %2062 = vmatprep.subr.bf16.mxu0 %v1311
    %2063 = vmatpush2.bf16.msra.mxu0 %v1310
    %2064 = vmatprep.subr.bf16.mxu0 %v1303
    %2065 = vmatpush2.bf16.msra.mxu0 %v1302
    %2066 = vmatprep.mubr.bf16.mxu0 %v1951
    %2067 = vmatmul.mubr.bf16.gmra.mxu0 %v1950
    %v2068 = vpop.f32.mrf.mxu0
    %v2069 = vadd.f32 0.0, %v2068
    %v2070 = vpop.f32.mrf.mxu0
    %v2071 = vadd.f32 0.0, %v2070
    %v2072 = vpop.f32.mrf.mxu0
    %v2073 = vpop.f32.mrf.mxu0
    %2074 = vdwg.mxu0
    %2075 = vmatprep.subr.bf16.mxu0 %v1297
    %2076 = vmatpush1.bf16.msra.mxu0 %v1296
    %2077 = vmatprep.subr.bf16.mxu0 %v1289
    %2078 = vmatpush1.bf16.msra.mxu0 %v1288
    %2079 = vmatprep.subr.bf16.mxu0 %v1281
    %2080 = vmatpush1.bf16.msra.mxu0 %v1280
    %2081 = vmatprep.subr.bf16.mxu0 %v1273
    %2082 = vmatpush1.bf16.msra.mxu0 %v1272
    %2083 = vmatprep.subr.bf16.mxu0 %v1265
    %2084 = vmatpush1.bf16.msra.mxu0 %v1264
    %2085 = vmatprep.subr.bf16.mxu0 %v1257
    %2086 = vmatpush1.bf16.msra.mxu0 %v1256
    %2087 = vmatprep.subr.bf16.mxu0 %v1249
    %2088 = vmatpush1.bf16.msra.mxu0 %v1248
    %2089 = vmatprep.subr.bf16.mxu0 %v1241
    %2090 = vmatpush1.bf16.msra.mxu0 %v1240
    %2091 = vmatprep.subr.bf16.mxu0 %v1361
    %2092 = vmatpush2.bf16.msra.mxu0 %v1360
    %2093 = vmatprep.subr.bf16.mxu0 %v1353
    %2094 = vmatpush2.bf16.msra.mxu0 %v1352
    %2095 = vmatprep.subr.bf16.mxu0 %v1345
    %2096 = vmatpush2.bf16.msra.mxu0 %v1344
    %2097 = vmatprep.subr.bf16.mxu0 %v1337
    %2098 = vmatpush2.bf16.msra.mxu0 %v1336
    %2099 = vmatprep.subr.bf16.mxu0 %v1329
    %2100 = vmatpush2.bf16.msra.mxu0 %v1328
    %2101 = vmatprep.subr.bf16.mxu0 %v1321
    %2102 = vmatpush2.bf16.msra.mxu0 %v1320
    %2103 = vmatprep.subr.bf16.mxu0 %v1313
    %2104 = vmatpush2.bf16.msra.mxu0 %v1312
    %2105 = vmatprep.subr.bf16.mxu0 %v1305
    %2106 = vmatpush2.bf16.msra.mxu0 %v1304
    %2107 = vmatprep.mubr.bf16.mxu0 %v1951
    %2108 = vmatmul.mubr.bf16.gmra.mxu0 %v1950
    %v2109 = vpop.f32.mrf.mxu0
    %v2110 = vadd.f32 0.0, %v2109
    %v2111 = vpop.f32.mrf.mxu0
    %v2112 = vadd.f32 0.0, %v2111
    %v2113 = vpop.f32.mrf.mxu0
    %v2114 = vpop.f32.mrf.mxu0
    %2115 = vdwg.mxu0
    %v2116 = vadd.f32 %v1942, %v1987
    %v2117 = vadd.f32 %v1943, %v1989
    %v2118 = vadd.f32 %v1944, %v2028
    %v2119 = vadd.f32 %v1945, %v2030
    %v2120 = vadd.f32 %v1946, %v2069
    %v2121 = vadd.f32 %v1947, %v2071
    %v2122 = vadd.f32 %v1948, %v2110
    %v2123 = vadd.f32 %v1949, %v2112
    %v2124 = vxor.u32 %v2116, 2147483648
    %v2125 = vxor.u32 %v2117, 2147483648
    %v2126 = vmul.f32 %v2124, 1.442695
    %v2127 = vpow.pop %v2126
    %v2128 = vmul.f32 %v2125, 1.442695
    %v2129 = vpow.pop %v2128
    %v2130 = vadd.f32 %v2127, 1.0
    %v2131 = vadd.f32 %v2129, 1.0
    %v2132 = vrcp.pop %v2130
    %v2133 = vmul.f32 1.0, %v2132
    %v2134 = vrcp.pop %v2131
    %v2135 = vmul.f32 1.0, %v2134
    %v2136 = vxor.u32 %v2118, 2147483648
    %v2137 = vxor.u32 %v2119, 2147483648
    %v2138 = vmul.f32 %v2136, 1.442695
    %v2139 = vpow.pop %v2138
    %v2140 = vmul.f32 %v2137, 1.442695
    %v2141 = vpow.pop %v2140
    %v2142 = vadd.f32 %v2139, 1.0
    %v2143 = vadd.f32 %v2141, 1.0
    %v2144 = vrcp.pop %v2142
    %v2145 = vmul.f32 1.0, %v2144
    %v2146 = vrcp.pop %v2143
    %v2147 = vmul.f32 1.0, %v2146
    %v2148 = vtanh.pop %v2120
    %v2149 = vtanh.pop %v2121
    %v2150 = vxor.u32 %v2122, 2147483648
    %v2151 = vxor.u32 %v2123, 2147483648
    %v2152 = vmul.f32 %v2150, 1.442695
    %v2153 = vpow.pop %v2152
    %v2154 = vmul.f32 %v2151, 1.442695
    %v2155 = vpow.pop %v2154
    %v2156 = vadd.f32 %v2153, 1.0
    %v2157 = vadd.f32 %v2155, 1.0
    %v2158 = vrcp.pop %v2156
    %v2159 = vmul.f32 1.0, %v2158
    %v2160 = vrcp.pop %v2157
    %v2161 = vmul.f32 1.0, %v2160
    %v2162 = vmul.f32 %v2145, %v1935
    %v2163 = vmul.f32 %v2147, %v1936
    %v2164 = vmul.f32 %v2133, %v2148
    %v2165 = vmul.f32 %v2135, %v2149
    %v2166 = vadd.f32 %v2162, %v2164
    %v2167 = vadd.f32 %v2163, %v2165
    %v2168 = vtanh.pop %v2166
    %v2169 = vtanh.pop %v2167
    %v2170 = vmul.f32 %v2159, %v2168
    %v2171 = vmul.f32 %v2161, %v2169
    %s2172 = scalar_lea.vmem [#allocation2], 256
    %v2173 = vld [vmem:[%s2172] sm:$0xff]
    %v2174 = vld [vmem:[%s2172 + $0x8] sm:$0xff]
    %v2175 = vld [vmem:[%s2172 + $0x10] sm:$0xff]
    %v2176 = vld [vmem:[%s2172 + $0x18] sm:$0xff]
    %v2177 = vld [vmem:[%s2172 + $0x20] sm:$0xff]
    %v2178 = vld [vmem:[%s2172 + $0x28] sm:$0xff]
    %v2179 = vld [vmem:[%s2172 + $0x30] sm:$0xff]
    %v2180 = vld [vmem:[%s2172 + $0x38] sm:$0xff]
    %v2181 = vpack.c.bf16 %v2170, %v2170
    %v2182 = vpack.c.bf16 %v2171, %v2171
    %2183 = vmatprep.subr.bf16.mxu0 %v1291
    %2184 = vmatpush1.bf16.msra.mxu0 %v1290
    %2185 = vmatprep.subr.bf16.mxu0 %v1283
    %2186 = vmatpush1.bf16.msra.mxu0 %v1282
    %2187 = vmatprep.subr.bf16.mxu0 %v1275
    %2188 = vmatpush1.bf16.msra.mxu0 %v1274
    %2189 = vmatprep.subr.bf16.mxu0 %v1267
    %2190 = vmatpush1.bf16.msra.mxu0 %v1266
    %2191 = vmatprep.subr.bf16.mxu0 %v1259
    %2192 = vmatpush1.bf16.msra.mxu0 %v1258
    %2193 = vmatprep.subr.bf16.mxu0 %v1251
    %2194 = vmatpush1.bf16.msra.mxu0 %v1250
    %2195 = vmatprep.subr.bf16.mxu0 %v1243
    %2196 = vmatpush1.bf16.msra.mxu0 %v1242
    %2197 = vmatprep.subr.bf16.mxu0 %v1235
    %2198 = vmatpush1.bf16.msra.mxu0 %v1234
    %2199 = vmatprep.subr.bf16.mxu0 %v1355
    %2200 = vmatpush2.bf16.msra.mxu0 %v1354
    %2201 = vmatprep.subr.bf16.mxu0 %v1347
    %2202 = vmatpush2.bf16.msra.mxu0 %v1346
    %2203 = vmatprep.subr.bf16.mxu0 %v1339
    %2204 = vmatpush2.bf16.msra.mxu0 %v1338
    %2205 = vmatprep.subr.bf16.mxu0 %v1331
    %2206 = vmatpush2.bf16.msra.mxu0 %v1330
    %2207 = vmatprep.subr.bf16.mxu0 %v1323
    %2208 = vmatpush2.bf16.msra.mxu0 %v1322
    %2209 = vmatprep.subr.bf16.mxu0 %v1315
    %2210 = vmatpush2.bf16.msra.mxu0 %v1314
    %2211 = vmatprep.subr.bf16.mxu0 %v1307
    %2212 = vmatpush2.bf16.msra.mxu0 %v1306
    %2213 = vmatprep.subr.bf16.mxu0 %v1299
    %2214 = vmatpush2.bf16.msra.mxu0 %v1298
    %2215 = vmatprep.mubr.bf16.mxu0 %v2182
    %2216 = vmatmul.mubr.bf16.gmra.mxu0 %v2181
    %v2217 = vpop.f32.mrf.mxu0
    %v2218 = vadd.f32 0.0, %v2217
    %v2219 = vpop.f32.mrf.mxu0
    %v2220 = vadd.f32 0.0, %v2219
    %v2221 = vpop.f32.mrf.mxu0
    %v2222 = vpop.f32.mrf.mxu0
    %2223 = vdwg.mxu0
    %2224 = vmatprep.subr.bf16.mxu0 %v1293
    %2225 = vmatpush1.bf16.msra.mxu0 %v1292
    %2226 = vmatprep.subr.bf16.mxu0 %v1285
    %2227 = vmatpush1.bf16.msra.mxu0 %v1284
    %2228 = vmatprep.subr.bf16.mxu0 %v1277
    %2229 = vmatpush1.bf16.msra.mxu0 %v1276
    %2230 = vmatprep.subr.bf16.mxu0 %v1269
    %2231 = vmatpush1.bf16.msra.mxu0 %v1268
    %2232 = vmatprep.subr.bf16.mxu0 %v1261
    %2233 = vmatpush1.bf16.msra.mxu0 %v1260
    %2234 = vmatprep.subr.bf16.mxu0 %v1253
    %2235 = vmatpush1.bf16.msra.mxu0 %v1252
    %2236 = vmatprep.subr.bf16.mxu0 %v1245
    %2237 = vmatpush1.bf16.msra.mxu0 %v1244
    %2238 = vmatprep.subr.bf16.mxu0 %v1237
    %2239 = vmatpush1.bf16.msra.mxu0 %v1236
    %2240 = vmatprep.subr.bf16.mxu0 %v1357
    %2241 = vmatpush2.bf16.msra.mxu0 %v1356
    %2242 = vmatprep.subr.bf16.mxu0 %v1349
    %2243 = vmatpush2.bf16.msra.mxu0 %v1348
    %2244 = vmatprep.subr.bf16.mxu0 %v1341
    %2245 = vmatpush2.bf16.msra.mxu0 %v1340
    %2246 = vmatprep.subr.bf16.mxu0 %v1333
    %2247 = vmatpush2.bf16.msra.mxu0 %v1332
    %2248 = vmatprep.subr.bf16.mxu0 %v1325
    %2249 = vmatpush2.bf16.msra.mxu0 %v1324
    %2250 = vmatprep.subr.bf16.mxu0 %v1317
    %2251 = vmatpush2.bf16.msra.mxu0 %v1316
    %2252 = vmatprep.subr.bf16.mxu0 %v1309
    %2253 = vmatpush2.bf16.msra.mxu0 %v1308
    %2254 = vmatprep.subr.bf16.mxu0 %v1301
    %2255 = vmatpush2.bf16.msra.mxu0 %v1300
    %2256 = vmatprep.mubr.bf16.mxu0 %v2182
    %2257 = vmatmul.mubr.bf16.gmra.mxu0 %v2181
    %v2258 = vpop.f32.mrf.mxu0
    %v2259 = vadd.f32 0.0, %v2258
    %v2260 = vpop.f32.mrf.mxu0
    %v2261 = vadd.f32 0.0, %v2260
    %v2262 = vpop.f32.mrf.mxu0
    %v2263 = vpop.f32.mrf.mxu0
    %2264 = vdwg.mxu0
    %2265 = vmatprep.subr.bf16.mxu0 %v1295
    %2266 = vmatpush1.bf16.msra.mxu0 %v1294
    %2267 = vmatprep.subr.bf16.mxu0 %v1287
    %2268 = vmatpush1.bf16.msra.mxu0 %v1286
    %2269 = vmatprep.subr.bf16.mxu0 %v1279
    %2270 = vmatpush1.bf16.msra.mxu0 %v1278
    %2271 = vmatprep.subr.bf16.mxu0 %v1271
    %2272 = vmatpush1.bf16.msra.mxu0 %v1270
    %2273 = vmatprep.subr.bf16.mxu0 %v1263
    %2274 = vmatpush1.bf16.msra.mxu0 %v1262
    %2275 = vmatprep.subr.bf16.mxu0 %v1255
    %2276 = vmatpush1.bf16.msra.mxu0 %v1254
    %2277 = vmatprep.subr.bf16.mxu0 %v1247
    %2278 = vmatpush1.bf16.msra.mxu0 %v1246
    %2279 = vmatprep.subr.bf16.mxu0 %v1239
    %2280 = vmatpush1.bf16.msra.mxu0 %v1238
    %2281 = vmatprep.subr.bf16.mxu0 %v1359
    %2282 = vmatpush2.bf16.msra.mxu0 %v1358
    %2283 = vmatprep.subr.bf16.mxu0 %v1351
    %2284 = vmatpush2.bf16.msra.mxu0 %v1350
    %2285 = vmatprep.subr.bf16.mxu0 %v1343
    %2286 = vmatpush2.bf16.msra.mxu0 %v1342
    %2287 = vmatprep.subr.bf16.mxu0 %v1335
    %2288 = vmatpush2.bf16.msra.mxu0 %v1334
    %2289 = vmatprep.subr.bf16.mxu0 %v1327
    %2290 = vmatpush2.bf16.msra.mxu0 %v1326
    %2291 = vmatprep.subr.bf16.mxu0 %v1319
    %2292 = vmatpush2.bf16.msra.mxu0 %v1318
    %2293 = vmatprep.subr.bf16.mxu0 %v1311
    %2294 = vmatpush2.bf16.msra.mxu0 %v1310
    %2295 = vmatprep.subr.bf16.mxu0 %v1303
    %2296 = vmatpush2.bf16.msra.mxu0 %v1302
    %2297 = vmatprep.mubr.bf16.mxu0 %v2182
    %2298 = vmatmul.mubr.bf16.gmra.mxu0 %v2181
    %v2299 = vpop.f32.mrf.mxu0
    %v2300 = vadd.f32 0.0, %v2299
    %v2301 = vpop.f32.mrf.mxu0
    %v2302 = vadd.f32 0.0, %v2301
    %v2303 = vpop.f32.mrf.mxu0
    %v2304 = vpop.f32.mrf.mxu0
    %2305 = vdwg.mxu0
    %2306 = vmatprep.subr.bf16.mxu0 %v1297
    %2307 = vmatpush1.bf16.msra.mxu0 %v1296
    %2308 = vmatprep.subr.bf16.mxu0 %v1289
    %2309 = vmatpush1.bf16.msra.mxu0 %v1288
    %2310 = vmatprep.subr.bf16.mxu0 %v1281
    %2311 = vmatpush1.bf16.msra.mxu0 %v1280
    %2312 = vmatprep.subr.bf16.mxu0 %v1273
    %2313 = vmatpush1.bf16.msra.mxu0 %v1272
    %2314 = vmatprep.subr.bf16.mxu0 %v1265
    %2315 = vmatpush1.bf16.msra.mxu0 %v1264
    %2316 = vmatprep.subr.bf16.mxu0 %v1257
    %2317 = vmatpush1.bf16.msra.mxu0 %v1256
    %2318 = vmatprep.subr.bf16.mxu0 %v1249
    %2319 = vmatpush1.bf16.msra.mxu0 %v1248
    %2320 = vmatprep.subr.bf16.mxu0 %v1241
    %2321 = vmatpush1.bf16.msra.mxu0 %v1240
    %2322 = vmatprep.subr.bf16.mxu0 %v1361
    %2323 = vmatpush2.bf16.msra.mxu0 %v1360
    %2324 = vmatprep.subr.bf16.mxu0 %v1353
    %2325 = vmatpush2.bf16.msra.mxu0 %v1352
    %2326 = vmatprep.subr.bf16.mxu0 %v1345
    %2327 = vmatpush2.bf16.msra.mxu0 %v1344
    %2328 = vmatprep.subr.bf16.mxu0 %v1337
    %2329 = vmatpush2.bf16.msra.mxu0 %v1336
    %2330 = vmatprep.subr.bf16.mxu0 %v1329
    %2331 = vmatpush2.bf16.msra.mxu0 %v1328
    %2332 = vmatprep.subr.bf16.mxu0 %v1321
    %2333 = vmatpush2.bf16.msra.mxu0 %v1320
    %2334 = vmatprep.subr.bf16.mxu0 %v1313
    %2335 = vmatpush2.bf16.msra.mxu0 %v1312
    %2336 = vmatprep.subr.bf16.mxu0 %v1305
    %2337 = vmatpush2.bf16.msra.mxu0 %v1304
    %2338 = vmatprep.mubr.bf16.mxu0 %v2182
    %2339 = vmatmul.mubr.bf16.gmra.mxu0 %v2181
    %v2340 = vpop.f32.mrf.mxu0
    %v2341 = vadd.f32 0.0, %v2340
    %v2342 = vpop.f32.mrf.mxu0
    %v2343 = vadd.f32 0.0, %v2342
    %v2344 = vpop.f32.mrf.mxu0
    %v2345 = vpop.f32.mrf.mxu0
    %2346 = vdwg.mxu0
    %v2347 = vadd.f32 %v2173, %v2218
    %v2348 = vadd.f32 %v2174, %v2220
    %v2349 = vadd.f32 %v2175, %v2259
    %v2350 = vadd.f32 %v2176, %v2261
    %v2351 = vadd.f32 %v2177, %v2300
    %v2352 = vadd.f32 %v2178, %v2302
    %v2353 = vadd.f32 %v2179, %v2341
    %v2354 = vadd.f32 %v2180, %v2343
    %v2355 = vxor.u32 %v2347, 2147483648
    %v2356 = vxor.u32 %v2348, 2147483648
    %v2357 = vmul.f32 %v2355, 1.442695
    %v2358 = vpow.pop %v2357
    %v2359 = vmul.f32 %v2356, 1.442695
    %v2360 = vpow.pop %v2359
    %v2361 = vadd.f32 %v2358, 1.0
    %v2362 = vadd.f32 %v2360, 1.0
    %v2363 = vrcp.pop %v2361
    %v2364 = vmul.f32 1.0, %v2363
    %v2365 = vrcp.pop %v2362
    %v2366 = vmul.f32 1.0, %v2365
    %v2367 = vxor.u32 %v2349, 2147483648
    %v2368 = vxor.u32 %v2350, 2147483648
    %v2369 = vmul.f32 %v2367, 1.442695
    %v2370 = vpow.pop %v2369
    %v2371 = vmul.f32 %v2368, 1.442695
    %v2372 = vpow.pop %v2371
    %v2373 = vadd.f32 %v2370, 1.0
    %v2374 = vadd.f32 %v2372, 1.0
    %v2375 = vrcp.pop %v2373
    %v2376 = vmul.f32 1.0, %v2375
    %v2377 = vrcp.pop %v2374
    %v2378 = vmul.f32 1.0, %v2377
    %v2379 = vtanh.pop %v2351
    %v2380 = vtanh.pop %v2352
    %v2381 = vxor.u32 %v2353, 2147483648
    %v2382 = vxor.u32 %v2354, 2147483648
    %v2383 = vmul.f32 %v2381, 1.442695
    %v2384 = vpow.pop %v2383
    %v2385 = vmul.f32 %v2382, 1.442695
    %v2386 = vpow.pop %v2385
    %v2387 = vadd.f32 %v2384, 1.0
    %v2388 = vadd.f32 %v2386, 1.0
    %v2389 = vrcp.pop %v2387
    %v2390 = vmul.f32 1.0, %v2389
    %v2391 = vrcp.pop %v2388
    %v2392 = vmul.f32 1.0, %v2391
    %v2393 = vmul.f32 %v2376, %v2166
    %v2394 = vmul.f32 %v2378, %v2167
    %v2395 = vmul.f32 %v2364, %v2379
    %v2396 = vmul.f32 %v2366, %v2380
    %v2397 = vadd.f32 %v2393, %v2395
    %v2398 = vadd.f32 %v2394, %v2396
    %v2399 = vtanh.pop %v2397
    %v2400 = vtanh.pop %v2398
    %v2401 = vmul.f32 %v2390, %v2399
    %v2402 = vmul.f32 %v2392, %v2400
    %s2403 = scalar_lea.vmem [#allocation2], 320
    %v2404 = vld [vmem:[%s2403] sm:$0xff]
    %v2405 = vld [vmem:[%s2403 + $0x8] sm:$0xff]
    %v2406 = vld [vmem:[%s2403 + $0x10] sm:$0xff]
    %v2407 = vld [vmem:[%s2403 + $0x18] sm:$0xff]
    %v2408 = vld [vmem:[%s2403 + $0x20] sm:$0xff]
    %v2409 = vld [vmem:[%s2403 + $0x28] sm:$0xff]
    %v2410 = vld [vmem:[%s2403 + $0x30] sm:$0xff]
    %v2411 = vld [vmem:[%s2403 + $0x38] sm:$0xff]
    %v2412 = vpack.c.bf16 %v2401, %v2401
    %v2413 = vpack.c.bf16 %v2402, %v2402
    %2414 = vmatprep.subr.bf16.mxu0 %v1291
    %2415 = vmatpush1.bf16.msra.mxu0 %v1290
    %2416 = vmatprep.subr.bf16.mxu0 %v1283
    %2417 = vmatpush1.bf16.msra.mxu0 %v1282
    %2418 = vmatprep.subr.bf16.mxu0 %v1275
    %2419 = vmatpush1.bf16.msra.mxu0 %v1274
    %2420 = vmatprep.subr.bf16.mxu0 %v1267
    %2421 = vmatpush1.bf16.msra.mxu0 %v1266
    %2422 = vmatprep.subr.bf16.mxu0 %v1259
    %2423 = vmatpush1.bf16.msra.mxu0 %v1258
    %2424 = vmatprep.subr.bf16.mxu0 %v1251
    %2425 = vmatpush1.bf16.msra.mxu0 %v1250
    %2426 = vmatprep.subr.bf16.mxu0 %v1243
    %2427 = vmatpush1.bf16.msra.mxu0 %v1242
    %2428 = vmatprep.subr.bf16.mxu0 %v1235
    %2429 = vmatpush1.bf16.msra.mxu0 %v1234
    %2430 = vmatprep.subr.bf16.mxu0 %v1355
    %2431 = vmatpush2.bf16.msra.mxu0 %v1354
    %2432 = vmatprep.subr.bf16.mxu0 %v1347
    %2433 = vmatpush2.bf16.msra.mxu0 %v1346
    %2434 = vmatprep.subr.bf16.mxu0 %v1339
    %2435 = vmatpush2.bf16.msra.mxu0 %v1338
    %2436 = vmatprep.subr.bf16.mxu0 %v1331
    %2437 = vmatpush2.bf16.msra.mxu0 %v1330
    %2438 = vmatprep.subr.bf16.mxu0 %v1323
    %2439 = vmatpush2.bf16.msra.mxu0 %v1322
    %2440 = vmatprep.subr.bf16.mxu0 %v1315
    %2441 = vmatpush2.bf16.msra.mxu0 %v1314
    %2442 = vmatprep.subr.bf16.mxu0 %v1307
    %2443 = vmatpush2.bf16.msra.mxu0 %v1306
    %2444 = vmatprep.subr.bf16.mxu0 %v1299
    %2445 = vmatpush2.bf16.msra.mxu0 %v1298
    %2446 = vmatprep.mubr.bf16.mxu0 %v2413
    %2447 = vmatmul.mubr.bf16.gmra.mxu0 %v2412
    %v2448 = vpop.f32.mrf.mxu0
    %v2449 = vadd.f32 0.0, %v2448
    %v2450 = vpop.f32.mrf.mxu0
    %v2451 = vadd.f32 0.0, %v2450
    %v2452 = vpop.f32.mrf.mxu0
    %v2453 = vpop.f32.mrf.mxu0
    %2454 = vdwg.mxu0
    %2455 = vmatprep.subr.bf16.mxu0 %v1293
    %2456 = vmatpush1.bf16.msra.mxu0 %v1292
    %2457 = vmatprep.subr.bf16.mxu0 %v1285
    %2458 = vmatpush1.bf16.msra.mxu0 %v1284
    %2459 = vmatprep.subr.bf16.mxu0 %v1277
    %2460 = vmatpush1.bf16.msra.mxu0 %v1276
    %2461 = vmatprep.subr.bf16.mxu0 %v1269
    %2462 = vmatpush1.bf16.msra.mxu0 %v1268
    %2463 = vmatprep.subr.bf16.mxu0 %v1261
    %2464 = vmatpush1.bf16.msra.mxu0 %v1260
    %2465 = vmatprep.subr.bf16.mxu0 %v1253
    %2466 = vmatpush1.bf16.msra.mxu0 %v1252
    %2467 = vmatprep.subr.bf16.mxu0 %v1245
    %2468 = vmatpush1.bf16.msra.mxu0 %v1244
    %2469 = vmatprep.subr.bf16.mxu0 %v1237
    %2470 = vmatpush1.bf16.msra.mxu0 %v1236
    %2471 = vmatprep.subr.bf16.mxu0 %v1357
    %2472 = vmatpush2.bf16.msra.mxu0 %v1356
    %2473 = vmatprep.subr.bf16.mxu0 %v1349
    %2474 = vmatpush2.bf16.msra.mxu0 %v1348
    %2475 = vmatprep.subr.bf16.mxu0 %v1341
    %2476 = vmatpush2.bf16.msra.mxu0 %v1340
    %2477 = vmatprep.subr.bf16.mxu0 %v1333
    %2478 = vmatpush2.bf16.msra.mxu0 %v1332
    %2479 = vmatprep.subr.bf16.mxu0 %v1325
    %2480 = vmatpush2.bf16.msra.mxu0 %v1324
    %2481 = vmatprep.subr.bf16.mxu0 %v1317
    %2482 = vmatpush2.bf16.msra.mxu0 %v1316
    %2483 = vmatprep.subr.bf16.mxu0 %v1309
    %2484 = vmatpush2.bf16.msra.mxu0 %v1308
    %2485 = vmatprep.subr.bf16.mxu0 %v1301
    %2486 = vmatpush2.bf16.msra.mxu0 %v1300
    %2487 = vmatprep.mubr.bf16.mxu0 %v2413
    %2488 = vmatmul.mubr.bf16.gmra.mxu0 %v2412
    %v2489 = vpop.f32.mrf.mxu0
    %v2490 = vadd.f32 0.0, %v2489
    %v2491 = vpop.f32.mrf.mxu0
    %v2492 = vadd.f32 0.0, %v2491
    %v2493 = vpop.f32.mrf.mxu0
    %v2494 = vpop.f32.mrf.mxu0
    %2495 = vdwg.mxu0
    %2496 = vmatprep.subr.bf16.mxu0 %v1295
    %2497 = vmatpush1.bf16.msra.mxu0 %v1294
    %2498 = vmatprep.subr.bf16.mxu0 %v1287
    %2499 = vmatpush1.bf16.msra.mxu0 %v1286
    %2500 = vmatprep.subr.bf16.mxu0 %v1279
    %2501 = vmatpush1.bf16.msra.mxu0 %v1278
    %2502 = vmatprep.subr.bf16.mxu0 %v1271
    %2503 = vmatpush1.bf16.msra.mxu0 %v1270
    %2504 = vmatprep.subr.bf16.mxu0 %v1263
    %2505 = vmatpush1.bf16.msra.mxu0 %v1262
    %2506 = vmatprep.subr.bf16.mxu0 %v1255
    %2507 = vmatpush1.bf16.msra.mxu0 %v1254
    %2508 = vmatprep.subr.bf16.mxu0 %v1247
    %2509 = vmatpush1.bf16.msra.mxu0 %v1246
    %2510 = vmatprep.subr.bf16.mxu0 %v1239
    %2511 = vmatpush1.bf16.msra.mxu0 %v1238
    %2512 = vmatprep.subr.bf16.mxu0 %v1359
    %2513 = vmatpush2.bf16.msra.mxu0 %v1358
    %2514 = vmatprep.subr.bf16.mxu0 %v1351
    %2515 = vmatpush2.bf16.msra.mxu0 %v1350
    %2516 = vmatprep.subr.bf16.mxu0 %v1343
    %2517 = vmatpush2.bf16.msra.mxu0 %v1342
    %2518 = vmatprep.subr.bf16.mxu0 %v1335
    %2519 = vmatpush2.bf16.msra.mxu0 %v1334
    %2520 = vmatprep.subr.bf16.mxu0 %v1327
    %2521 = vmatpush2.bf16.msra.mxu0 %v1326
    %2522 = vmatprep.subr.bf16.mxu0 %v1319
    %2523 = vmatpush2.bf16.msra.mxu0 %v1318
    %2524 = vmatprep.subr.bf16.mxu0 %v1311
    %2525 = vmatpush2.bf16.msra.mxu0 %v1310
    %2526 = vmatprep.subr.bf16.mxu0 %v1303
    %2527 = vmatpush2.bf16.msra.mxu0 %v1302
    %2528 = vmatprep.mubr.bf16.mxu0 %v2413
    %2529 = vmatmul.mubr.bf16.gmra.mxu0 %v2412
    %v2530 = vpop.f32.mrf.mxu0
    %v2531 = vadd.f32 0.0, %v2530
    %v2532 = vpop.f32.mrf.mxu0
    %v2533 = vadd.f32 0.0, %v2532
    %v2534 = vpop.f32.mrf.mxu0
    %v2535 = vpop.f32.mrf.mxu0
    %2536 = vdwg.mxu0
    %2537 = vmatprep.subr.bf16.mxu0 %v1297
    %2538 = vmatpush1.bf16.msra.mxu0 %v1296
    %2539 = vmatprep.subr.bf16.mxu0 %v1289
    %2540 = vmatpush1.bf16.msra.mxu0 %v1288
    %2541 = vmatprep.subr.bf16.mxu0 %v1281
    %2542 = vmatpush1.bf16.msra.mxu0 %v1280
    %2543 = vmatprep.subr.bf16.mxu0 %v1273
    %2544 = vmatpush1.bf16.msra.mxu0 %v1272
    %2545 = vmatprep.subr.bf16.mxu0 %v1265
    %2546 = vmatpush1.bf16.msra.mxu0 %v1264
    %2547 = vmatprep.subr.bf16.mxu0 %v1257
    %2548 = vmatpush1.bf16.msra.mxu0 %v1256
    %2549 = vmatprep.subr.bf16.mxu0 %v1249
    %2550 = vmatpush1.bf16.msra.mxu0 %v1248
    %2551 = vmatprep.subr.bf16.mxu0 %v1241
    %2552 = vmatpush1.bf16.msra.mxu0 %v1240
    %2553 = vmatprep.subr.bf16.mxu0 %v1361
    %2554 = vmatpush2.bf16.msra.mxu0 %v1360
    %2555 = vmatprep.subr.bf16.mxu0 %v1353
    %2556 = vmatpush2.bf16.msra.mxu0 %v1352
    %2557 = vmatprep.subr.bf16.mxu0 %v1345
    %2558 = vmatpush2.bf16.msra.mxu0 %v1344
    %2559 = vmatprep.subr.bf16.mxu0 %v1337
    %2560 = vmatpush2.bf16.msra.mxu0 %v1336
    %2561 = vmatprep.subr.bf16.mxu0 %v1329
    %2562 = vmatpush2.bf16.msra.mxu0 %v1328
    %2563 = vmatprep.subr.bf16.mxu0 %v1321
    %2564 = vmatpush2.bf16.msra.mxu0 %v1320
    %2565 = vmatprep.subr.bf16.mxu0 %v1313
    %2566 = vmatpush2.bf16.msra.mxu0 %v1312
    %2567 = vmatprep.subr.bf16.mxu0 %v1305
    %2568 = vmatpush2.bf16.msra.mxu0 %v1304
    %2569 = vmatprep.mubr.bf16.mxu0 %v2413
    %2570 = vmatmul.mubr.bf16.gmra.mxu0 %v2412
    %v2571 = vpop.f32.mrf.mxu0
    %v2572 = vadd.f32 0.0, %v2571
    %v2573 = vpop.f32.mrf.mxu0
    %v2574 = vadd.f32 0.0, %v2573
    %v2575 = vpop.f32.mrf.mxu0
    %v2576 = vpop.f32.mrf.mxu0
    %2577 = vdwg.mxu0
    %v2578 = vadd.f32 %v2404, %v2449
    %v2579 = vadd.f32 %v2405, %v2451
    %v2580 = vadd.f32 %v2406, %v2490
    %v2581 = vadd.f32 %v2407, %v2492
    %v2582 = vadd.f32 %v2408, %v2531
    %v2583 = vadd.f32 %v2409, %v2533
    %v2584 = vadd.f32 %v2410, %v2572
    %v2585 = vadd.f32 %v2411, %v2574
    %v2586 = vxor.u32 %v2578, 2147483648
    %v2587 = vxor.u32 %v2579, 2147483648
    %v2588 = vmul.f32 %v2586, 1.442695
    %v2589 = vpow.pop %v2588
    %v2590 = vmul.f32 %v2587, 1.442695
    %v2591 = vpow.pop %v2590
    %v2592 = vadd.f32 %v2589, 1.0
    %v2593 = vadd.f32 %v2591, 1.0
    %v2594 = vrcp.pop %v2592
    %v2595 = vmul.f32 1.0, %v2594
    %v2596 = vrcp.pop %v2593
    %v2597 = vmul.f32 1.0, %v2596
    %v2598 = vxor.u32 %v2580, 2147483648
    %v2599 = vxor.u32 %v2581, 2147483648
    %v2600 = vmul.f32 %v2598, 1.442695
    %v2601 = vpow.pop %v2600
    %v2602 = vmul.f32 %v2599, 1.442695
    %v2603 = vpow.pop %v2602
    %v2604 = vadd.f32 %v2601, 1.0
    %v2605 = vadd.f32 %v2603, 1.0
    %v2606 = vrcp.pop %v2604
    %v2607 = vmul.f32 1.0, %v2606
    %v2608 = vrcp.pop %v2605
    %v2609 = vmul.f32 1.0, %v2608
    %v2610 = vtanh.pop %v2582
    %v2611 = vtanh.pop %v2583
    %v2612 = vxor.u32 %v2584, 2147483648
    %v2613 = vxor.u32 %v2585, 2147483648
    %v2614 = vmul.f32 %v2612, 1.442695
    %v2615 = vpow.pop %v2614
    %v2616 = vmul.f32 %v2613, 1.442695
    %v2617 = vpow.pop %v2616
    %v2618 = vadd.f32 %v2615, 1.0
    %v2619 = vadd.f32 %v2617, 1.0
    %v2620 = vrcp.pop %v2618
    %v2621 = vmul.f32 1.0, %v2620
    %v2622 = vrcp.pop %v2619
    %v2623 = vmul.f32 1.0, %v2622
    %v2624 = vmul.f32 %v2607, %v2397
    %v2625 = vmul.f32 %v2609, %v2398
    %v2626 = vmul.f32 %v2595, %v2610
    %v2627 = vmul.f32 %v2597, %v2611
    %v2628 = vadd.f32 %v2624, %v2626
    %v2629 = vadd.f32 %v2625, %v2627
    %v2630 = vtanh.pop %v2628
    %v2631 = vtanh.pop %v2629
    %v2632 = vmul.f32 %v2621, %v2630
    %v2633 = vmul.f32 %v2623, %v2631
    %s2634 = scalar_lea.vmem [#allocation2], 384
    %v2635 = vld [vmem:[%s2634] sm:$0xff]
    %v2636 = vld [vmem:[%s2634 + $0x8] sm:$0xff]
    %v2637 = vld [vmem:[%s2634 + $0x10] sm:$0xff]
    %v2638 = vld [vmem:[%s2634 + $0x18] sm:$0xff]
    %v2639 = vld [vmem:[%s2634 + $0x20] sm:$0xff]
    %v2640 = vld [vmem:[%s2634 + $0x28] sm:$0xff]
    %v2641 = vld [vmem:[%s2634 + $0x30] sm:$0xff]
    %v2642 = vld [vmem:[%s2634 + $0x38] sm:$0xff]
    %v2643 = vpack.c.bf16 %v2632, %v2632
    %v2644 = vpack.c.bf16 %v2633, %v2633
    %2645 = vmatprep.subr.bf16.mxu0 %v1291
    %2646 = vmatpush1.bf16.msra.mxu0 %v1290
    %2647 = vmatprep.subr.bf16.mxu0 %v1283
    %2648 = vmatpush1.bf16.msra.mxu0 %v1282
    %2649 = vmatprep.subr.bf16.mxu0 %v1275
    %2650 = vmatpush1.bf16.msra.mxu0 %v1274
    %2651 = vmatprep.subr.bf16.mxu0 %v1267
    %2652 = vmatpush1.bf16.msra.mxu0 %v1266
    %2653 = vmatprep.subr.bf16.mxu0 %v1259
    %2654 = vmatpush1.bf16.msra.mxu0 %v1258
    %2655 = vmatprep.subr.bf16.mxu0 %v1251
    %2656 = vmatpush1.bf16.msra.mxu0 %v1250
    %2657 = vmatprep.subr.bf16.mxu0 %v1243
    %2658 = vmatpush1.bf16.msra.mxu0 %v1242
    %2659 = vmatprep.subr.bf16.mxu0 %v1235
    %2660 = vmatpush1.bf16.msra.mxu0 %v1234
    %2661 = vmatprep.subr.bf16.mxu0 %v1355
    %2662 = vmatpush2.bf16.msra.mxu0 %v1354
    %2663 = vmatprep.subr.bf16.mxu0 %v1347
    %2664 = vmatpush2.bf16.msra.mxu0 %v1346
    %2665 = vmatprep.subr.bf16.mxu0 %v1339
    %2666 = vmatpush2.bf16.msra.mxu0 %v1338
    %2667 = vmatprep.subr.bf16.mxu0 %v1331
    %2668 = vmatpush2.bf16.msra.mxu0 %v1330
    %2669 = vmatprep.subr.bf16.mxu0 %v1323
    %2670 = vmatpush2.bf16.msra.mxu0 %v1322
    %2671 = vmatprep.subr.bf16.mxu0 %v1315
    %2672 = vmatpush2.bf16.msra.mxu0 %v1314
    %2673 = vmatprep.subr.bf16.mxu0 %v1307
    %2674 = vmatpush2.bf16.msra.mxu0 %v1306
    %2675 = vmatprep.subr.bf16.mxu0 %v1299
    %2676 = vmatpush2.bf16.msra.mxu0 %v1298
    %2677 = vmatprep.mubr.bf16.mxu0 %v2644
    %2678 = vmatmul.mubr.bf16.gmra.mxu0 %v2643
    %v2679 = vpop.f32.mrf.mxu0
    %v2680 = vadd.f32 0.0, %v2679
    %v2681 = vpop.f32.mrf.mxu0
    %v2682 = vadd.f32 0.0, %v2681
    %v2683 = vpop.f32.mrf.mxu0
    %v2684 = vpop.f32.mrf.mxu0
    %2685 = vdwg.mxu0
    %2686 = vmatprep.subr.bf16.mxu0 %v1293
    %2687 = vmatpush1.bf16.msra.mxu0 %v1292
    %2688 = vmatprep.subr.bf16.mxu0 %v1285
    %2689 = vmatpush1.bf16.msra.mxu0 %v1284
    %2690 = vmatprep.subr.bf16.mxu0 %v1277
    %2691 = vmatpush1.bf16.msra.mxu0 %v1276
    %2692 = vmatprep.subr.bf16.mxu0 %v1269
    %2693 = vmatpush1.bf16.msra.mxu0 %v1268
    %2694 = vmatprep.subr.bf16.mxu0 %v1261
    %2695 = vmatpush1.bf16.msra.mxu0 %v1260
    %2696 = vmatprep.subr.bf16.mxu0 %v1253
    %2697 = vmatpush1.bf16.msra.mxu0 %v1252
    %2698 = vmatprep.subr.bf16.mxu0 %v1245
    %2699 = vmatpush1.bf16.msra.mxu0 %v1244
    %2700 = vmatprep.subr.bf16.mxu0 %v1237
    %2701 = vmatpush1.bf16.msra.mxu0 %v1236
    %2702 = vmatprep.subr.bf16.mxu0 %v1357
    %2703 = vmatpush2.bf16.msra.mxu0 %v1356
    %2704 = vmatprep.subr.bf16.mxu0 %v1349
    %2705 = vmatpush2.bf16.msra.mxu0 %v1348
    %2706 = vmatprep.subr.bf16.mxu0 %v1341
    %2707 = vmatpush2.bf16.msra.mxu0 %v1340
    %2708 = vmatprep.subr.bf16.mxu0 %v1333
    %2709 = vmatpush2.bf16.msra.mxu0 %v1332
    %2710 = vmatprep.subr.bf16.mxu0 %v1325
    %2711 = vmatpush2.bf16.msra.mxu0 %v1324
    %2712 = vmatprep.subr.bf16.mxu0 %v1317
    %2713 = vmatpush2.bf16.msra.mxu0 %v1316
    %2714 = vmatprep.subr.bf16.mxu0 %v1309
    %2715 = vmatpush2.bf16.msra.mxu0 %v1308
    %2716 = vmatprep.subr.bf16.mxu0 %v1301
    %2717 = vmatpush2.bf16.msra.mxu0 %v1300
    %2718 = vmatprep.mubr.bf16.mxu0 %v2644
    %2719 = vmatmul.mubr.bf16.gmra.mxu0 %v2643
    %v2720 = vpop.f32.mrf.mxu0
    %v2721 = vadd.f32 0.0, %v2720
    %v2722 = vpop.f32.mrf.mxu0
    %v2723 = vadd.f32 0.0, %v2722
    %v2724 = vpop.f32.mrf.mxu0
    %v2725 = vpop.f32.mrf.mxu0
    %2726 = vdwg.mxu0
    %2727 = vmatprep.subr.bf16.mxu0 %v1295
    %2728 = vmatpush1.bf16.msra.mxu0 %v1294
    %2729 = vmatprep.subr.bf16.mxu0 %v1287
    %2730 = vmatpush1.bf16.msra.mxu0 %v1286
    %2731 = vmatprep.subr.bf16.mxu0 %v1279
    %2732 = vmatpush1.bf16.msra.mxu0 %v1278
    %2733 = vmatprep.subr.bf16.mxu0 %v1271
    %2734 = vmatpush1.bf16.msra.mxu0 %v1270
    %2735 = vmatprep.subr.bf16.mxu0 %v1263
    %2736 = vmatpush1.bf16.msra.mxu0 %v1262
    %2737 = vmatprep.subr.bf16.mxu0 %v1255
    %2738 = vmatpush1.bf16.msra.mxu0 %v1254
    %2739 = vmatprep.subr.bf16.mxu0 %v1247
    %2740 = vmatpush1.bf16.msra.mxu0 %v1246
    %2741 = vmatprep.subr.bf16.mxu0 %v1239
    %2742 = vmatpush1.bf16.msra.mxu0 %v1238
    %2743 = vmatprep.subr.bf16.mxu0 %v1359
    %2744 = vmatpush2.bf16.msra.mxu0 %v1358
    %2745 = vmatprep.subr.bf16.mxu0 %v1351
    %2746 = vmatpush2.bf16.msra.mxu0 %v1350
    %2747 = vmatprep.subr.bf16.mxu0 %v1343
    %2748 = vmatpush2.bf16.msra.mxu0 %v1342
    %2749 = vmatprep.subr.bf16.mxu0 %v1335
    %2750 = vmatpush2.bf16.msra.mxu0 %v1334
    %2751 = vmatprep.subr.bf16.mxu0 %v1327
    %2752 = vmatpush2.bf16.msra.mxu0 %v1326
    %2753 = vmatprep.subr.bf16.mxu0 %v1319
    %2754 = vmatpush2.bf16.msra.mxu0 %v1318
    %2755 = vmatprep.subr.bf16.mxu0 %v1311
    %2756 = vmatpush2.bf16.msra.mxu0 %v1310
    %2757 = vmatprep.subr.bf16.mxu0 %v1303
    %2758 = vmatpush2.bf16.msra.mxu0 %v1302
    %2759 = vmatprep.mubr.bf16.mxu0 %v2644
    %2760 = vmatmul.mubr.bf16.gmra.mxu0 %v2643
    %v2761 = vpop.f32.mrf.mxu0
    %v2762 = vadd.f32 0.0, %v2761
    %v2763 = vpop.f32.mrf.mxu0
    %v2764 = vadd.f32 0.0, %v2763
    %v2765 = vpop.f32.mrf.mxu0
    %v2766 = vpop.f32.mrf.mxu0
    %2767 = vdwg.mxu0
    %2768 = vmatprep.subr.bf16.mxu0 %v1297
    %2769 = vmatpush1.bf16.msra.mxu0 %v1296
    %2770 = vmatprep.subr.bf16.mxu0 %v1289
    %2771 = vmatpush1.bf16.msra.mxu0 %v1288
    %2772 = vmatprep.subr.bf16.mxu0 %v1281
    %2773 = vmatpush1.bf16.msra.mxu0 %v1280
    %2774 = vmatprep.subr.bf16.mxu0 %v1273
    %2775 = vmatpush1.bf16.msra.mxu0 %v1272
    %2776 = vmatprep.subr.bf16.mxu0 %v1265
    %2777 = vmatpush1.bf16.msra.mxu0 %v1264
    %2778 = vmatprep.subr.bf16.mxu0 %v1257
    %2779 = vmatpush1.bf16.msra.mxu0 %v1256
    %2780 = vmatprep.subr.bf16.mxu0 %v1249
    %2781 = vmatpush1.bf16.msra.mxu0 %v1248
    %2782 = vmatprep.subr.bf16.mxu0 %v1241
    %2783 = vmatpush1.bf16.msra.mxu0 %v1240
    %2784 = vmatprep.subr.bf16.mxu0 %v1361
    %2785 = vmatpush2.bf16.msra.mxu0 %v1360
    %2786 = vmatprep.subr.bf16.mxu0 %v1353
    %2787 = vmatpush2.bf16.msra.mxu0 %v1352
    %2788 = vmatprep.subr.bf16.mxu0 %v1345
    %2789 = vmatpush2.bf16.msra.mxu0 %v1344
    %2790 = vmatprep.subr.bf16.mxu0 %v1337
    %2791 = vmatpush2.bf16.msra.mxu0 %v1336
    %2792 = vmatprep.subr.bf16.mxu0 %v1329
    %2793 = vmatpush2.bf16.msra.mxu0 %v1328
    %2794 = vmatprep.subr.bf16.mxu0 %v1321
    %2795 = vmatpush2.bf16.msra.mxu0 %v1320
    %2796 = vmatprep.subr.bf16.mxu0 %v1313
    %2797 = vmatpush2.bf16.msra.mxu0 %v1312
    %2798 = vmatprep.subr.bf16.mxu0 %v1305
    %2799 = vmatpush2.bf16.msra.mxu0 %v1304
    %2800 = vmatprep.mubr.bf16.mxu0 %v2644
    %2801 = vmatmul.mubr.bf16.gmra.mxu0 %v2643
    %v2802 = vpop.f32.mrf.mxu0
    %v2803 = vadd.f32 0.0, %v2802
    %v2804 = vpop.f32.mrf.mxu0
    %v2805 = vadd.f32 0.0, %v2804
    %v2806 = vpop.f32.mrf.mxu0
    %v2807 = vpop.f32.mrf.mxu0
    %2808 = vdwg.mxu0
    %v2809 = vadd.f32 %v2635, %v2680
    %v2810 = vadd.f32 %v2636, %v2682
    %v2811 = vadd.f32 %v2637, %v2721
    %v2812 = vadd.f32 %v2638, %v2723
    %v2813 = vadd.f32 %v2639, %v2762
    %v2814 = vadd.f32 %v2640, %v2764
    %v2815 = vadd.f32 %v2641, %v2803
    %v2816 = vadd.f32 %v2642, %v2805
    %v2817 = vxor.u32 %v2809, 2147483648
    %v2818 = vxor.u32 %v2810, 2147483648
    %v2819 = vmul.f32 %v2817, 1.442695
    %v2820 = vpow.pop %v2819
    %v2821 = vmul.f32 %v2818, 1.442695
    %v2822 = vpow.pop %v2821
    %v2823 = vadd.f32 %v2820, 1.0
    %v2824 = vadd.f32 %v2822, 1.0
    %v2825 = vrcp.pop %v2823
    %v2826 = vmul.f32 1.0, %v2825
    %v2827 = vrcp.pop %v2824
    %v2828 = vmul.f32 1.0, %v2827
    %v2829 = vxor.u32 %v2811, 2147483648
    %v2830 = vxor.u32 %v2812, 2147483648
    %v2831 = vmul.f32 %v2829, 1.442695
    %v2832 = vpow.pop %v2831
    %v2833 = vmul.f32 %v2830, 1.442695
    %v2834 = vpow.pop %v2833
    %v2835 = vadd.f32 %v2832, 1.0
    %v2836 = vadd.f32 %v2834, 1.0
    %v2837 = vrcp.pop %v2835
    %v2838 = vmul.f32 1.0, %v2837
    %v2839 = vrcp.pop %v2836
    %v2840 = vmul.f32 1.0, %v2839
    %v2841 = vtanh.pop %v2813
    %v2842 = vtanh.pop %v2814
    %v2843 = vxor.u32 %v2815, 2147483648
    %v2844 = vxor.u32 %v2816, 2147483648
    %v2845 = vmul.f32 %v2843, 1.442695
    %v2846 = vpow.pop %v2845
    %v2847 = vmul.f32 %v2844, 1.442695
    %v2848 = vpow.pop %v2847
    %v2849 = vadd.f32 %v2846, 1.0
    %v2850 = vadd.f32 %v2848, 1.0
    %v2851 = vrcp.pop %v2849
    %v2852 = vmul.f32 1.0, %v2851
    %v2853 = vrcp.pop %v2850
    %v2854 = vmul.f32 1.0, %v2853
    %v2855 = vmul.f32 %v2838, %v2628
    %v2856 = vmul.f32 %v2840, %v2629
    %v2857 = vmul.f32 %v2826, %v2841
    %v2858 = vmul.f32 %v2828, %v2842
    %v2859 = vadd.f32 %v2855, %v2857
    %v2860 = vadd.f32 %v2856, %v2858
    %v2861 = vtanh.pop %v2859
    %v2862 = vtanh.pop %v2860
    %v2863 = vmul.f32 %v2852, %v2861
    %v2864 = vmul.f32 %v2854, %v2862
    %s2865 = scalar_lea.vmem [#allocation2], 448
    %v2866 = vld [vmem:[%s2865] sm:$0xff]
    %v2867 = vld [vmem:[%s2865 + $0x8] sm:$0xff]
    %v2868 = vld [vmem:[%s2865 + $0x10] sm:$0xff]
    %v2869 = vld [vmem:[%s2865 + $0x18] sm:$0xff]
    %v2870 = vld [vmem:[%s2865 + $0x20] sm:$0xff]
    %v2871 = vld [vmem:[%s2865 + $0x28] sm:$0xff]
    %v2872 = vld [vmem:[%s2865 + $0x30] sm:$0xff]
    %v2873 = vld [vmem:[%s2865 + $0x38] sm:$0xff]
    %v2874 = vpack.c.bf16 %v2863, %v2863
    %v2875 = vpack.c.bf16 %v2864, %v2864
    %2876 = vmatprep.subr.bf16.mxu0 %v1291
    %2877 = vmatpush1.bf16.msra.mxu0 %v1290
    %2878 = vmatprep.subr.bf16.mxu0 %v1283
    %2879 = vmatpush1.bf16.msra.mxu0 %v1282
    %2880 = vmatprep.subr.bf16.mxu0 %v1275
    %2881 = vmatpush1.bf16.msra.mxu0 %v1274
    %2882 = vmatprep.subr.bf16.mxu0 %v1267
    %2883 = vmatpush1.bf16.msra.mxu0 %v1266
    %2884 = vmatprep.subr.bf16.mxu0 %v1259
    %2885 = vmatpush1.bf16.msra.mxu0 %v1258
    %2886 = vmatprep.subr.bf16.mxu0 %v1251
    %2887 = vmatpush1.bf16.msra.mxu0 %v1250
    %2888 = vmatprep.subr.bf16.mxu0 %v1243
    %2889 = vmatpush1.bf16.msra.mxu0 %v1242
    %2890 = vmatprep.subr.bf16.mxu0 %v1235
    %2891 = vmatpush1.bf16.msra.mxu0 %v1234
    %2892 = vmatprep.subr.bf16.mxu0 %v1355
    %2893 = vmatpush2.bf16.msra.mxu0 %v1354
    %2894 = vmatprep.subr.bf16.mxu0 %v1347
    %2895 = vmatpush2.bf16.msra.mxu0 %v1346
    %2896 = vmatprep.subr.bf16.mxu0 %v1339
    %2897 = vmatpush2.bf16.msra.mxu0 %v1338
    %2898 = vmatprep.subr.bf16.mxu0 %v1331
    %2899 = vmatpush2.bf16.msra.mxu0 %v1330
    %2900 = vmatprep.subr.bf16.mxu0 %v1323
    %2901 = vmatpush2.bf16.msra.mxu0 %v1322
    %2902 = vmatprep.subr.bf16.mxu0 %v1315
    %2903 = vmatpush2.bf16.msra.mxu0 %v1314
    %2904 = vmatprep.subr.bf16.mxu0 %v1307
    %2905 = vmatpush2.bf16.msra.mxu0 %v1306
    %2906 = vmatprep.subr.bf16.mxu0 %v1299
    %2907 = vmatpush2.bf16.msra.mxu0 %v1298
    %2908 = vmatprep.mubr.bf16.mxu0 %v2875
    %2909 = vmatmul.mubr.bf16.gmra.mxu0 %v2874
    %v2910 = vpop.f32.mrf.mxu0
    %v2911 = vadd.f32 0.0, %v2910
    %v2912 = vpop.f32.mrf.mxu0
    %v2913 = vadd.f32 0.0, %v2912
    %v2914 = vpop.f32.mrf.mxu0
    %v2915 = vpop.f32.mrf.mxu0
    %2916 = vdwg.mxu0
    %2917 = vmatprep.subr.bf16.mxu0 %v1293
    %2918 = vmatpush1.bf16.msra.mxu0 %v1292
    %2919 = vmatprep.subr.bf16.mxu0 %v1285
    %2920 = vmatpush1.bf16.msra.mxu0 %v1284
    %2921 = vmatprep.subr.bf16.mxu0 %v1277
    %2922 = vmatpush1.bf16.msra.mxu0 %v1276
    %2923 = vmatprep.subr.bf16.mxu0 %v1269
    %2924 = vmatpush1.bf16.msra.mxu0 %v1268
    %2925 = vmatprep.subr.bf16.mxu0 %v1261
    %2926 = vmatpush1.bf16.msra.mxu0 %v1260
    %2927 = vmatprep.subr.bf16.mxu0 %v1253
    %2928 = vmatpush1.bf16.msra.mxu0 %v1252
    %2929 = vmatprep.subr.bf16.mxu0 %v1245
    %2930 = vmatpush1.bf16.msra.mxu0 %v1244
    %2931 = vmatprep.subr.bf16.mxu0 %v1237
    %2932 = vmatpush1.bf16.msra.mxu0 %v1236
    %2933 = vmatprep.subr.bf16.mxu0 %v1357
    %2934 = vmatpush2.bf16.msra.mxu0 %v1356
    %2935 = vmatprep.subr.bf16.mxu0 %v1349
    %2936 = vmatpush2.bf16.msra.mxu0 %v1348
    %2937 = vmatprep.subr.bf16.mxu0 %v1341
    %2938 = vmatpush2.bf16.msra.mxu0 %v1340
    %2939 = vmatprep.subr.bf16.mxu0 %v1333
    %2940 = vmatpush2.bf16.msra.mxu0 %v1332
    %2941 = vmatprep.subr.bf16.mxu0 %v1325
    %2942 = vmatpush2.bf16.msra.mxu0 %v1324
    %2943 = vmatprep.subr.bf16.mxu0 %v1317
    %2944 = vmatpush2.bf16.msra.mxu0 %v1316
    %2945 = vmatprep.subr.bf16.mxu0 %v1309
    %2946 = vmatpush2.bf16.msra.mxu0 %v1308
    %2947 = vmatprep.subr.bf16.mxu0 %v1301
    %2948 = vmatpush2.bf16.msra.mxu0 %v1300
    %2949 = vmatprep.mubr.bf16.mxu0 %v2875
    %2950 = vmatmul.mubr.bf16.gmra.mxu0 %v2874
    %v2951 = vpop.f32.mrf.mxu0
    %v2952 = vadd.f32 0.0, %v2951
    %v2953 = vpop.f32.mrf.mxu0
    %v2954 = vadd.f32 0.0, %v2953
    %v2955 = vpop.f32.mrf.mxu0
    %v2956 = vpop.f32.mrf.mxu0
    %2957 = vdwg.mxu0
    %2958 = vmatprep.subr.bf16.mxu0 %v1295
    %2959 = vmatpush1.bf16.msra.mxu0 %v1294
    %2960 = vmatprep.subr.bf16.mxu0 %v1287
    %2961 = vmatpush1.bf16.msra.mxu0 %v1286
    %2962 = vmatprep.subr.bf16.mxu0 %v1279
    %2963 = vmatpush1.bf16.msra.mxu0 %v1278
    %2964 = vmatprep.subr.bf16.mxu0 %v1271
    %2965 = vmatpush1.bf16.msra.mxu0 %v1270
    %2966 = vmatprep.subr.bf16.mxu0 %v1263
    %2967 = vmatpush1.bf16.msra.mxu0 %v1262
    %2968 = vmatprep.subr.bf16.mxu0 %v1255
    %2969 = vmatpush1.bf16.msra.mxu0 %v1254
    %2970 = vmatprep.subr.bf16.mxu0 %v1247
    %2971 = vmatpush1.bf16.msra.mxu0 %v1246
    %2972 = vmatprep.subr.bf16.mxu0 %v1239
    %2973 = vmatpush1.bf16.msra.mxu0 %v1238
    %2974 = vmatprep.subr.bf16.mxu0 %v1359
    %2975 = vmatpush2.bf16.msra.mxu0 %v1358
    %2976 = vmatprep.subr.bf16.mxu0 %v1351
    %2977 = vmatpush2.bf16.msra.mxu0 %v1350
    %2978 = vmatprep.subr.bf16.mxu0 %v1343
    %2979 = vmatpush2.bf16.msra.mxu0 %v1342
    %2980 = vmatprep.subr.bf16.mxu0 %v1335
    %2981 = vmatpush2.bf16.msra.mxu0 %v1334
    %2982 = vmatprep.subr.bf16.mxu0 %v1327
    %2983 = vmatpush2.bf16.msra.mxu0 %v1326
    %2984 = vmatprep.subr.bf16.mxu0 %v1319
    %2985 = vmatpush2.bf16.msra.mxu0 %v1318
    %2986 = vmatprep.subr.bf16.mxu0 %v1311
    %2987 = vmatpush2.bf16.msra.mxu0 %v1310
    %2988 = vmatprep.subr.bf16.mxu0 %v1303
    %2989 = vmatpush2.bf16.msra.mxu0 %v1302
    %2990 = vmatprep.mubr.bf16.mxu0 %v2875
    %2991 = vmatmul.mubr.bf16.gmra.mxu0 %v2874
    %v2992 = vpop.f32.mrf.mxu0
    %v2993 = vadd.f32 0.0, %v2992
    %v2994 = vpop.f32.mrf.mxu0
    %v2995 = vadd.f32 0.0, %v2994
    %v2996 = vpop.f32.mrf.mxu0
    %v2997 = vpop.f32.mrf.mxu0
    %2998 = vdwg.mxu0
    %2999 = vmatprep.subr.bf16.mxu0 %v1297
    %3000 = vmatpush1.bf16.msra.mxu0 %v1296
    %3001 = vmatprep.subr.bf16.mxu0 %v1289
    %3002 = vmatpush1.bf16.msra.mxu0 %v1288
    %3003 = vmatprep.subr.bf16.mxu0 %v1281
    %3004 = vmatpush1.bf16.msra.mxu0 %v1280
    %3005 = vmatprep.subr.bf16.mxu0 %v1273
    %3006 = vmatpush1.bf16.msra.mxu0 %v1272
    %3007 = vmatprep.subr.bf16.mxu0 %v1265
    %3008 = vmatpush1.bf16.msra.mxu0 %v1264
    %3009 = vmatprep.subr.bf16.mxu0 %v1257
    %3010 = vmatpush1.bf16.msra.mxu0 %v1256
    %3011 = vmatprep.subr.bf16.mxu0 %v1249
    %3012 = vmatpush1.bf16.msra.mxu0 %v1248
    %3013 = vmatprep.subr.bf16.mxu0 %v1241
    %3014 = vmatpush1.bf16.msra.mxu0 %v1240
    %3015 = vmatprep.subr.bf16.mxu0 %v1361
    %3016 = vmatpush2.bf16.msra.mxu0 %v1360
    %3017 = vmatprep.subr.bf16.mxu0 %v1353
    %3018 = vmatpush2.bf16.msra.mxu0 %v1352
    %3019 = vmatprep.subr.bf16.mxu0 %v1345
    %3020 = vmatpush2.bf16.msra.mxu0 %v1344
    %3021 = vmatprep.subr.bf16.mxu0 %v1337
    %3022 = vmatpush2.bf16.msra.mxu0 %v1336
    %3023 = vmatprep.subr.bf16.mxu0 %v1329
    %3024 = vmatpush2.bf16.msra.mxu0 %v1328
    %3025 = vmatprep.subr.bf16.mxu0 %v1321
    %3026 = vmatpush2.bf16.msra.mxu0 %v1320
    %3027 = vmatprep.subr.bf16.mxu0 %v1313
    %3028 = vmatpush2.bf16.msra.mxu0 %v1312
    %3029 = vmatprep.subr.bf16.mxu0 %v1305
    %3030 = vmatpush2.bf16.msra.mxu0 %v1304
    %3031 = vmatprep.mubr.bf16.mxu0 %v2875
    %3032 = vmatmul.mubr.bf16.gmra.mxu0 %v2874
    %v3033 = vpop.f32.mrf.mxu0
    %v3034 = vadd.f32 0.0, %v3033
    %v3035 = vpop.f32.mrf.mxu0
    %v3036 = vadd.f32 0.0, %v3035
    %v3037 = vpop.f32.mrf.mxu0
    %v3038 = vpop.f32.mrf.mxu0
    %3039 = vdwg.mxu0
    %v3040 = vadd.f32 %v2866, %v2911
    %v3041 = vadd.f32 %v2867, %v2913
    %v3042 = vadd.f32 %v2868, %v2952
    %v3043 = vadd.f32 %v2869, %v2954
    %v3044 = vadd.f32 %v2870, %v2993
    %v3045 = vadd.f32 %v2871, %v2995
    %v3046 = vadd.f32 %v2872, %v3034
    %v3047 = vadd.f32 %v2873, %v3036
    %v3048 = vxor.u32 %v3040, 2147483648
    %v3049 = vxor.u32 %v3041, 2147483648
    %v3050 = vmul.f32 %v3048, 1.442695
    %v3051 = vpow.pop %v3050
    %v3052 = vmul.f32 %v3049, 1.442695
    %v3053 = vpow.pop %v3052
    %v3054 = vadd.f32 %v3051, 1.0
    %v3055 = vadd.f32 %v3053, 1.0
    %v3056 = vrcp.pop %v3054
    %v3057 = vmul.f32 1.0, %v3056
    %v3058 = vrcp.pop %v3055
    %v3059 = vmul.f32 1.0, %v3058
    %v3060 = vxor.u32 %v3042, 2147483648
    %v3061 = vxor.u32 %v3043, 2147483648
    %v3062 = vmul.f32 %v3060, 1.442695
    %v3063 = vpow.pop %v3062
    %v3064 = vmul.f32 %v3061, 1.442695
    %v3065 = vpow.pop %v3064
    %v3066 = vadd.f32 %v3063, 1.0
    %v3067 = vadd.f32 %v3065, 1.0
    %v3068 = vrcp.pop %v3066
    %v3069 = vmul.f32 1.0, %v3068
    %v3070 = vrcp.pop %v3067
    %v3071 = vmul.f32 1.0, %v3070
    %v3072 = vtanh.pop %v3044
    %v3073 = vtanh.pop %v3045
    %v3074 = vxor.u32 %v3046, 2147483648
    %v3075 = vxor.u32 %v3047, 2147483648
    %v3076 = vmul.f32 %v3074, 1.442695
    %v3077 = vpow.pop %v3076
    %v3078 = vmul.f32 %v3075, 1.442695
    %v3079 = vpow.pop %v3078
    %v3080 = vadd.f32 %v3077, 1.0
    %v3081 = vadd.f32 %v3079, 1.0
    %v3082 = vrcp.pop %v3080
    %v3083 = vmul.f32 1.0, %v3082
    %v3084 = vrcp.pop %v3081
    %v3085 = vmul.f32 1.0, %v3084
    %v3086 = vmul.f32 %v3069, %v2859
    %v3087 = vmul.f32 %v3071, %v2860
    %v3088 = vmul.f32 %v3057, %v3072
    %v3089 = vmul.f32 %v3059, %v3073
    %v3090 = vadd.f32 %v3086, %v3088
    %v3091 = vadd.f32 %v3087, %v3089
    %v3092 = vtanh.pop %v3090
    %v3093 = vtanh.pop %v3091
    %v3094 = vmul.f32 %v3083, %v3092
    %v3095 = vmul.f32 %v3085, %v3093
    %s3096 = scalar_lea.vmem %s0, 56
    %v3097 = vld [vmem:[%s3096] sm:$0xff]
    %v3098 = vld [vmem:[%s4] sm:$0xff]
    %v3099 = vld [vmem:[%s4 + $0x8] sm:$0xff]
    %v3100 = vld [vmem:[%s4 + $0x10] sm:$0xff]
    %v3101 = vld [vmem:[%s4 + $0x18] sm:$0xff]
    %v3102 = vld [vmem:[%s4 + $0x20] sm:$0xff]
    %v3103 = vld [vmem:[%s4 + $0x28] sm:$0xff]
    %v3104 = vld [vmem:[%s4 + $0x30] sm:$0xff]
    %v3105 = vld [vmem:[%s4 + $0x38] sm:$0xff]
    %v3106 = vld [vmem:[%s4 + $0x40] sm:$0xff]
    %v3107 = vld [vmem:[%s4 + $0x48] sm:$0xff]
    %v3108 = vld [vmem:[%s4 + $0x50] sm:$0xff]
    %v3109 = vld [vmem:[%s4 + $0x58] sm:$0xff]
    %v3110 = vld [vmem:[%s4 + $0x60] sm:$0xff]
    %v3111 = vld [vmem:[%s4 + $0x68] sm:$0xff]
    %v3112 = vld [vmem:[%s4 + $0x70] sm:$0xff]
    %v3113 = vld [vmem:[%s4 + $0x78] sm:$0xff]
    %v3114 = vld [vmem:[%s5] sm:$0xff]
    %v3116 = vlaneseq
    %v3117 = vshrl.u32 %v3116, 7
    %v3118 = vsub.s32 0, %v3117
    %v3119 = vrot.slane %v3114, %v3118
    %v3120 = vlaneseq
    %v3121 = vshrl.u32 %v3120, 7
    %v3122 = vsub.s32 1, %v3121
    %v3123 = vrot.slane %v3114, %v3122
    %v3124 = vlaneseq
    %v3125 = vshrl.u32 %v3124, 7
    %v3126 = vsub.s32 2, %v3125
    %v3127 = vrot.slane %v3114, %v3126
    %v3128 = vlaneseq
    %v3129 = vshrl.u32 %v3128, 7
    %v3130 = vsub.s32 3, %v3129
    %v3131 = vrot.slane %v3114, %v3130
    %v3132 = vlaneseq
    %v3133 = vshrl.u32 %v3132, 7
    %v3134 = vsub.s32 4, %v3133
    %v3135 = vrot.slane %v3114, %v3134
    %v3136 = vlaneseq
    %v3137 = vshrl.u32 %v3136, 7
    %v3138 = vsub.s32 5, %v3137
    %v3139 = vrot.slane %v3114, %v3138
    %v3140 = vlaneseq
    %v3141 = vshrl.u32 %v3140, 7
    %v3142 = vsub.s32 6, %v3141
    %v3143 = vrot.slane %v3114, %v3142
    %v3144 = vlaneseq
    %v3145 = vshrl.u32 %v3144, 7
    %v3146 = vsub.s32 7, %v3145
    %v3147 = vrot.slane %v3114, %v3146
    %v3157 = vsel %vm114, %v3097, 0
    %3159 = vmatprep.subr.mxu0 0.0
    %3160 = vmatpush1.msra.mxu0 0.0
    %3161 = vmatprep.subr.mxu0 0.0
    %3162 = vmatpush1.msra.mxu0 0.0
    %3163 = vmatprep.subr.mxu0 0.0
    %3164 = vmatpush1.msra.mxu0 0.0
    %3165 = vmatprep.subr.mxu0 0.0
    %3166 = vmatpush1.msra.mxu0 0.0
    %3167 = vmatprep.subr.mxu0 0.0
    %3168 = vmatpush1.msra.mxu0 0.0
    %3169 = vmatprep.subr.mxu0 0.0
    %3170 = vmatpush1.msra.mxu0 0.0
    %3171 = vmatprep.subr.mxu0 0.0
    %3172 = vmatpush1.msra.mxu0 0.0
    %3173 = vmatprep.subr.mxu0 0.0
    %3174 = vmatpush1.msra.mxu0 0.0
    %3175 = vmatprep.subr.mxu0 0.0
    %3176 = vmatpush1.msra.mxu0 0.0
    %3177 = vmatprep.subr.mxu0 0.0
    %3178 = vmatpush1.msra.mxu0 0.0
    %3179 = vmatprep.subr.mxu0 0.0
    %3180 = vmatpush1.msra.mxu0 0.0
    %3181 = vmatprep.subr.mxu0 0.0
    %3182 = vmatpush1.msra.mxu0 0.0
    %3183 = vmatprep.subr.mxu0 0.0
    %3184 = vmatpush1.msra.mxu0 0.0
    %3185 = vmatprep.subr.mxu0 0.0
    %3186 = vmatpush1.msra.mxu0 0.0
    %3187 = vmatprep.subr.mxu0 %v3107
    %3188 = vmatpush1.msra.mxu0 %v3106
    %3189 = vmatprep.subr.mxu0 %v3099
    %3190 = vmatpush1.msra.mxu0 %v3098
    %3191 = vmatprep.subr.mxu0 0.0
    %3192 = vmatpush2.msra.mxu0 0.0
    %3193 = vmatprep.subr.mxu0 0.0
    %3194 = vmatpush2.msra.mxu0 0.0
    %3195 = vmatprep.subr.mxu0 0.0
    %3196 = vmatpush2.msra.mxu0 0.0
    %3197 = vmatprep.subr.mxu0 0.0
    %3198 = vmatpush2.msra.mxu0 0.0
    %3199 = vmatprep.subr.mxu0 0.0
    %3200 = vmatpush2.msra.mxu0 0.0
    %3201 = vmatprep.subr.mxu0 0.0
    %3202 = vmatpush2.msra.mxu0 0.0
    %3203 = vmatprep.subr.mxu0 0.0
    %3204 = vmatpush2.msra.mxu0 0.0
    %3205 = vmatprep.subr.mxu0 0.0
    %3206 = vmatpush2.msra.mxu0 0.0
    %3207 = vmatprep.subr.mxu0 0.0
    %3208 = vmatpush2.msra.mxu0 0.0
    %3209 = vmatprep.subr.mxu0 0.0
    %3210 = vmatpush2.msra.mxu0 0.0
    %3211 = vmatprep.subr.mxu0 0.0
    %3212 = vmatpush2.msra.mxu0 0.0
    %3213 = vmatprep.subr.mxu0 0.0
    %3214 = vmatpush2.msra.mxu0 0.0
    %3215 = vmatprep.subr.mxu0 0.0
    %3216 = vmatpush2.msra.mxu0 0.0
    %3217 = vmatprep.subr.mxu0 0.0
    %3218 = vmatpush2.msra.mxu0 0.0
    %3219 = vmatprep.subr.mxu0 0.0
    %3220 = vmatpush2.msra.mxu0 0.0
    %3221 = vmatprep.subr.mxu0 0.0
    %3222 = vmatpush2.msra.mxu0 0.0
    %3223 = vmatprep.mubr.f32.mxu0 0.0
    %3224 = vmatmul.mubr.f32.gmra.mxu0 %v3157
    %v3225 = vpop.f32.mrf.mxu0
    %v3226 = vadd.f32 %v3119, %v3225
    %v3227 = vpop.f32.mrf.mxu0
    %v3228 = vadd.f32 %v3123, %v3227
    %3229 = vdwg.mxu0
    %3230 = vmatprep.subr.mxu0 0.0
    %3231 = vmatpush1.msra.mxu0 0.0
    %3232 = vmatprep.subr.mxu0 0.0
    %3233 = vmatpush1.msra.mxu0 0.0
    %3234 = vmatprep.subr.mxu0 0.0
    %3235 = vmatpush1.msra.mxu0 0.0
    %3236 = vmatprep.subr.mxu0 0.0
    %3237 = vmatpush1.msra.mxu0 0.0
    %3238 = vmatprep.subr.mxu0 0.0
    %3239 = vmatpush1.msra.mxu0 0.0
    %3240 = vmatprep.subr.mxu0 0.0
    %3241 = vmatpush1.msra.mxu0 0.0
    %3242 = vmatprep.subr.mxu0 0.0
    %3243 = vmatpush1.msra.mxu0 0.0
    %3244 = vmatprep.subr.mxu0 0.0
    %3245 = vmatpush1.msra.mxu0 0.0
    %3246 = vmatprep.subr.mxu0 0.0
    %3247 = vmatpush1.msra.mxu0 0.0
    %3248 = vmatprep.subr.mxu0 0.0
    %3249 = vmatpush1.msra.mxu0 0.0
    %3250 = vmatprep.subr.mxu0 0.0
    %3251 = vmatpush1.msra.mxu0 0.0
    %3252 = vmatprep.subr.mxu0 0.0
    %3253 = vmatpush1.msra.mxu0 0.0
    %3254 = vmatprep.subr.mxu0 0.0
    %3255 = vmatpush1.msra.mxu0 0.0
    %3256 = vmatprep.subr.mxu0 0.0
    %3257 = vmatpush1.msra.mxu0 0.0
    %3258 = vmatprep.subr.mxu0 %v3109
    %3259 = vmatpush1.msra.mxu0 %v3108
    %3260 = vmatprep.subr.mxu0 %v3101
    %3261 = vmatpush1.msra.mxu0 %v3100
    %3262 = vmatprep.subr.mxu0 0.0
    %3263 = vmatpush2.msra.mxu0 0.0
    %3264 = vmatprep.subr.mxu0 0.0
    %3265 = vmatpush2.msra.mxu0 0.0
    %3266 = vmatprep.subr.mxu0 0.0
    %3267 = vmatpush2.msra.mxu0 0.0
    %3268 = vmatprep.subr.mxu0 0.0
    %3269 = vmatpush2.msra.mxu0 0.0
    %3270 = vmatprep.subr.mxu0 0.0
    %3271 = vmatpush2.msra.mxu0 0.0
    %3272 = vmatprep.subr.mxu0 0.0
    %3273 = vmatpush2.msra.mxu0 0.0
    %3274 = vmatprep.subr.mxu0 0.0
    %3275 = vmatpush2.msra.mxu0 0.0
    %3276 = vmatprep.subr.mxu0 0.0
    %3277 = vmatpush2.msra.mxu0 0.0
    %3278 = vmatprep.subr.mxu0 0.0
    %3279 = vmatpush2.msra.mxu0 0.0
    %3280 = vmatprep.subr.mxu0 0.0
    %3281 = vmatpush2.msra.mxu0 0.0
    %3282 = vmatprep.subr.mxu0 0.0
    %3283 = vmatpush2.msra.mxu0 0.0
    %3284 = vmatprep.subr.mxu0 0.0
    %3285 = vmatpush2.msra.mxu0 0.0
    %3286 = vmatprep.subr.mxu0 0.0
    %3287 = vmatpush2.msra.mxu0 0.0
    %3288 = vmatprep.subr.mxu0 0.0
    %3289 = vmatpush2.msra.mxu0 0.0
    %3290 = vmatprep.subr.mxu0 0.0
    %3291 = vmatpush2.msra.mxu0 0.0
    %3292 = vmatprep.subr.mxu0 0.0
    %3293 = vmatpush2.msra.mxu0 0.0
    %3294 = vmatprep.mubr.f32.mxu0 0.0
    %3295 = vmatmul.mubr.f32.gmra.mxu0 %v3157
    %v3296 = vpop.f32.mrf.mxu0
    %v3297 = vadd.f32 %v3127, %v3296
    %v3298 = vpop.f32.mrf.mxu0
    %v3299 = vadd.f32 %v3131, %v3298
    %3300 = vdwg.mxu0
    %3301 = vmatprep.subr.mxu0 0.0
    %3302 = vmatpush1.msra.mxu0 0.0
    %3303 = vmatprep.subr.mxu0 0.0
    %3304 = vmatpush1.msra.mxu0 0.0
    %3305 = vmatprep.subr.mxu0 0.0
    %3306 = vmatpush1.msra.mxu0 0.0
    %3307 = vmatprep.subr.mxu0 0.0
    %3308 = vmatpush1.msra.mxu0 0.0
    %3309 = vmatprep.subr.mxu0 0.0
    %3310 = vmatpush1.msra.mxu0 0.0
    %3311 = vmatprep.subr.mxu0 0.0
    %3312 = vmatpush1.msra.mxu0 0.0
    %3313 = vmatprep.subr.mxu0 0.0
    %3314 = vmatpush1.msra.mxu0 0.0
    %3315 = vmatprep.subr.mxu0 0.0
    %3316 = vmatpush1.msra.mxu0 0.0
    %3317 = vmatprep.subr.mxu0 0.0
    %3318 = vmatpush1.msra.mxu0 0.0
    %3319 = vmatprep.subr.mxu0 0.0
    %3320 = vmatpush1.msra.mxu0 0.0
    %3321 = vmatprep.subr.mxu0 0.0
    %3322 = vmatpush1.msra.mxu0 0.0
    %3323 = vmatprep.subr.mxu0 0.0
    %3324 = vmatpush1.msra.mxu0 0.0
    %3325 = vmatprep.subr.mxu0 0.0
    %3326 = vmatpush1.msra.mxu0 0.0
    %3327 = vmatprep.subr.mxu0 0.0
    %3328 = vmatpush1.msra.mxu0 0.0
    %3329 = vmatprep.subr.mxu0 %v3111
    %3330 = vmatpush1.msra.mxu0 %v3110
    %3331 = vmatprep.subr.mxu0 %v3103
    %3332 = vmatpush1.msra.mxu0 %v3102
    %3333 = vmatprep.subr.mxu0 0.0
    %3334 = vmatpush2.msra.mxu0 0.0
    %3335 = vmatprep.subr.mxu0 0.0
    %3336 = vmatpush2.msra.mxu0 0.0
    %3337 = vmatprep.subr.mxu0 0.0
    %3338 = vmatpush2.msra.mxu0 0.0
    %3339 = vmatprep.subr.mxu0 0.0
    %3340 = vmatpush2.msra.mxu0 0.0
    %3341 = vmatprep.subr.mxu0 0.0
    %3342 = vmatpush2.msra.mxu0 0.0
    %3343 = vmatprep.subr.mxu0 0.0
    %3344 = vmatpush2.msra.mxu0 0.0
    %3345 = vmatprep.subr.mxu0 0.0
    %3346 = vmatpush2.msra.mxu0 0.0
    %3347 = vmatprep.subr.mxu0 0.0
    %3348 = vmatpush2.msra.mxu0 0.0
    %3349 = vmatprep.subr.mxu0 0.0
    %3350 = vmatpush2.msra.mxu0 0.0
    %3351 = vmatprep.subr.mxu0 0.0
    %3352 = vmatpush2.msra.mxu0 0.0
    %3353 = vmatprep.subr.mxu0 0.0
    %3354 = vmatpush2.msra.mxu0 0.0
    %3355 = vmatprep.subr.mxu0 0.0
    %3356 = vmatpush2.msra.mxu0 0.0
    %3357 = vmatprep.subr.mxu0 0.0
    %3358 = vmatpush2.msra.mxu0 0.0
    %3359 = vmatprep.subr.mxu0 0.0
    %3360 = vmatpush2.msra.mxu0 0.0
    %3361 = vmatprep.subr.mxu0 0.0
    %3362 = vmatpush2.msra.mxu0 0.0
    %3363 = vmatprep.subr.mxu0 0.0
    %3364 = vmatpush2.msra.mxu0 0.0
    %3365 = vmatprep.mubr.f32.mxu0 0.0
    %3366 = vmatmul.mubr.f32.gmra.mxu0 %v3157
    %v3367 = vpop.f32.mrf.mxu0
    %v3368 = vadd.f32 %v3135, %v3367
    %v3369 = vpop.f32.mrf.mxu0
    %v3370 = vadd.f32 %v3139, %v3369
    %3371 = vdwg.mxu0
    %3372 = vmatprep.subr.mxu0 0.0
    %3373 = vmatpush1.msra.mxu0 0.0
    %3374 = vmatprep.subr.mxu0 0.0
    %3375 = vmatpush1.msra.mxu0 0.0
    %3376 = vmatprep.subr.mxu0 0.0
    %3377 = vmatpush1.msra.mxu0 0.0
    %3378 = vmatprep.subr.mxu0 0.0
    %3379 = vmatpush1.msra.mxu0 0.0
    %3380 = vmatprep.subr.mxu0 0.0
    %3381 = vmatpush1.msra.mxu0 0.0
    %3382 = vmatprep.subr.mxu0 0.0
    %3383 = vmatpush1.msra.mxu0 0.0
    %3384 = vmatprep.subr.mxu0 0.0
    %3385 = vmatpush1.msra.mxu0 0.0
    %3386 = vmatprep.subr.mxu0 0.0
    %3387 = vmatpush1.msra.mxu0 0.0
    %3388 = vmatprep.subr.mxu0 0.0
    %3389 = vmatpush1.msra.mxu0 0.0
    %3390 = vmatprep.subr.mxu0 0.0
    %3391 = vmatpush1.msra.mxu0 0.0
    %3392 = vmatprep.subr.mxu0 0.0
    %3393 = vmatpush1.msra.mxu0 0.0
    %3394 = vmatprep.subr.mxu0 0.0
    %3395 = vmatpush1.msra.mxu0 0.0
    %3396 = vmatprep.subr.mxu0 0.0
    %3397 = vmatpush1.msra.mxu0 0.0
    %3398 = vmatprep.subr.mxu0 0.0
    %3399 = vmatpush1.msra.mxu0 0.0
    %3400 = vmatprep.subr.mxu0 %v3113
    %3401 = vmatpush1.msra.mxu0 %v3112
    %3402 = vmatprep.subr.mxu0 %v3105
    %3403 = vmatpush1.msra.mxu0 %v3104
    %3404 = vmatprep.subr.mxu0 0.0
    %3405 = vmatpush2.msra.mxu0 0.0
    %3406 = vmatprep.subr.mxu0 0.0
    %3407 = vmatpush2.msra.mxu0 0.0
    %3408 = vmatprep.subr.mxu0 0.0
    %3409 = vmatpush2.msra.mxu0 0.0
    %3410 = vmatprep.subr.mxu0 0.0
    %3411 = vmatpush2.msra.mxu0 0.0
    %3412 = vmatprep.subr.mxu0 0.0
    %3413 = vmatpush2.msra.mxu0 0.0
    %3414 = vmatprep.subr.mxu0 0.0
    %3415 = vmatpush2.msra.mxu0 0.0
    %3416 = vmatprep.subr.mxu0 0.0
    %3417 = vmatpush2.msra.mxu0 0.0
    %3418 = vmatprep.subr.mxu0 0.0
    %3419 = vmatpush2.msra.mxu0 0.0
    %3420 = vmatprep.subr.mxu0 0.0
    %3421 = vmatpush2.msra.mxu0 0.0
    %3422 = vmatprep.subr.mxu0 0.0
    %3423 = vmatpush2.msra.mxu0 0.0
    %3424 = vmatprep.subr.mxu0 0.0
    %3425 = vmatpush2.msra.mxu0 0.0
    %3426 = vmatprep.subr.mxu0 0.0
    %3427 = vmatpush2.msra.mxu0 0.0
    %3428 = vmatprep.subr.mxu0 0.0
    %3429 = vmatpush2.msra.mxu0 0.0
    %3430 = vmatprep.subr.mxu0 0.0
    %3431 = vmatpush2.msra.mxu0 0.0
    %3432 = vmatprep.subr.mxu0 0.0
    %3433 = vmatpush2.msra.mxu0 0.0
    %3434 = vmatprep.subr.mxu0 0.0
    %3435 = vmatpush2.msra.mxu0 0.0
    %3436 = vmatprep.mubr.f32.mxu0 0.0
    %3437 = vmatmul.mubr.f32.gmra.mxu0 %v3157
    %v3438 = vpop.f32.mrf.mxu0
    %v3439 = vadd.f32 %v3143, %v3438
    %v3440 = vpop.f32.mrf.mxu0
    %v3441 = vadd.f32 %v3147, %v3440
    %3442 = vdwg.mxu0
    %v3443 = vxor.u32 %v3226, 2147483648
    %v3444 = vxor.u32 %v3228, 2147483648
    %v3445 = vmul.f32 %v3443, 1.442695
    %v3446 = vpow.pop %v3445
    %v3447 = vmul.f32 %v3444, 1.442695
    %v3448 = vpow.pop %v3447
    %v3449 = vadd.f32 %v3446, 1.0
    %v3450 = vadd.f32 %v3448, 1.0
    %v3451 = vrcp.pop %v3449
    %v3452 = vmul.f32 1.0, %v3451
    %v3453 = vrcp.pop %v3450
    %v3454 = vmul.f32 1.0, %v3453
    %v3455 = vxor.u32 %v3297, 2147483648
    %v3456 = vxor.u32 %v3299, 2147483648
    %v3457 = vmul.f32 %v3455, 1.442695
    %v3458 = vpow.pop %v3457
    %v3459 = vmul.f32 %v3456, 1.442695
    %v3460 = vpow.pop %v3459
    %v3461 = vadd.f32 %v3458, 1.0
    %v3462 = vadd.f32 %v3460, 1.0
    %v3463 = vrcp.pop %v3461
    %v3464 = vmul.f32 1.0, %v3463
    %v3465 = vrcp.pop %v3462
    %v3466 = vmul.f32 1.0, %v3465
    %v3467 = vtanh.pop %v3368
    %v3468 = vtanh.pop %v3370
    %v3469 = vxor.u32 %v3439, 2147483648
    %v3470 = vxor.u32 %v3441, 2147483648
    %v3471 = vmul.f32 %v3469, 1.442695
    %v3472 = vpow.pop %v3471
    %v3473 = vmul.f32 %v3470, 1.442695
    %v3474 = vpow.pop %v3473
    %v3475 = vadd.f32 %v3472, 1.0
    %v3476 = vadd.f32 %v3474, 1.0
    %v3477 = vrcp.pop %v3475
    %v3478 = vmul.f32 1.0, %v3477
    %v3479 = vrcp.pop %v3476
    %v3480 = vmul.f32 1.0, %v3479
    %v3481 = vmul.f32 %v3464, 0.0
    %v3482 = vmul.f32 %v3466, 0.0
    %v3483 = vmul.f32 %v3452, %v3467
    %v3484 = vmul.f32 %v3454, %v3468
    %v3485 = vadd.f32 %v3481, %v3483
    %v3486 = vadd.f32 %v3482, %v3484
    %v3487 = vtanh.pop %v3485
    %v3488 = vtanh.pop %v3486
    %v3489 = vmul.f32 %v3478, %v3487
    %v3490 = vmul.f32 %v3480, %v3488
    %v3491 = vld [vmem:[%s6] sm:$0xff]
    %v3492 = vld [vmem:[%s6 + $0x8] sm:$0xff]
    %v3493 = vld [vmem:[%s6 + $0x10] sm:$0xff]
    %v3494 = vld [vmem:[%s6 + $0x18] sm:$0xff]
    %v3495 = vld [vmem:[%s6 + $0x20] sm:$0xff]
    %v3496 = vld [vmem:[%s6 + $0x28] sm:$0xff]
    %v3497 = vld [vmem:[%s6 + $0x30] sm:$0xff]
    %v3498 = vld [vmem:[%s6 + $0x38] sm:$0xff]
    %v3499 = vld [vmem:[%s6 + $0x40] sm:$0xff]
    %v3500 = vld [vmem:[%s6 + $0x48] sm:$0xff]
    %v3501 = vld [vmem:[%s6 + $0x50] sm:$0xff]
    %v3502 = vld [vmem:[%s6 + $0x58] sm:$0xff]
    %v3503 = vld [vmem:[%s6 + $0x60] sm:$0xff]
    %v3504 = vld [vmem:[%s6 + $0x68] sm:$0xff]
    %v3505 = vld [vmem:[%s6 + $0x70] sm:$0xff]
    %v3506 = vld [vmem:[%s6 + $0x78] sm:$0xff]
    %v3507 = vld [vmem:[%s6 + $0x80] sm:$0xff]
    %v3508 = vld [vmem:[%s6 + $0x88] sm:$0xff]
    %v3509 = vld [vmem:[%s6 + $0x90] sm:$0xff]
    %v3510 = vld [vmem:[%s6 + $0x98] sm:$0xff]
    %v3511 = vld [vmem:[%s6 + $0xa0] sm:$0xff]
    %v3512 = vld [vmem:[%s6 + $0xa8] sm:$0xff]
    %v3513 = vld [vmem:[%s6 + $0xb0] sm:$0xff]
    %v3514 = vld [vmem:[%s6 + $0xb8] sm:$0xff]
    %v3515 = vld [vmem:[%s6 + $0xc0] sm:$0xff]
    %v3516 = vld [vmem:[%s6 + $0xc8] sm:$0xff]
    %v3517 = vld [vmem:[%s6 + $0xd0] sm:$0xff]
    %v3518 = vld [vmem:[%s6 + $0xd8] sm:$0xff]
    %v3519 = vld [vmem:[%s6 + $0xe0] sm:$0xff]
    %v3520 = vld [vmem:[%s6 + $0xe8] sm:$0xff]
    %v3521 = vld [vmem:[%s6 + $0xf0] sm:$0xff]
    %v3522 = vld [vmem:[%s6 + $0xf8] sm:$0xff]
    %v3523 = vld [vmem:[%s7] sm:$0xff]
    %v3524 = vld [vmem:[%s7 + $0x8] sm:$0xff]
    %v3525 = vld [vmem:[%s7 + $0x10] sm:$0xff]
    %v3526 = vld [vmem:[%s7 + $0x18] sm:$0xff]
    %v3527 = vld [vmem:[%s7 + $0x20] sm:$0xff]
    %v3528 = vld [vmem:[%s7 + $0x28] sm:$0xff]
    %v3529 = vld [vmem:[%s7 + $0x30] sm:$0xff]
    %v3530 = vld [vmem:[%s7 + $0x38] sm:$0xff]
    %v3531 = vld [vmem:[%s7 + $0x40] sm:$0xff]
    %v3532 = vld [vmem:[%s7 + $0x48] sm:$0xff]
    %v3533 = vld [vmem:[%s7 + $0x50] sm:$0xff]
    %v3534 = vld [vmem:[%s7 + $0x58] sm:$0xff]
    %v3535 = vld [vmem:[%s7 + $0x60] sm:$0xff]
    %v3536 = vld [vmem:[%s7 + $0x68] sm:$0xff]
    %v3537 = vld [vmem:[%s7 + $0x70] sm:$0xff]
    %v3538 = vld [vmem:[%s7 + $0x78] sm:$0xff]
    %v3539 = vld [vmem:[%s7 + $0x80] sm:$0xff]
    %v3540 = vld [vmem:[%s7 + $0x88] sm:$0xff]
    %v3541 = vld [vmem:[%s7 + $0x90] sm:$0xff]
    %v3542 = vld [vmem:[%s7 + $0x98] sm:$0xff]
    %v3543 = vld [vmem:[%s7 + $0xa0] sm:$0xff]
    %v3544 = vld [vmem:[%s7 + $0xa8] sm:$0xff]
    %v3545 = vld [vmem:[%s7 + $0xb0] sm:$0xff]
    %v3546 = vld [vmem:[%s7 + $0xb8] sm:$0xff]
    %v3547 = vld [vmem:[%s7 + $0xc0] sm:$0xff]
    %v3548 = vld [vmem:[%s7 + $0xc8] sm:$0xff]
    %v3549 = vld [vmem:[%s7 + $0xd0] sm:$0xff]
    %v3550 = vld [vmem:[%s7 + $0xd8] sm:$0xff]
    %v3551 = vld [vmem:[%s7 + $0xe0] sm:$0xff]
    %v3552 = vld [vmem:[%s7 + $0xe8] sm:$0xff]
    %v3553 = vld [vmem:[%s7 + $0xf0] sm:$0xff]
    %v3554 = vld [vmem:[%s7 + $0xf8] sm:$0xff]
    %3555 = vmatprep.subr.mxu0 0.0
    %3556 = vmatpush1.msra.mxu0 %v3538
    %3557 = vmatprep.subr.mxu0 0.0
    %3558 = vmatpush1.msra.mxu0 %v3537
    %3559 = vmatprep.subr.mxu0 0.0
    %3560 = vmatpush1.msra.mxu0 %v3536
    %3561 = vmatprep.subr.mxu0 0.0
    %3562 = vmatpush1.msra.mxu0 %v3535
    %3563 = vmatprep.subr.mxu0 0.0
    %3564 = vmatpush1.msra.mxu0 %v3534
    %3565 = vmatprep.subr.mxu0 0.0
    %3566 = vmatpush1.msra.mxu0 %v3533
    %3567 = vmatprep.subr.mxu0 0.0
    %3568 = vmatpush1.msra.mxu0 %v3532
    %3569 = vmatprep.subr.mxu0 0.0
    %3570 = vmatpush1.msra.mxu0 %v3531
    %3571 = vmatprep.subr.mxu0 0.0
    %3572 = vmatpush1.msra.mxu0 %v3530
    %3573 = vmatprep.subr.mxu0 0.0
    %3574 = vmatpush1.msra.mxu0 %v3529
    %3575 = vmatprep.subr.mxu0 0.0
    %3576 = vmatpush1.msra.mxu0 %v3528
    %3577 = vmatprep.subr.mxu0 0.0
    %3578 = vmatpush1.msra.mxu0 %v3527
    %3579 = vmatprep.subr.mxu0 0.0
    %3580 = vmatpush1.msra.mxu0 %v3526
    %3581 = vmatprep.subr.mxu0 0.0
    %3582 = vmatpush1.msra.mxu0 %v3525
    %3583 = vmatprep.subr.mxu0 0.0
    %3584 = vmatpush1.msra.mxu0 %v3524
    %3585 = vmatprep.subr.mxu0 0.0
    %3586 = vmatpush1.msra.mxu0 %v3523
    %3587 = vmatprep.subr.mxu0 0.0
    %3588 = vmatpush2.msra.mxu0 %v3554
    %3589 = vmatprep.subr.mxu0 0.0
    %3590 = vmatpush2.msra.mxu0 %v3553
    %3591 = vmatprep.subr.mxu0 0.0
    %3592 = vmatpush2.msra.mxu0 %v3552
    %3593 = vmatprep.subr.mxu0 0.0
    %3594 = vmatpush2.msra.mxu0 %v3551
    %3595 = vmatprep.subr.mxu0 0.0
    %3596 = vmatpush2.msra.mxu0 %v3550
    %3597 = vmatprep.subr.mxu0 0.0
    %3598 = vmatpush2.msra.mxu0 %v3549
    %3599 = vmatprep.subr.mxu0 0.0
    %3600 = vmatpush2.msra.mxu0 %v3548
    %3601 = vmatprep.subr.mxu0 0.0
    %3602 = vmatpush2.msra.mxu0 %v3547
    %3603 = vmatprep.subr.mxu0 0.0
    %3604 = vmatpush2.msra.mxu0 %v3546
    %3605 = vmatprep.subr.mxu0 0.0
    %3606 = vmatpush2.msra.mxu0 %v3545
    %3607 = vmatprep.subr.mxu0 0.0
    %3608 = vmatpush2.msra.mxu0 %v3544
    %3609 = vmatprep.subr.mxu0 0.0
    %3610 = vmatpush2.msra.mxu0 %v3543
    %3611 = vmatprep.subr.mxu0 0.0
    %3612 = vmatpush2.msra.mxu0 %v3542
    %3613 = vmatprep.subr.mxu0 0.0
    %3614 = vmatpush2.msra.mxu0 %v3541
    %3615 = vmatprep.subr.mxu0 0.0
    %3616 = vmatpush2.msra.mxu0 %v3540
    %3617 = vmatprep.subr.mxu0 0.0
    %3618 = vmatpush2.msra.mxu0 %v3539
    %3619 = vmatprep.mubr.f32.mxu0 %v3490
    %3620 = vmatmul.mubr.f32.gmra.mxu0 %v3489
    %v3621 = vpop.f32.mrf.mxu0
    %v3622 = vadd.f32 0.0, %v3621
    %v3623 = vpop.f32.mrf.mxu0
    %3624 = vdwg.mxu0
    %3625 = vmatprep.subr.mxu0 0.0
    %3626 = vmatpush1.msra.mxu0 %v3506
    %3627 = vmatprep.subr.mxu0 0.0
    %3628 = vmatpush1.msra.mxu0 %v3505
    %3629 = vmatprep.subr.mxu0 0.0
    %3630 = vmatpush1.msra.mxu0 %v3504
    %3631 = vmatprep.subr.mxu0 0.0
    %3632 = vmatpush1.msra.mxu0 %v3503
    %3633 = vmatprep.subr.mxu0 0.0
    %3634 = vmatpush1.msra.mxu0 %v3502
    %3635 = vmatprep.subr.mxu0 0.0
    %3636 = vmatpush1.msra.mxu0 %v3501
    %3637 = vmatprep.subr.mxu0 0.0
    %3638 = vmatpush1.msra.mxu0 %v3500
    %3639 = vmatprep.subr.mxu0 0.0
    %3640 = vmatpush1.msra.mxu0 %v3499
    %3641 = vmatprep.subr.mxu0 0.0
    %3642 = vmatpush1.msra.mxu0 %v3498
    %3643 = vmatprep.subr.mxu0 0.0
    %3644 = vmatpush1.msra.mxu0 %v3497
    %3645 = vmatprep.subr.mxu0 0.0
    %3646 = vmatpush1.msra.mxu0 %v3496
    %3647 = vmatprep.subr.mxu0 0.0
    %3648 = vmatpush1.msra.mxu0 %v3495
    %3649 = vmatprep.subr.mxu0 0.0
    %3650 = vmatpush1.msra.mxu0 %v3494
    %3651 = vmatprep.subr.mxu0 0.0
    %3652 = vmatpush1.msra.mxu0 %v3493
    %3653 = vmatprep.subr.mxu0 0.0
    %3654 = vmatpush1.msra.mxu0 %v3492
    %3655 = vmatprep.subr.mxu0 0.0
    %3656 = vmatpush1.msra.mxu0 %v3491
    %3657 = vmatprep.subr.mxu0 0.0
    %3658 = vmatpush2.msra.mxu0 %v3522
    %3659 = vmatprep.subr.mxu0 0.0
    %3660 = vmatpush2.msra.mxu0 %v3521
    %3661 = vmatprep.subr.mxu0 0.0
    %3662 = vmatpush2.msra.mxu0 %v3520
    %3663 = vmatprep.subr.mxu0 0.0
    %3664 = vmatpush2.msra.mxu0 %v3519
    %3665 = vmatprep.subr.mxu0 0.0
    %3666 = vmatpush2.msra.mxu0 %v3518
    %3667 = vmatprep.subr.mxu0 0.0
    %3668 = vmatpush2.msra.mxu0 %v3517
    %3669 = vmatprep.subr.mxu0 0.0
    %3670 = vmatpush2.msra.mxu0 %v3516
    %3671 = vmatprep.subr.mxu0 0.0
    %3672 = vmatpush2.msra.mxu0 %v3515
    %3673 = vmatprep.subr.mxu0 0.0
    %3674 = vmatpush2.msra.mxu0 %v3514
    %3675 = vmatprep.subr.mxu0 0.0
    %3676 = vmatpush2.msra.mxu0 %v3513
    %3677 = vmatprep.subr.mxu0 0.0
    %3678 = vmatpush2.msra.mxu0 %v3512
    %3679 = vmatprep.subr.mxu0 0.0
    %3680 = vmatpush2.msra.mxu0 %v3511
    %3681 = vmatprep.subr.mxu0 0.0
    %3682 = vmatpush2.msra.mxu0 %v3510
    %3683 = vmatprep.subr.mxu0 0.0
    %3684 = vmatpush2.msra.mxu0 %v3509
    %3685 = vmatprep.subr.mxu0 0.0
    %3686 = vmatpush2.msra.mxu0 %v3508
    %3687 = vmatprep.subr.mxu0 0.0
    %3688 = vmatpush2.msra.mxu0 %v3507
    %3689 = vmatprep.mubr.f32.mxu0 %v3095
    %3690 = vmatmul.mubr.f32.gmra.mxu0 %v3094
    %v3691 = vpop.f32.mrf.mxu0
    %v3692 = vadd.f32 %v3622, %v3691
    %v3693 = vpop.f32.mrf.mxu0
    %3694 = vdwg.mxu0
    %v3695 = vld [vmem:[#allocation3] sm:$0x1]
    %v3697 = vlaneseq
    %v3698 = vshrl.u32 %v3697, 7
    %v3699 = vsub.s32 0, %v3698
    %v3700 = vrot.slane %v3695, %v3699
    %v3702 = vadd.f32 %v3692, %v3700
    %vm3703 = vcmask 7168
    %3704 = vst.msk [vmem:[%s9] sm:$0xff] %vm3703, %v3702
    // Predicated region
    $region42: #{tpu_custom_call.1} parent=1 // pred_check
      _
    $region43: #{tpu_custom_call.1} parent=1 // pred_check_branch
      %3706 = sbr.rel (0) target = $region45
    $region44: #{tpu_custom_call.1} parent=1 // pred_region
      _
    $region45: #{tpu_custom_call.1} parent=1 // pred_fallthru
      _
    // Predicated region
    $region46: #{tpu_custom_call.1} parent=1 // pred_check
      _
    $region47: #{tpu_custom_call.1} parent=1 // pred_check_branch
      %3708 = sbr.rel (0) target = $region49
    $region48: #{tpu_custom_call.1} parent=1 // pred_region
      _
    $region49: #{tpu_custom_call.1} parent=1 // pred_fallthru
      _
    %3709 = vsyncpa [#allocation5], 1

</llo_original>
